<compile_context>
chip_gen: v6e
topology: v6e:2x2x1
jax: 0.10.0
libtpu: 0.0.40
codegen_flags: <defaults>
</compile_context>

<pallas_src>
import jax
import jax.numpy as jnp
from jax.experimental import pallas as pl
from jax.experimental.pallas import tpu as pltpu

ZETA = 256       # hidden width (matches the PyTorch module)
BLOCK_N = 1024   # points per grid step (lane axis); multiple of 128


def _mlp_kernel(x_ref, w1_ref, b1_ref, wh_ref, bh_ref, wo_ref, bo_ref, o_ref):
    # x_ref: (3, BLOCK_N) f32 tile of stacked [t; x; y] points (N on lanes).
    x = x_ref[...]                                    # (3, BN) f32
    w1 = w1_ref[...]                                  # (ZETA, 3) f32

    # ---- Input layer Linear(3, ZETA): K=3 would waste a full MXU pass, so
    # do it as three VPU broadcast-FMAs. ----------------------------------
    pre = (w1[:, 0:1] * x[0:1, :]
           + w1[:, 1:2] * x[1:2, :]
           + w1[:, 2:3] * x[2:3, :]
           + b1_ref[...])                             # (ZETA, BN) f32
    h = jnp.tanh(pre)

    # ---- Two hidden layers sharing the SAME Linear(ZETA, ZETA) (PyTorch
    # list-multiplication aliases one Linear object).  bf16 MXU matmuls with
    # f32 accumulation; tanh kept in f32 (safe on v5e too). ----------------
    wh = wh_ref[...]                                  # (ZETA, ZETA) bf16
    bh = bh_ref[...]                                  # (ZETA, 1) f32
    h = jnp.tanh(
        jnp.dot(wh, h.astype(jnp.bfloat16), preferred_element_type=jnp.float32)
        + bh)
    h = jnp.tanh(
        jnp.dot(wh, h.astype(jnp.bfloat16), preferred_element_type=jnp.float32)
        + bh)

    # ---- Output layer Linear(ZETA, 1): lane-dense (1, BN) result ----------
    o_ref[...] = (
        jnp.dot(wo_ref[...], h, preferred_element_type=jnp.float32)
        + bo_ref[...])


def mlp_pallas(X, params, *, block_n=BLOCK_N):
    """X: (3, N) float32 with rows [t; x; y].  Returns (1, N) float32."""
    w1, b1, wh, bh, wo, bo = params
    N = X.shape[1]
    n_pad = (-N) % block_n
    Xp = jnp.pad(X, ((0, 0), (0, n_pad)))
    Np = Xp.shape[1]
    grid = (Np // block_n,)

    # f32 master weights; bf16 compute copy for the shared hidden matmul.
    wh_bf16 = wh.astype(jnp.bfloat16)

    weight_bytes = 4 * (ZETA * 3 + ZETA + ZETA + ZETA + 1) + 2 * ZETA * ZETA
    cost = pl.CostEstimate(
        flops=int(2 * Np * (3 * ZETA + 2 * ZETA * ZETA + ZETA)),
        transcendentals=int(3 * Np * ZETA),
        bytes_accessed=int(4 * Np * 3 + 4 * Np + weight_bytes),
    )

    out = pl.pallas_call(
        _mlp_kernel,
        out_shape=jax.ShapeDtypeStruct((1, Np), jnp.float32),
        grid_spec=pltpu.PrefetchScalarGridSpec(
            num_scalar_prefetch=0,
            grid=grid,
            in_specs=[
                pl.BlockSpec((3, block_n), lambda i: (0, i)),   # X tile
                pl.BlockSpec((ZETA, 3), lambda i: (0, 0)),      # W1 (resident)
                pl.BlockSpec((ZETA, 1), lambda i: (0, 0)),      # b1
                pl.BlockSpec((ZETA, ZETA), lambda i: (0, 0)),   # Wh (shared, bf16)
                pl.BlockSpec((ZETA, 1), lambda i: (0, 0)),      # bh
                pl.BlockSpec((1, ZETA), lambda i: (0, 0)),      # Wo
                pl.BlockSpec((1, 1), lambda i: (0, 0)),         # bo
            ],
            out_specs=pl.BlockSpec((1, block_n), lambda i: (0, i)),
        ),
        compiler_params=pltpu.CompilerParams(
            dimension_semantics=("parallel",),
        ),
        cost_estimate=cost,
    )(Xp, w1, b1, wh_bf16, bh, wo, bo)

    return out[:, :N]


@jax.jit
def nn_forward(t, x, y, params):
    """Mirrors NN.forward: t, x, y of shape (1, n) -> output of shape (1, n)."""
    # Stack features on the sublane axis; N stays on the lane axis, so the
    # PyTorch transposes (t.T, x.T, y.T and the final X.T) are not needed.
    X = jnp.concatenate(
        (t.astype(jnp.float32), x.astype(jnp.float32), y.astype(jnp.float32)),
        axis=0)                                       # (3, n)
    return mlp_pallas(X, params)                      # (1, n)


def init_params(key):
    """Deterministic init.  Weights stored in torch (out_features, in_features)
    orientation; biases stored as (out_features, 1) columns."""
    k1, k2, k3, k4, k5, k6 = jax.random.split(key, 6)
    w1 = jax.random.uniform(k1, (ZETA, 3), jnp.float32, -0.5, 0.5)
    b1 = jax.random.uniform(k2, (ZETA, 1), jnp.float32, -0.5, 0.5)
    wh = jax.random.uniform(k3, (ZETA, ZETA), jnp.float32, -0.05, 0.05)
    bh = jax.random.uniform(k4, (ZETA, 1), jnp.float32, -0.05, 0.05)
    wo = jax.random.uniform(k5, (1, ZETA), jnp.float32, -0.05, 0.05)
    bo = jax.random.uniform(k6, (1, 1), jnp.float32, -0.05, 0.05)
    return (w1, b1, wh, bh, wo, bo)


def nn_forward_ref(t, x, y, params):
    """Pure-JAX f32 reference for correctness checking."""
    w1, b1, wh, bh, wo, bo = params
    X = jnp.concatenate(
        (t.astype(jnp.float32), x.astype(jnp.float32), y.astype(jnp.float32)),
        axis=0)                                       # (3, n)
    h = jnp.tanh(w1 @ X + b1)
    h = jnp.tanh(wh @ h + bh)        # shared hidden Linear applied twice
    h = jnp.tanh(wh @ h + bh)
    return wo @ h + bo               # (1, n)


if __name__ == "__main__":
    key = jax.random.PRNGKey(0)
    kp, kt, kx, ky = jax.random.split(key, 4)

    # Collocation points: not a multiple of BLOCK_N (tests padding) and >1
    # grid step (tests pipelining / megacore sharding).
    n = 2500
    t = jax.random.uniform(kt, (1, n), jnp.float32, 0.0, 1.0)
    x = jax.random.uniform(kx, (1, n), jnp.float32, -1.0, 1.0)
    y = jax.random.uniform(ky, (1, n), jnp.float32, -1.0, 1.0)

    params = init_params(kp)

    out = jax.block_until_ready(nn_forward(t, x, y, params))
    ref = nn_forward_ref(t, x, y, params)

    assert out.shape == (1, n), out.shape
    # Hidden matmuls run in bf16 (f32 accumulation) -> compare to the f32
    # reference with a correspondingly relaxed tolerance.
    max_err = float(jnp.max(jnp.abs(out - ref)))
    assert jnp.allclose(out, ref, atol=2e-2, rtol=2e-2), f"mismatch: {max_err}"

    print("KERNEL_OK")
</pallas_src>

<mosaic_0001>
module attributes {stable_mosaic.version = 11 : i64} {
  func.func @_mlp_kernel(%arg0: i32, %arg1: memref<3x1024xf32, #tpu.memory_space<vmem>>, %arg2: memref<256x3xf32, #tpu.memory_space<vmem>>, %arg3: memref<256x1xf32, #tpu.memory_space<vmem>>, %arg4: memref<256x256xbf16, #tpu.memory_space<vmem>>, %arg5: memref<256x1xf32, #tpu.memory_space<vmem>>, %arg6: memref<1x256xf32, #tpu.memory_space<vmem>>, %arg7: memref<1x1xf32, #tpu.memory_space<vmem>>, %arg8: memref<1x1024xf32, #tpu.memory_space<vmem>>) attributes {dimension_semantics = [#tpu.dimension_semantics<parallel>], iteration_bounds = array<i64: 3>, scalar_prefetch = 0 : i64, scratch_operands = 0 : i64, tpu.core_type = #tpu.core_type<tc>, window_params = [{transform_indices = @transform_0, window_bounds = array<i64: 3, 1024>}, {pipeline_mode = #tpu.pipeline_mode<synchronous>, transform_indices = @transform_1, window_bounds = array<i64: 256, 3>}, {pipeline_mode = #tpu.pipeline_mode<synchronous>, transform_indices = @transform_2, window_bounds = array<i64: 256, 1>}, {pipeline_mode = #tpu.pipeline_mode<synchronous>, transform_indices = @transform_3, window_bounds = array<i64: 256, 256>}, {pipeline_mode = #tpu.pipeline_mode<synchronous>, transform_indices = @transform_4, window_bounds = array<i64: 256, 1>}, {pipeline_mode = #tpu.pipeline_mode<synchronous>, transform_indices = @transform_5, window_bounds = array<i64: 1, 256>}, {pipeline_mode = #tpu.pipeline_mode<synchronous>, transform_indices = @transform_6, window_bounds = array<i64: 1, 1>}, {transform_indices = @transform_7, window_bounds = array<i64: 1, 1024>}]} {
    %c0 = arith.constant 0 : index
    %c0_0 = arith.constant 0 : index
    %0 = vector.load %arg1[%c0, %c0_0] : memref<3x1024xf32, #tpu.memory_space<vmem>>, vector<3x1024xf32>
    %c0_1 = arith.constant 0 : index
    %c0_2 = arith.constant 0 : index
    %1 = vector.load %arg2[%c0_1, %c0_2] : memref<256x3xf32, #tpu.memory_space<vmem>>, vector<256x3xf32>
    %2 = vector.extract_strided_slice %1 {offsets = [0, 0], sizes = [256, 1], strides = [1, 1]} : vector<256x3xf32> to vector<256x1xf32>
    %3 = vector.extract_strided_slice %0 {offsets = [0, 0], sizes = [1, 1024], strides = [1, 1]} : vector<3x1024xf32> to vector<1x1024xf32>
    %4 = vector.broadcast %2 : vector<256x1xf32> to vector<256x1024xf32>
    %5 = vector.broadcast %3 : vector<1x1024xf32> to vector<256x1024xf32>
    %6 = arith.mulf %4, %5 : vector<256x1024xf32>
    %7 = vector.extract_strided_slice %1 {offsets = [0, 1], sizes = [256, 1], strides = [1, 1]} : vector<256x3xf32> to vector<256x1xf32>
    %8 = vector.extract_strided_slice %0 {offsets = [1, 0], sizes = [1, 1024], strides = [1, 1]} : vector<3x1024xf32> to vector<1x1024xf32>
    %9 = vector.broadcast %7 : vector<256x1xf32> to vector<256x1024xf32>
    %10 = vector.broadcast %8 : vector<1x1024xf32> to vector<256x1024xf32>
    %11 = arith.mulf %9, %10 : vector<256x1024xf32>
    %12 = arith.addf %6, %11 : vector<256x1024xf32>
    %13 = vector.extract_strided_slice %1 {offsets = [0, 2], sizes = [256, 1], strides = [1, 1]} : vector<256x3xf32> to vector<256x1xf32>
    %14 = vector.extract_strided_slice %0 {offsets = [2, 0], sizes = [1, 1024], strides = [1, 1]} : vector<3x1024xf32> to vector<1x1024xf32>
    %15 = vector.broadcast %13 : vector<256x1xf32> to vector<256x1024xf32>
    %16 = vector.broadcast %14 : vector<1x1024xf32> to vector<256x1024xf32>
    %17 = arith.mulf %15, %16 : vector<256x1024xf32>
    %18 = arith.addf %12, %17 : vector<256x1024xf32>
    %c0_3 = arith.constant 0 : index
    %c0_4 = arith.constant 0 : index
    %19 = vector.load %arg3[%c0_3, %c0_4] : memref<256x1xf32, #tpu.memory_space<vmem>>, vector<256x1xf32>
    %20 = vector.broadcast %19 : vector<256x1xf32> to vector<256x1024xf32>
    %21 = arith.addf %18, %20 : vector<256x1024xf32>
    %22 = math.tanh %21 : vector<256x1024xf32>
    %c0_5 = arith.constant 0 : index
    %c0_6 = arith.constant 0 : index
    %23 = vector.load %arg4[%c0_5, %c0_6] : memref<256x256xbf16, #tpu.memory_space<vmem>>, vector<256x256xbf16>
    %c0_7 = arith.constant 0 : index
    %c0_8 = arith.constant 0 : index
    %24 = vector.load %arg5[%c0_7, %c0_8] : memref<256x1xf32, #tpu.memory_space<vmem>>, vector<256x1xf32>
    %25 = arith.truncf %22 : vector<256x1024xf32> to vector<256x1024xbf16>
    %cst = arith.constant dense<0.000000e+00> : vector<256x1024xf32>
    %26 = tpu.matmul %23, %25, %cst {dimension_numbers = #tpu.dot_dimension_numbers<[1], [0], [0], [1], [0, 0, 1, 1], [], []>} : vector<256x256xbf16>, vector<256x1024xbf16>, vector<256x1024xf32> -> vector<256x1024xf32>
    %27 = vector.broadcast %24 : vector<256x1xf32> to vector<256x1024xf32>
    %28 = arith.addf %26, %27 : vector<256x1024xf32>
    %29 = math.tanh %28 : vector<256x1024xf32>
    %30 = arith.truncf %29 : vector<256x1024xf32> to vector<256x1024xbf16>
    %cst_9 = arith.constant dense<0.000000e+00> : vector<256x1024xf32>
    %31 = tpu.matmul %23, %30, %cst_9 {dimension_numbers = #tpu.dot_dimension_numbers<[1], [0], [0], [1], [0, 0, 1, 1], [], []>} : vector<256x256xbf16>, vector<256x1024xbf16>, vector<256x1024xf32> -> vector<256x1024xf32>
    %32 = vector.broadcast %24 : vector<256x1xf32> to vector<256x1024xf32>
    %33 = arith.addf %31, %32 : vector<256x1024xf32>
    %34 = math.tanh %33 : vector<256x1024xf32>
    %c0_10 = arith.constant 0 : index
    %c0_11 = arith.constant 0 : index
    %35 = vector.load %arg6[%c0_10, %c0_11] : memref<1x256xf32, #tpu.memory_space<vmem>>, vector<1x256xf32>
    %cst_12 = arith.constant dense<0.000000e+00> : vector<1x1024xf32>
    %36 = tpu.matmul %35, %34, %cst_12 {dimension_numbers = #tpu.dot_dimension_numbers<[1], [0], [0], [1], [0, 0, 1, 1], [], []>} : vector<1x256xf32>, vector<256x1024xf32>, vector<1x1024xf32> -> vector<1x1024xf32>
    %c0_13 = arith.constant 0 : index
    %c0_14 = arith.constant 0 : index
    %37 = vector.load %arg7[%c0_13, %c0_14] : memref<1x1xf32, #tpu.memory_space<vmem>>, vector<1x1xf32>
    %38 = vector.broadcast %37 : vector<1x1xf32> to vector<1x1024xf32>
    %39 = arith.addf %36, %38 : vector<1x1024xf32>
    %c0_15 = arith.constant 0 : index
    %c0_16 = arith.constant 0 : index
    %40 = vector.load %arg8[%c0_15, %c0_16] : memref<1x1024xf32, #tpu.memory_space<vmem>>, vector<1x1024xf32>
    tpu.vector_store %arg8[%c0_15, %c0_16], %39 {strides = array<i32>} : memref<1x1024xf32, #tpu.memory_space<vmem>>, vector<1x1024xf32>,
    return
  }
  func.func @transform_0(%arg0: i32) -> (i32, i32) {
    %c0_i32 = arith.constant 0 : i32
    %c0_i32_0 = arith.constant 0 : i32
    return %c0_i32, %arg0 : i32, i32
  }
  func.func @transform_1(%arg0: i32) -> (i32, i32) {
    %c0_i32 = arith.constant 0 : i32
    %c0_i32_0 = arith.constant 0 : i32
    %c0_i32_1 = arith.constant 0 : i32
    return %c0_i32, %c0_i32_0 : i32, i32
  }
  func.func @transform_2(%arg0: i32) -> (i32, i32) {
    %c0_i32 = arith.constant 0 : i32
    %c0_i32_0 = arith.constant 0 : i32
    %c0_i32_1 = arith.constant 0 : i32
    return %c0_i32, %c0_i32_0 : i32, i32
  }
  func.func @transform_3(%arg0: i32) -> (i32, i32) {
    %c0_i32 = arith.constant 0 : i32
    %c0_i32_0 = arith.constant 0 : i32
    %c0_i32_1 = arith.constant 0 : i32
    return %c0_i32, %c0_i32_0 : i32, i32
  }
  func.func @transform_4(%arg0: i32) -> (i32, i32) {
    %c0_i32 = arith.constant 0 : i32
    %c0_i32_0 = arith.constant 0 : i32
    %c0_i32_1 = arith.constant 0 : i32
    return %c0_i32, %c0_i32_0 : i32, i32
  }
  func.func @transform_5(%arg0: i32) -> (i32, i32) {
    %c0_i32 = arith.constant 0 : i32
    %c0_i32_0 = arith.constant 0 : i32
    %c0_i32_1 = arith.constant 0 : i32
    return %c0_i32, %c0_i32_0 : i32, i32
  }
  func.func @transform_6(%arg0: i32) -> (i32, i32) {
    %c0_i32 = arith.constant 0 : i32
    %c0_i32_0 = arith.constant 0 : i32
    %c0_i32_1 = arith.constant 0 : i32
    return %c0_i32, %c0_i32_0 : i32, i32
  }
  func.func @transform_7(%arg0: i32) -> (i32, i32) {
    %c0_i32 = arith.constant 0 : i32
    %c0_i32_0 = arith.constant 0 : i32
    return %c0_i32, %arg0 : i32, i32
  }
}

</mosaic_0001>

<llo_original>
// kernel: nn_forward.1
$region0: #{nn_forward.1}
  #allocation0 [shape = 'u32[]', space=smem, size = 0x4, offset = 0x4, fixed_abs, tag = 'smem constant byte address 0x4 - core index']
  #allocation1 [shape = 'u32[144,128]{1,0:T(1,128)}', space=vmem, size = 0x12000, scoped, tag = 'internal scratch']
  #allocation2 [shape = 'f32[1,1]{1,0:T(1,128)S(1)}', space=vmem, size = 0x200, scoped, tag = 'scoped memory for nn_forward.1']
  %s0 = inlined_call_operand.vmem [shape: f32[3,3072], index: 0, kind: input, shape index: {}]
  %s1 = inlined_call_operand.vmem [shape: f32[256,3], index: 1, kind: input, shape index: {}]
  %s2 = inlined_call_operand.vmem [shape: f32[256,1], index: 2, kind: input, shape index: {}]
  %s3 = inlined_call_operand.vmem [shape: bf16[256,256], index: 3, kind: input, shape index: {}]
  %s4 = inlined_call_operand.vmem [shape: f32[256,1], index: 4, kind: input, shape index: {}]
  %s5 = inlined_call_operand.vmem [shape: f32[1,256], index: 5, kind: input, shape index: {}]
  %s6 = inlined_call_operand.<no memory space> [shape: f32[1,1], index: 6, kind: input, shape index: {}]
  %s7 = inlined_call_operand.vmem [shape: f32[1,3072], index: 7, kind: output, shape index: {}]
  %s8 = sld [smem:[#allocation0]]
  $region61: #{nn_forward.1} parent=0
    _
  %s10 = ssub.s32 1, %s8
  %s11 = scalar_select 0, %s10, %s8
  %v12 = vstv %s6
  %13 = vst [vmem:[#allocation2] sm:$0x1] %v12
  loop: start=0, step=1, limit=5
  $region2: #{nn_forward.1} parent=0 // loop_pre_header
    _
  $region3: #{nn_forward.1} parent=0 // loop_header
    %s15 = sphi 0, %s19
    %p16 = scmp.ge.s32.totalorder %s15, 5
    %s25 = sphi 0, %s27
    %s28 = sphi 0, %s25
    %s29 = sphi 0, %s28
    %s45 = sphi 0, %s29
    %s49 = sphi 0, %s49
    %s51 = sphi 0, %s49
    %s52 = sphi 0, %s51
    %s66 = sphi 0, %s52
    %s70 = sphi 0, %s70
    %s72 = sphi 0, %s70
    %s73 = sphi 0, %s72
    %s87 = sphi 0, %s73
    %s91 = sphi 0, %s91
    %s93 = sphi 0, %s91
    %s94 = sphi 0, %s93
    %s108 = sphi 0, %s94
    %s112 = sphi 0, %s112
    %s114 = sphi 0, %s112
    %s115 = sphi 0, %s114
    %s129 = sphi 0, %s115
    %s133 = sphi 0, %s133
    %s135 = sphi 0, %s133
    %s136 = sphi 0, %s135
    %s150 = sphi 0, %s136
    %s154 = sphi 0, %s154
    %s156 = sphi 0, %s154
    %s157 = sphi 0, %s156
    %s171 = sphi 0, %s157
    %s177 = sphi 0, %s179
    %s180 = sphi 0, %s177
    %s181 = sphi 0, %s180
    %s197 = sphi 0, %s181
  $region4: #{nn_forward.1} parent=0 // loop_header_branch
    %18 = sbr.rel (%p16) target = $region8
  $region5: #{nn_forward.1} parent=0 // loop_body
    %s20 = ssub.s32 %s15, 1
    %s21 = ssub.s32 %s15, 2
    %s22 = sadd.s32 %s15, 1
    %s23 = ssub.s32 %s15, %s22
    %p24 = scmp.eq.s32.totalorder %s23, 0
    %s26 = sadd.s32 %s25, 1
    %s27 = scalar_select %p24, %s25, %s26
    %p30 = pneg %p24
    %p31 = scmp.eq.s32.totalorder %s15, 2
    %p32 = por %p30, %p31
    %p33 = scmp.ne.s32.totalorder %s25, %s28
    %p34 = scmp.eq.s32.totalorder %s15, 0
    %p35 = por %p33, %p34
    %p36 = scmp.ne.s32.totalorder %s25, %s28
    %p37 = scmp.eq.s32.totalorder %s20, 2
    %p38 = por %p36, %p37
    %p39 = scmp.ne.s32.totalorder %s28, %s29
    %p40 = scmp.eq.s32.totalorder %s20, 0
    %p41 = por %p39, %p40
    %p42 = scmp.ne.s32.totalorder %s28, %s29
    %p43 = scmp.eq.s32.totalorder %s21, 2
    %p44 = por %p42, %p43
    %p46 = scmp.ne.s32.totalorder %s29, %s45
    %p47 = scmp.eq.s32.totalorder %s21, 0
    %p48 = por %p46, %p47
    %s50 = sadd.s32 %s49, 1
    %p53 = scmp.eq.s32.totalorder %s15, 2
    %p54 = scmp.ne.s32.totalorder %s49, %s51
    %p55 = scmp.eq.s32.totalorder %s15, 0
    %p56 = por %p54, %p55
    %p57 = scmp.ne.s32.totalorder %s49, %s51
    %p58 = scmp.eq.s32.totalorder %s20, 2
    %p59 = por %p57, %p58
    %p60 = scmp.ne.s32.totalorder %s51, %s52
    %p61 = scmp.eq.s32.totalorder %s20, 0
    %p62 = por %p60, %p61
    %p63 = scmp.ne.s32.totalorder %s51, %s52
    %p64 = scmp.eq.s32.totalorder %s21, 2
    %p65 = por %p63, %p64
    %p67 = scmp.ne.s32.totalorder %s52, %s66
    %p68 = scmp.eq.s32.totalorder %s21, 0
    %p69 = por %p67, %p68
    %s71 = sadd.s32 %s70, 1
    %p74 = scmp.eq.s32.totalorder %s15, 2
    %p75 = scmp.ne.s32.totalorder %s70, %s72
    %p76 = scmp.eq.s32.totalorder %s15, 0
    %p77 = por %p75, %p76
    %p78 = scmp.ne.s32.totalorder %s70, %s72
    %p79 = scmp.eq.s32.totalorder %s20, 2
    %p80 = por %p78, %p79
    %p81 = scmp.ne.s32.totalorder %s72, %s73
    %p82 = scmp.eq.s32.totalorder %s20, 0
    %p83 = por %p81, %p82
    %p84 = scmp.ne.s32.totalorder %s72, %s73
    %p85 = scmp.eq.s32.totalorder %s21, 2
    %p86 = por %p84, %p85
    %p88 = scmp.ne.s32.totalorder %s73, %s87
    %p89 = scmp.eq.s32.totalorder %s21, 0
    %p90 = por %p88, %p89
    %s92 = sadd.s32 %s91, 1
    %p95 = scmp.eq.s32.totalorder %s15, 2
    %p96 = scmp.ne.s32.totalorder %s91, %s93
    %p97 = scmp.eq.s32.totalorder %s15, 0
    %p98 = por %p96, %p97
    %p99 = scmp.ne.s32.totalorder %s91, %s93
    %p100 = scmp.eq.s32.totalorder %s20, 2
    %p101 = por %p99, %p100
    %p102 = scmp.ne.s32.totalorder %s93, %s94
    %p103 = scmp.eq.s32.totalorder %s20, 0
    %p104 = por %p102, %p103
    %p105 = scmp.ne.s32.totalorder %s93, %s94
    %p106 = scmp.eq.s32.totalorder %s21, 2
    %p107 = por %p105, %p106
    %p109 = scmp.ne.s32.totalorder %s94, %s108
    %p110 = scmp.eq.s32.totalorder %s21, 0
    %p111 = por %p109, %p110
    %s113 = sadd.s32 %s112, 1
    %p116 = scmp.eq.s32.totalorder %s15, 2
    %p117 = scmp.ne.s32.totalorder %s112, %s114
    %p118 = scmp.eq.s32.totalorder %s15, 0
    %p119 = por %p117, %p118
    %p120 = scmp.ne.s32.totalorder %s112, %s114
    %p121 = scmp.eq.s32.totalorder %s20, 2
    %p122 = por %p120, %p121
    %p123 = scmp.ne.s32.totalorder %s114, %s115
    %p124 = scmp.eq.s32.totalorder %s20, 0
    %p125 = por %p123, %p124
    %p126 = scmp.ne.s32.totalorder %s114, %s115
    %p127 = scmp.eq.s32.totalorder %s21, 2
    %p128 = por %p126, %p127
    %p130 = scmp.ne.s32.totalorder %s115, %s129
    %p131 = scmp.eq.s32.totalorder %s21, 0
    %p132 = por %p130, %p131
    %s134 = sadd.s32 %s133, 1
    %p137 = scmp.eq.s32.totalorder %s15, 2
    %p138 = scmp.ne.s32.totalorder %s133, %s135
    %p139 = scmp.eq.s32.totalorder %s15, 0
    %p140 = por %p138, %p139
    %p141 = scmp.ne.s32.totalorder %s133, %s135
    %p142 = scmp.eq.s32.totalorder %s20, 2
    %p143 = por %p141, %p142
    %p144 = scmp.ne.s32.totalorder %s135, %s136
    %p145 = scmp.eq.s32.totalorder %s20, 0
    %p146 = por %p144, %p145
    %p147 = scmp.ne.s32.totalorder %s135, %s136
    %p148 = scmp.eq.s32.totalorder %s21, 2
    %p149 = por %p147, %p148
    %p151 = scmp.ne.s32.totalorder %s136, %s150
    %p152 = scmp.eq.s32.totalorder %s21, 0
    %p153 = por %p151, %p152
    %s155 = sadd.s32 %s154, 1
    %p158 = scmp.eq.s32.totalorder %s15, 2
    %p159 = scmp.ne.s32.totalorder %s154, %s156
    %p160 = scmp.eq.s32.totalorder %s15, 0
    %p161 = por %p159, %p160
    %p162 = scmp.ne.s32.totalorder %s154, %s156
    %p163 = scmp.eq.s32.totalorder %s20, 2
    %p164 = por %p162, %p163
    %p165 = scmp.ne.s32.totalorder %s156, %s157
    %p166 = scmp.eq.s32.totalorder %s20, 0
    %p167 = por %p165, %p166
    %p168 = scmp.ne.s32.totalorder %s156, %s157
    %p169 = scmp.eq.s32.totalorder %s21, 2
    %p170 = por %p168, %p169
    %p172 = scmp.ne.s32.totalorder %s157, %s171
    %p173 = scmp.eq.s32.totalorder %s21, 0
    %p174 = por %p172, %p173
    %s175 = ssub.s32 %s15, %s22
    %p176 = scmp.eq.s32.totalorder %s175, 0
    %s178 = sadd.s32 %s177, 1
    %s179 = scalar_select %p176, %s177, %s178
    %p182 = pneg %p176
    %p183 = scmp.eq.s32.totalorder %s15, 2
    %p184 = por %p182, %p183
    %p185 = scmp.ne.s32.totalorder %s177, %s180
    %p186 = scmp.eq.s32.totalorder %s15, 0
    %p187 = por %p185, %p186
    %p188 = scmp.ne.s32.totalorder %s177, %s180
    %p189 = scmp.eq.s32.totalorder %s20, 2
    %p190 = por %p188, %p189
    %p191 = scmp.ne.s32.totalorder %s180, %s181
    %p192 = scmp.eq.s32.totalorder %s20, 0
    %p193 = por %p191, %p192
    %p194 = scmp.ne.s32.totalorder %s180, %s181
    %p195 = scmp.eq.s32.totalorder %s21, 2
    %p196 = por %p194, %p195
    %p198 = scmp.ne.s32.totalorder %s181, %s197
    %p199 = scmp.eq.s32.totalorder %s21, 0
    %p200 = por %p198, %p199
    %p201 = scmp.le.s32.totalorder 1, %s15
    %p202 = scmp.lt.s32.totalorder %s15, 4
    %p203 = pnand %p201, %p202
    %p204 = pneg %p203
    // Predicated region
    $region9: #{nn_forward.1} parent=5 // pred_check
      _
    $region10: #{nn_forward.1} parent=5 // pred_check_branch
      %206 = sbr.rel (%p203) target = $region12
    $region11: #{nn_forward.1} parent=5 // pred_region
      %s207 = ssub.s32 %s15, 1
      // Predicated region
      $region13: #{nn_forward.1} parent=11 // pred_check
        %p208 = pneg %p62
      $region14: #{nn_forward.1} parent=11 // pred_check_branch
        %210 = sbr.rel (%p208) target = $region16
      $region15: #{nn_forward.1} parent=11 // pred_region
        _
      $region16: #{nn_forward.1} parent=11 // pred_fallthru
        _
      // Predicated region
      $region17: #{nn_forward.1} parent=11 // pred_check
        %p211 = pneg %p83
      $region18: #{nn_forward.1} parent=11 // pred_check_branch
        %213 = sbr.rel (%p211) target = $region20
      $region19: #{nn_forward.1} parent=11 // pred_region
        _
      $region20: #{nn_forward.1} parent=11 // pred_fallthru
        _
      // Predicated region
      $region21: #{nn_forward.1} parent=11 // pred_check
        %p214 = pneg %p104
      $region22: #{nn_forward.1} parent=11 // pred_check_branch
        %216 = sbr.rel (%p214) target = $region24
      $region23: #{nn_forward.1} parent=11 // pred_region
        _
      $region24: #{nn_forward.1} parent=11 // pred_fallthru
        _
      // Predicated region
      $region25: #{nn_forward.1} parent=11 // pred_check
        %p217 = pneg %p125
      $region26: #{nn_forward.1} parent=11 // pred_check_branch
        %219 = sbr.rel (%p217) target = $region28
      $region27: #{nn_forward.1} parent=11 // pred_region
        _
      $region28: #{nn_forward.1} parent=11 // pred_fallthru
        _
      // Predicated region
      $region29: #{nn_forward.1} parent=11 // pred_check
        %p220 = pneg %p146
      $region30: #{nn_forward.1} parent=11 // pred_check_branch
        %222 = sbr.rel (%p220) target = $region32
      $region31: #{nn_forward.1} parent=11 // pred_region
        _
      $region32: #{nn_forward.1} parent=11 // pred_fallthru
        _
      // Predicated region
      $region33: #{nn_forward.1} parent=11 // pred_check
        %p223 = pneg %p167
      $region34: #{nn_forward.1} parent=11 // pred_check_branch
        %225 = sbr.rel (%p223) target = $region36
      $region35: #{nn_forward.1} parent=11 // pred_region
        _
      $region36: #{nn_forward.1} parent=11 // pred_fallthru
        _
    $region12: #{nn_forward.1} parent=5 // pred_fallthru
      _
    %p226 = scmp.lt.s32.totalorder %s15, 3
    // Predicated region
    $region37: #{nn_forward.1} parent=5 // pred_check
      %p227 = pneg %p226
    $region38: #{nn_forward.1} parent=5 // pred_check_branch
      %229 = sbr.rel (%p227) target = $region40
    $region39: #{nn_forward.1} parent=5 // pred_region
      // Predicated region
      $region41: #{nn_forward.1} parent=39 // pred_check
        %p230 = pneg %p35
      $region42: #{nn_forward.1} parent=39 // pred_check_branch
        %232 = sbr.rel (%p230) target = $region44
      $region43: #{nn_forward.1} parent=39 // pred_region
        %s233 = smul.u32 8, %s15
        %p234 = scmp.lt.s32.totalorder %s233, 23
        %s235 = scalar_select %p234, %s233, 23
        %s236 = smul.addr %s235, 4
        %s237 = scalar_lea.vmem %s0, %s236
        %s238 = smul.u32 8, %s15
      $region44: #{nn_forward.1} parent=39 // pred_fallthru
        _
    $region40: #{nn_forward.1} parent=5 // pred_fallthru
      _
    %p239 = scmp.le.s32.totalorder 1, %s15
    %p240 = scmp.lt.s32.totalorder %s15, 4
    %p241 = pnand %p239, %p240
    %p242 = pneg %p241
    // Predicated region
    $region45: #{nn_forward.1} parent=5 // pred_check
      _
    $region46: #{nn_forward.1} parent=5 // pred_check_branch
      %244 = sbr.rel (%p241) target = $region48
    $region47: #{nn_forward.1} parent=5 // pred_region
      %s245 = ssub.s32 %s15, 1
      %s246 = smul.u32 8, %s20
      %p247 = scmp.lt.s32.totalorder %s246, 23
      %s248 = scalar_select %p247, %s246, 23
      %s249 = smul.addr %s248, 4
      %s250 = scalar_lea.vmem %s0, %s249
      %p251 = pneg %p41
      %p252 = pneg %p38
      %p253 = pneg %p62
      %p254 = pneg %p59
      %p255 = pneg %p83
      %p256 = pneg %p80
      %p257 = pneg %p104
      %p258 = pneg %p101
      %p259 = pneg %p125
      %p260 = pneg %p122
      %p261 = pneg %p146
      %p262 = pneg %p143
      %p263 = pneg %p167
      %p264 = pneg %p164
      %p265 = pneg %p193
      %p266 = pneg %p190
      %s267 = smul.u32 8, %s20
      %p268 = scmp.lt.s32.totalorder %s267, 23
      %s269 = scalar_select %p268, %s267, 23
      %s270 = scalar_lea.vmem %s7, %s269
      %s271 = smul.u32 8, %s20
      %p272 = scmp.lt.s32.totalorder %s271, 23
      %s273 = scalar_select %p272, %s271, 23
      %s274 = smul.addr %s273, 4
      %s275 = scalar_lea.vmem %s0, %s274
      %s276 = smul.u32 8, %s20
      %s277 = smul.u32 8, %s20
      %p278 = scmp.lt.s32.totalorder %s277, 23
      %s279 = scalar_select %p278, %s277, 23
      %s280 = scalar_lea.vmem %s7, %s279
      %s281 = smul.u32 8, %s20
      %v282 = vld [vmem:[%s275] sm:$0x77]
      %v283 = vld [vmem:[%s275 + $0x8] sm:$0x77]
      %v284 = vld [vmem:[%s275 + $0x10] sm:$0x77]
      %v285 = vld [vmem:[%s275 + $0x18] sm:$0x77]
      %v286 = vld [vmem:[%s1] sm:$0xff]
      %v287 = vld [vmem:[%s1 + $0x8] sm:$0xff]
      %v288 = vld [vmem:[%s1 + $0x10] sm:$0xff]
      %v289 = vld [vmem:[%s1 + $0x18] sm:$0xff]
      %v290 = vld [vmem:[%s1 + $0x20] sm:$0xff]
      %v291 = vld [vmem:[%s1 + $0x28] sm:$0xff]
      %v292 = vld [vmem:[%s1 + $0x30] sm:$0xff]
      %v293 = vld [vmem:[%s1 + $0x38] sm:$0xff]
      %v294 = vld [vmem:[%s1 + $0x40] sm:$0xff]
      %v295 = vld [vmem:[%s1 + $0x48] sm:$0xff]
      %v296 = vld [vmem:[%s1 + $0x50] sm:$0xff]
      %v297 = vld [vmem:[%s1 + $0x58] sm:$0xff]
      %v298 = vld [vmem:[%s1 + $0x60] sm:$0xff]
      %v299 = vld [vmem:[%s1 + $0x68] sm:$0xff]
      %v300 = vld [vmem:[%s1 + $0x70] sm:$0xff]
      %v301 = vld [vmem:[%s1 + $0x78] sm:$0xff]
      %v302 = vld [vmem:[%s1 + $0x80] sm:$0xff]
      %v303 = vld [vmem:[%s1 + $0x88] sm:$0xff]
      %v304 = vld [vmem:[%s1 + $0x90] sm:$0xff]
      %v305 = vld [vmem:[%s1 + $0x98] sm:$0xff]
      %v306 = vld [vmem:[%s1 + $0xa0] sm:$0xff]
      %v307 = vld [vmem:[%s1 + $0xa8] sm:$0xff]
      %v308 = vld [vmem:[%s1 + $0xb0] sm:$0xff]
      %v309 = vld [vmem:[%s1 + $0xb8] sm:$0xff]
      %v310 = vld [vmem:[%s1 + $0xc0] sm:$0xff]
      %v311 = vld [vmem:[%s1 + $0xc8] sm:$0xff]
      %v312 = vld [vmem:[%s1 + $0xd0] sm:$0xff]
      %v313 = vld [vmem:[%s1 + $0xd8] sm:$0xff]
      %v314 = vld [vmem:[%s1 + $0xe0] sm:$0xff]
      %v315 = vld [vmem:[%s1 + $0xe8] sm:$0xff]
      %v316 = vld [vmem:[%s1 + $0xf0] sm:$0xff]
      %v317 = vld [vmem:[%s1 + $0xf8] sm:$0xff]
      %319 = vset.pattern.permute.xlu0 0
      %320 = vperm.xlu0 %319, %v286
      %v321 = vpop.permute.xlu0 %320
      %324 = vset.pattern.permute.xlu0 0
      %325 = vperm.xlu0 %324, %v287
      %v326 = vpop.permute.xlu0 %325
      %329 = vset.pattern.permute.xlu0 0
      %330 = vperm.xlu0 %329, %v288
      %v331 = vpop.permute.xlu0 %330
      %334 = vset.pattern.permute.xlu0 0
      %335 = vperm.xlu0 %334, %v289
      %v336 = vpop.permute.xlu0 %335
      %339 = vset.pattern.permute.xlu0 0
      %340 = vperm.xlu0 %339, %v290
      %v341 = vpop.permute.xlu0 %340
      %344 = vset.pattern.permute.xlu0 0
      %345 = vperm.xlu0 %344, %v291
      %v346 = vpop.permute.xlu0 %345
      %349 = vset.pattern.permute.xlu0 0
      %350 = vperm.xlu0 %349, %v292
      %v351 = vpop.permute.xlu0 %350
      %354 = vset.pattern.permute.xlu0 0
      %355 = vperm.xlu0 %354, %v293
      %v356 = vpop.permute.xlu0 %355
      %359 = vset.pattern.permute.xlu0 0
      %360 = vperm.xlu0 %359, %v294
      %v361 = vpop.permute.xlu0 %360
      %364 = vset.pattern.permute.xlu0 0
      %365 = vperm.xlu0 %364, %v295
      %v366 = vpop.permute.xlu0 %365
      %369 = vset.pattern.permute.xlu0 0
      %370 = vperm.xlu0 %369, %v296
      %v371 = vpop.permute.xlu0 %370
      %374 = vset.pattern.permute.xlu0 0
      %375 = vperm.xlu0 %374, %v297
      %v376 = vpop.permute.xlu0 %375
      %379 = vset.pattern.permute.xlu0 0
      %380 = vperm.xlu0 %379, %v298
      %v381 = vpop.permute.xlu0 %380
      %384 = vset.pattern.permute.xlu0 0
      %385 = vperm.xlu0 %384, %v299
      %v386 = vpop.permute.xlu0 %385
      %389 = vset.pattern.permute.xlu0 0
      %390 = vperm.xlu0 %389, %v300
      %v391 = vpop.permute.xlu0 %390
      %394 = vset.pattern.permute.xlu0 0
      %395 = vperm.xlu0 %394, %v301
      %v396 = vpop.permute.xlu0 %395
      %399 = vset.pattern.permute.xlu0 0
      %400 = vperm.xlu0 %399, %v302
      %v401 = vpop.permute.xlu0 %400
      %404 = vset.pattern.permute.xlu0 0
      %405 = vperm.xlu0 %404, %v303
      %v406 = vpop.permute.xlu0 %405
      %409 = vset.pattern.permute.xlu0 0
      %410 = vperm.xlu0 %409, %v304
      %v411 = vpop.permute.xlu0 %410
      %414 = vset.pattern.permute.xlu0 0
      %415 = vperm.xlu0 %414, %v305
      %v416 = vpop.permute.xlu0 %415
      %419 = vset.pattern.permute.xlu0 0
      %420 = vperm.xlu0 %419, %v306
      %v421 = vpop.permute.xlu0 %420
      %424 = vset.pattern.permute.xlu0 0
      %425 = vperm.xlu0 %424, %v307
      %v426 = vpop.permute.xlu0 %425
      %429 = vset.pattern.permute.xlu0 0
      %430 = vperm.xlu0 %429, %v308
      %v431 = vpop.permute.xlu0 %430
      %434 = vset.pattern.permute.xlu0 0
      %435 = vperm.xlu0 %434, %v309
      %v436 = vpop.permute.xlu0 %435
      %439 = vset.pattern.permute.xlu0 0
      %440 = vperm.xlu0 %439, %v310
      %v441 = vpop.permute.xlu0 %440
      %444 = vset.pattern.permute.xlu0 0
      %445 = vperm.xlu0 %444, %v311
      %v446 = vpop.permute.xlu0 %445
      %449 = vset.pattern.permute.xlu0 0
      %450 = vperm.xlu0 %449, %v312
      %v451 = vpop.permute.xlu0 %450
      %454 = vset.pattern.permute.xlu0 0
      %455 = vperm.xlu0 %454, %v313
      %v456 = vpop.permute.xlu0 %455
      %459 = vset.pattern.permute.xlu0 0
      %460 = vperm.xlu0 %459, %v314
      %v461 = vpop.permute.xlu0 %460
      %464 = vset.pattern.permute.xlu0 0
      %465 = vperm.xlu0 %464, %v315
      %v466 = vpop.permute.xlu0 %465
      %469 = vset.pattern.permute.xlu0 0
      %470 = vperm.xlu0 %469, %v316
      %v471 = vpop.permute.xlu0 %470
      %474 = vset.pattern.permute.xlu0 0
      %475 = vperm.xlu0 %474, %v317
      %v476 = vpop.permute.xlu0 %475
      %v482 = vlaneseq
      %v483 = vshrl.u32 %v482, 7
      %v484 = vsub.s32 0, %v483
      %v485 = vrot.slane %v282, %v484
      %v486 = vlaneseq
      %v487 = vshrl.u32 %v486, 7
      %v488 = vsub.s32 4, %v487
      %v489 = vrot.slane %v282, %v488
      %v490 = vlaneseq
      %v491 = vshrl.u32 %v490, 7
      %v492 = vsub.s32 0, %v491
      %v493 = vrot.slane %v283, %v492
      %v494 = vlaneseq
      %v495 = vshrl.u32 %v494, 7
      %v496 = vsub.s32 4, %v495
      %v497 = vrot.slane %v283, %v496
      %v498 = vlaneseq
      %v499 = vshrl.u32 %v498, 7
      %v500 = vsub.s32 0, %v499
      %v501 = vrot.slane %v284, %v500
      %v502 = vlaneseq
      %v503 = vshrl.u32 %v502, 7
      %v504 = vsub.s32 4, %v503
      %v505 = vrot.slane %v284, %v504
      %v506 = vlaneseq
      %v507 = vshrl.u32 %v506, 7
      %v508 = vsub.s32 0, %v507
      %v509 = vrot.slane %v285, %v508
      %v510 = vlaneseq
      %v511 = vshrl.u32 %v510, 7
      %v512 = vsub.s32 4, %v511
      %v513 = vrot.slane %v285, %v512
      %v522 = vlaneseq
      %v523 = vshrl.u32 %v522, 7
      %v524 = vsub.s32 0, %v523
      %v525 = vrot.slane %v485, %v524
      %v526 = vlaneseq
      %v527 = vshrl.u32 %v526, 7
      %v528 = vsub.s32 0, %v527
      %v529 = vrot.slane %v489, %v528
      %v530 = vlaneseq
      %v531 = vshrl.u32 %v530, 7
      %v532 = vsub.s32 0, %v531
      %v533 = vrot.slane %v493, %v532
      %v534 = vlaneseq
      %v535 = vshrl.u32 %v534, 7
      %v536 = vsub.s32 0, %v535
      %v537 = vrot.slane %v497, %v536
      %v538 = vlaneseq
      %v539 = vshrl.u32 %v538, 7
      %v540 = vsub.s32 0, %v539
      %v541 = vrot.slane %v501, %v540
      %v542 = vlaneseq
      %v543 = vshrl.u32 %v542, 7
      %v544 = vsub.s32 0, %v543
      %v545 = vrot.slane %v505, %v544
      %v546 = vlaneseq
      %v547 = vshrl.u32 %v546, 7
      %v548 = vsub.s32 0, %v547
      %v549 = vrot.slane %v509, %v548
      %v550 = vlaneseq
      %v551 = vshrl.u32 %v550, 7
      %v552 = vsub.s32 0, %v551
      %v553 = vrot.slane %v513, %v552
      %v554 = vmul.f32 %v321, %v525
      %v555 = vmul.f32 %v321, %v529
      %v556 = vmul.f32 %v321, %v533
      %v557 = vmul.f32 %v321, %v537
      %v558 = vmul.f32 %v321, %v541
      %v559 = vmul.f32 %v321, %v545
      %v560 = vmul.f32 %v321, %v549
      %v561 = vmul.f32 %v321, %v553
      %v562 = vmul.f32 %v326, %v525
      %v563 = vmul.f32 %v326, %v529
      %v564 = vmul.f32 %v326, %v533
      %v565 = vmul.f32 %v326, %v537
      %v566 = vmul.f32 %v326, %v541
      %v567 = vmul.f32 %v326, %v545
      %v568 = vmul.f32 %v326, %v549
      %v569 = vmul.f32 %v326, %v553
      %v570 = vmul.f32 %v331, %v525
      %v571 = vmul.f32 %v331, %v529
      %v572 = vmul.f32 %v331, %v533
      %v573 = vmul.f32 %v331, %v537
      %v574 = vmul.f32 %v331, %v541
      %v575 = vmul.f32 %v331, %v545
      %v576 = vmul.f32 %v331, %v549
      %v577 = vmul.f32 %v331, %v553
      %v578 = vmul.f32 %v336, %v525
      %v579 = vmul.f32 %v336, %v529
      %v580 = vmul.f32 %v336, %v533
      %v581 = vmul.f32 %v336, %v537
      %v582 = vmul.f32 %v336, %v541
      %v583 = vmul.f32 %v336, %v545
      %v584 = vmul.f32 %v336, %v549
      %v585 = vmul.f32 %v336, %v553
      %v586 = vmul.f32 %v341, %v525
      %v587 = vmul.f32 %v341, %v529
      %v588 = vmul.f32 %v341, %v533
      %v589 = vmul.f32 %v341, %v537
      %v590 = vmul.f32 %v341, %v541
      %v591 = vmul.f32 %v341, %v545
      %v592 = vmul.f32 %v341, %v549
      %v593 = vmul.f32 %v341, %v553
      %v594 = vmul.f32 %v346, %v525
      %v595 = vmul.f32 %v346, %v529
      %v596 = vmul.f32 %v346, %v533
      %v597 = vmul.f32 %v346, %v537
      %v598 = vmul.f32 %v346, %v541
      %v599 = vmul.f32 %v346, %v545
      %v600 = vmul.f32 %v346, %v549
      %v601 = vmul.f32 %v346, %v553
      %v602 = vmul.f32 %v351, %v525
      %v603 = vmul.f32 %v351, %v529
      %v604 = vmul.f32 %v351, %v533
      %v605 = vmul.f32 %v351, %v537
      %v606 = vmul.f32 %v351, %v541
      %v607 = vmul.f32 %v351, %v545
      %v608 = vmul.f32 %v351, %v549
      %v609 = vmul.f32 %v351, %v553
      %v610 = vmul.f32 %v356, %v525
      %v611 = vmul.f32 %v356, %v529
      %v612 = vmul.f32 %v356, %v533
      %v613 = vmul.f32 %v356, %v537
      %v614 = vmul.f32 %v356, %v541
      %v615 = vmul.f32 %v356, %v545
      %v616 = vmul.f32 %v356, %v549
      %v617 = vmul.f32 %v356, %v553
      %v618 = vmul.f32 %v361, %v525
      %v619 = vmul.f32 %v361, %v529
      %v620 = vmul.f32 %v361, %v533
      %v621 = vmul.f32 %v361, %v537
      %v622 = vmul.f32 %v361, %v541
      %v623 = vmul.f32 %v361, %v545
      %v624 = vmul.f32 %v361, %v549
      %v625 = vmul.f32 %v361, %v553
      %v626 = vmul.f32 %v366, %v525
      %v627 = vmul.f32 %v366, %v529
      %v628 = vmul.f32 %v366, %v533
      %v629 = vmul.f32 %v366, %v537
      %v630 = vmul.f32 %v366, %v541
      %v631 = vmul.f32 %v366, %v545
      %v632 = vmul.f32 %v366, %v549
      %v633 = vmul.f32 %v366, %v553
      %v634 = vmul.f32 %v371, %v525
      %v635 = vmul.f32 %v371, %v529
      %v636 = vmul.f32 %v371, %v533
      %v637 = vmul.f32 %v371, %v537
      %v638 = vmul.f32 %v371, %v541
      %v639 = vmul.f32 %v371, %v545
      %v640 = vmul.f32 %v371, %v549
      %v641 = vmul.f32 %v371, %v553
      %v642 = vmul.f32 %v376, %v525
      %v643 = vmul.f32 %v376, %v529
      %v644 = vmul.f32 %v376, %v533
      %v645 = vmul.f32 %v376, %v537
      %v646 = vmul.f32 %v376, %v541
      %v647 = vmul.f32 %v376, %v545
      %v648 = vmul.f32 %v376, %v549
      %v649 = vmul.f32 %v376, %v553
      %v650 = vmul.f32 %v381, %v525
      %v651 = vmul.f32 %v381, %v529
      %v652 = vmul.f32 %v381, %v533
      %v653 = vmul.f32 %v381, %v537
      %v654 = vmul.f32 %v381, %v541
      %v655 = vmul.f32 %v381, %v545
      %v656 = vmul.f32 %v381, %v549
      %v657 = vmul.f32 %v381, %v553
      %v658 = vmul.f32 %v386, %v525
      %v659 = vmul.f32 %v386, %v529
      %v660 = vmul.f32 %v386, %v533
      %v661 = vmul.f32 %v386, %v537
      %v662 = vmul.f32 %v386, %v541
      %v663 = vmul.f32 %v386, %v545
      %v664 = vmul.f32 %v386, %v549
      %v665 = vmul.f32 %v386, %v553
      %v666 = vmul.f32 %v391, %v525
      %v667 = vmul.f32 %v391, %v529
      %v668 = vmul.f32 %v391, %v533
      %v669 = vmul.f32 %v391, %v537
      %v670 = vmul.f32 %v391, %v541
      %v671 = vmul.f32 %v391, %v545
      %v672 = vmul.f32 %v391, %v549
      %v673 = vmul.f32 %v391, %v553
      %v674 = vmul.f32 %v396, %v525
      %v675 = vmul.f32 %v396, %v529
      %v676 = vmul.f32 %v396, %v533
      %v677 = vmul.f32 %v396, %v537
      %v678 = vmul.f32 %v396, %v541
      %v679 = vmul.f32 %v396, %v545
      %v680 = vmul.f32 %v396, %v549
      %v681 = vmul.f32 %v396, %v553
      %v682 = vmul.f32 %v401, %v525
      %v683 = vmul.f32 %v401, %v529
      %v684 = vmul.f32 %v401, %v533
      %v685 = vmul.f32 %v401, %v537
      %v686 = vmul.f32 %v401, %v541
      %v687 = vmul.f32 %v401, %v545
      %v688 = vmul.f32 %v401, %v549
      %v689 = vmul.f32 %v401, %v553
      %v690 = vmul.f32 %v406, %v525
      %v691 = vmul.f32 %v406, %v529
      %v692 = vmul.f32 %v406, %v533
      %v693 = vmul.f32 %v406, %v537
      %v694 = vmul.f32 %v406, %v541
      %v695 = vmul.f32 %v406, %v545
      %v696 = vmul.f32 %v406, %v549
      %v697 = vmul.f32 %v406, %v553
      %v698 = vmul.f32 %v411, %v525
      %v699 = vmul.f32 %v411, %v529
      %v700 = vmul.f32 %v411, %v533
      %v701 = vmul.f32 %v411, %v537
      %v702 = vmul.f32 %v411, %v541
      %v703 = vmul.f32 %v411, %v545
      %v704 = vmul.f32 %v411, %v549
      %v705 = vmul.f32 %v411, %v553
      %v706 = vmul.f32 %v416, %v525
      %v707 = vmul.f32 %v416, %v529
      %v708 = vmul.f32 %v416, %v533
      %v709 = vmul.f32 %v416, %v537
      %v710 = vmul.f32 %v416, %v541
      %v711 = vmul.f32 %v416, %v545
      %v712 = vmul.f32 %v416, %v549
      %v713 = vmul.f32 %v416, %v553
      %v714 = vmul.f32 %v421, %v525
      %v715 = vmul.f32 %v421, %v529
      %v716 = vmul.f32 %v421, %v533
      %v717 = vmul.f32 %v421, %v537
      %v718 = vmul.f32 %v421, %v541
      %v719 = vmul.f32 %v421, %v545
      %v720 = vmul.f32 %v421, %v549
      %v721 = vmul.f32 %v421, %v553
      %v722 = vmul.f32 %v426, %v525
      %v723 = vmul.f32 %v426, %v529
      %v724 = vmul.f32 %v426, %v533
      %v725 = vmul.f32 %v426, %v537
      %v726 = vmul.f32 %v426, %v541
      %v727 = vmul.f32 %v426, %v545
      %v728 = vmul.f32 %v426, %v549
      %v729 = vmul.f32 %v426, %v553
      %v730 = vmul.f32 %v431, %v525
      %v731 = vmul.f32 %v431, %v529
      %v732 = vmul.f32 %v431, %v533
      %v733 = vmul.f32 %v431, %v537
      %v734 = vmul.f32 %v431, %v541
      %v735 = vmul.f32 %v431, %v545
      %v736 = vmul.f32 %v431, %v549
      %v737 = vmul.f32 %v431, %v553
      %v738 = vmul.f32 %v436, %v525
      %v739 = vmul.f32 %v436, %v529
      %v740 = vmul.f32 %v436, %v533
      %v741 = vmul.f32 %v436, %v537
      %v742 = vmul.f32 %v436, %v541
      %v743 = vmul.f32 %v436, %v545
      %v744 = vmul.f32 %v436, %v549
      %v745 = vmul.f32 %v436, %v553
      %v746 = vmul.f32 %v441, %v525
      %v747 = vmul.f32 %v441, %v529
      %v748 = vmul.f32 %v441, %v533
      %v749 = vmul.f32 %v441, %v537
      %v750 = vmul.f32 %v441, %v541
      %v751 = vmul.f32 %v441, %v545
      %v752 = vmul.f32 %v441, %v549
      %v753 = vmul.f32 %v441, %v553
      %v754 = vmul.f32 %v446, %v525
      %v755 = vmul.f32 %v446, %v529
      %v756 = vmul.f32 %v446, %v533
      %v757 = vmul.f32 %v446, %v537
      %v758 = vmul.f32 %v446, %v541
      %v759 = vmul.f32 %v446, %v545
      %v760 = vmul.f32 %v446, %v549
      %v761 = vmul.f32 %v446, %v553
      %v762 = vmul.f32 %v451, %v525
      %v763 = vmul.f32 %v451, %v529
      %v764 = vmul.f32 %v451, %v533
      %v765 = vmul.f32 %v451, %v537
      %v766 = vmul.f32 %v451, %v541
      %v767 = vmul.f32 %v451, %v545
      %v768 = vmul.f32 %v451, %v549
      %v769 = vmul.f32 %v451, %v553
      %v770 = vmul.f32 %v456, %v525
      %v771 = vmul.f32 %v456, %v529
      %v772 = vmul.f32 %v456, %v533
      %v773 = vmul.f32 %v456, %v537
      %v774 = vmul.f32 %v456, %v541
      %v775 = vmul.f32 %v456, %v545
      %v776 = vmul.f32 %v456, %v549
      %v777 = vmul.f32 %v456, %v553
      %v778 = vmul.f32 %v461, %v525
      %v779 = vmul.f32 %v461, %v529
      %v780 = vmul.f32 %v461, %v533
      %v781 = vmul.f32 %v461, %v537
      %v782 = vmul.f32 %v461, %v541
      %v783 = vmul.f32 %v461, %v545
      %v784 = vmul.f32 %v461, %v549
      %v785 = vmul.f32 %v461, %v553
      %v786 = vmul.f32 %v466, %v525
      %v787 = vmul.f32 %v466, %v529
      %v788 = vmul.f32 %v466, %v533
      %v789 = vmul.f32 %v466, %v537
      %v790 = vmul.f32 %v466, %v541
      %v791 = vmul.f32 %v466, %v545
      %v792 = vmul.f32 %v466, %v549
      %v793 = vmul.f32 %v466, %v553
      %v794 = vmul.f32 %v471, %v525
      %v795 = vmul.f32 %v471, %v529
      %v796 = vmul.f32 %v471, %v533
      %v797 = vmul.f32 %v471, %v537
      %v798 = vmul.f32 %v471, %v541
      %v799 = vmul.f32 %v471, %v545
      %v800 = vmul.f32 %v471, %v549
      %v801 = vmul.f32 %v471, %v553
      %v802 = vmul.f32 %v476, %v525
      %v803 = vmul.f32 %v476, %v529
      %v804 = vmul.f32 %v476, %v533
      %v805 = vmul.f32 %v476, %v537
      %v806 = vmul.f32 %v476, %v541
      %v807 = vmul.f32 %v476, %v545
      %v808 = vmul.f32 %v476, %v549
      %v809 = vmul.f32 %v476, %v553
      %810 = vset.pattern.permute.xlu0 1
      %811 = vperm.xlu0 %810, %v286
      %v812 = vpop.permute.xlu0 %811
      %814 = vset.pattern.permute.xlu0 1
      %815 = vperm.xlu0 %814, %v287
      %v816 = vpop.permute.xlu0 %815
      %818 = vset.pattern.permute.xlu0 1
      %819 = vperm.xlu0 %818, %v288
      %v820 = vpop.permute.xlu0 %819
      %822 = vset.pattern.permute.xlu0 1
      %823 = vperm.xlu0 %822, %v289
      %v824 = vpop.permute.xlu0 %823
      %826 = vset.pattern.permute.xlu0 1
      %827 = vperm.xlu0 %826, %v290
      %v828 = vpop.permute.xlu0 %827
      %830 = vset.pattern.permute.xlu0 1
      %831 = vperm.xlu0 %830, %v291
      %v832 = vpop.permute.xlu0 %831
      %834 = vset.pattern.permute.xlu0 1
      %835 = vperm.xlu0 %834, %v292
      %v836 = vpop.permute.xlu0 %835
      %838 = vset.pattern.permute.xlu0 1
      %839 = vperm.xlu0 %838, %v293
      %v840 = vpop.permute.xlu0 %839
      %842 = vset.pattern.permute.xlu0 1
      %843 = vperm.xlu0 %842, %v294
      %v844 = vpop.permute.xlu0 %843
      %846 = vset.pattern.permute.xlu0 1
      %847 = vperm.xlu0 %846, %v295
      %v848 = vpop.permute.xlu0 %847
      %850 = vset.pattern.permute.xlu0 1
      %851 = vperm.xlu0 %850, %v296
      %v852 = vpop.permute.xlu0 %851
      %854 = vset.pattern.permute.xlu0 1
      %855 = vperm.xlu0 %854, %v297
      %v856 = vpop.permute.xlu0 %855
      %858 = vset.pattern.permute.xlu0 1
      %859 = vperm.xlu0 %858, %v298
      %v860 = vpop.permute.xlu0 %859
      %862 = vset.pattern.permute.xlu0 1
      %863 = vperm.xlu0 %862, %v299
      %v864 = vpop.permute.xlu0 %863
      %866 = vset.pattern.permute.xlu0 1
      %867 = vperm.xlu0 %866, %v300
      %v868 = vpop.permute.xlu0 %867
      %870 = vset.pattern.permute.xlu0 1
      %871 = vperm.xlu0 %870, %v301
      %v872 = vpop.permute.xlu0 %871
      %874 = vset.pattern.permute.xlu0 1
      %875 = vperm.xlu0 %874, %v302
      %v876 = vpop.permute.xlu0 %875
      %878 = vset.pattern.permute.xlu0 1
      %879 = vperm.xlu0 %878, %v303
      %v880 = vpop.permute.xlu0 %879
      %882 = vset.pattern.permute.xlu0 1
      %883 = vperm.xlu0 %882, %v304
      %v884 = vpop.permute.xlu0 %883
      %886 = vset.pattern.permute.xlu0 1
      %887 = vperm.xlu0 %886, %v305
      %v888 = vpop.permute.xlu0 %887
      %890 = vset.pattern.permute.xlu0 1
      %891 = vperm.xlu0 %890, %v306
      %v892 = vpop.permute.xlu0 %891
      %894 = vset.pattern.permute.xlu0 1
      %895 = vperm.xlu0 %894, %v307
      %v896 = vpop.permute.xlu0 %895
      %898 = vset.pattern.permute.xlu0 1
      %899 = vperm.xlu0 %898, %v308
      %v900 = vpop.permute.xlu0 %899
      %902 = vset.pattern.permute.xlu0 1
      %903 = vperm.xlu0 %902, %v309
      %v904 = vpop.permute.xlu0 %903
      %906 = vset.pattern.permute.xlu0 1
      %907 = vperm.xlu0 %906, %v310
      %v908 = vpop.permute.xlu0 %907
      %910 = vset.pattern.permute.xlu0 1
      %911 = vperm.xlu0 %910, %v311
      %v912 = vpop.permute.xlu0 %911
      %914 = vset.pattern.permute.xlu0 1
      %915 = vperm.xlu0 %914, %v312
      %v916 = vpop.permute.xlu0 %915
      %918 = vset.pattern.permute.xlu0 1
      %919 = vperm.xlu0 %918, %v313
      %v920 = vpop.permute.xlu0 %919
      %922 = vset.pattern.permute.xlu0 1
      %923 = vperm.xlu0 %922, %v314
      %v924 = vpop.permute.xlu0 %923
      %926 = vset.pattern.permute.xlu0 1
      %927 = vperm.xlu0 %926, %v315
      %v928 = vpop.permute.xlu0 %927
      %930 = vset.pattern.permute.xlu0 1
      %931 = vperm.xlu0 %930, %v316
      %v932 = vpop.permute.xlu0 %931
      %934 = vset.pattern.permute.xlu0 1
      %935 = vperm.xlu0 %934, %v317
      %v936 = vpop.permute.xlu0 %935
      %v938 = vlaneseq
      %v939 = vshrl.u32 %v938, 7
      %v940 = vsub.s32 1, %v939
      %v941 = vrot.slane %v282, %v940
      %v942 = vlaneseq
      %v943 = vshrl.u32 %v942, 7
      %v944 = vsub.s32 5, %v943
      %v945 = vrot.slane %v282, %v944
      %v946 = vlaneseq
      %v947 = vshrl.u32 %v946, 7
      %v948 = vsub.s32 1, %v947
      %v949 = vrot.slane %v283, %v948
      %v950 = vlaneseq
      %v951 = vshrl.u32 %v950, 7
      %v952 = vsub.s32 5, %v951
      %v953 = vrot.slane %v283, %v952
      %v954 = vlaneseq
      %v955 = vshrl.u32 %v954, 7
      %v956 = vsub.s32 1, %v955
      %v957 = vrot.slane %v284, %v956
      %v958 = vlaneseq
      %v959 = vshrl.u32 %v958, 7
      %v960 = vsub.s32 5, %v959
      %v961 = vrot.slane %v284, %v960
      %v962 = vlaneseq
      %v963 = vshrl.u32 %v962, 7
      %v964 = vsub.s32 1, %v963
      %v965 = vrot.slane %v285, %v964
      %v966 = vlaneseq
      %v967 = vshrl.u32 %v966, 7
      %v968 = vsub.s32 5, %v967
      %v969 = vrot.slane %v285, %v968
      %v978 = vlaneseq
      %v979 = vshrl.u32 %v978, 7
      %v980 = vsub.s32 1, %v979
      %v981 = vrot.slane %v941, %v980
      %v982 = vlaneseq
      %v983 = vshrl.u32 %v982, 7
      %v984 = vsub.s32 1, %v983
      %v985 = vrot.slane %v945, %v984
      %v986 = vlaneseq
      %v987 = vshrl.u32 %v986, 7
      %v988 = vsub.s32 1, %v987
      %v989 = vrot.slane %v949, %v988
      %v990 = vlaneseq
      %v991 = vshrl.u32 %v990, 7
      %v992 = vsub.s32 1, %v991
      %v993 = vrot.slane %v953, %v992
      %v994 = vlaneseq
      %v995 = vshrl.u32 %v994, 7
      %v996 = vsub.s32 1, %v995
      %v997 = vrot.slane %v957, %v996
      %v998 = vlaneseq
      %v999 = vshrl.u32 %v998, 7
      %v1000 = vsub.s32 1, %v999
      %v1001 = vrot.slane %v961, %v1000
      %v1002 = vlaneseq
      %v1003 = vshrl.u32 %v1002, 7
      %v1004 = vsub.s32 1, %v1003
      %v1005 = vrot.slane %v965, %v1004
      %v1006 = vlaneseq
      %v1007 = vshrl.u32 %v1006, 7
      %v1008 = vsub.s32 1, %v1007
      %v1009 = vrot.slane %v969, %v1008
      %v1010 = vmul.f32 %v812, %v981
      %v1011 = vmul.f32 %v812, %v985
      %v1012 = vmul.f32 %v812, %v989
      %v1013 = vmul.f32 %v812, %v993
      %v1014 = vmul.f32 %v812, %v997
      %v1015 = vmul.f32 %v812, %v1001
      %v1016 = vmul.f32 %v812, %v1005
      %v1017 = vmul.f32 %v812, %v1009
      %v1018 = vmul.f32 %v816, %v981
      %v1019 = vmul.f32 %v816, %v985
      %v1020 = vmul.f32 %v816, %v989
      %v1021 = vmul.f32 %v816, %v993
      %v1022 = vmul.f32 %v816, %v997
      %v1023 = vmul.f32 %v816, %v1001
      %v1024 = vmul.f32 %v816, %v1005
      %v1025 = vmul.f32 %v816, %v1009
      %v1026 = vmul.f32 %v820, %v981
      %v1027 = vmul.f32 %v820, %v985
      %v1028 = vmul.f32 %v820, %v989
      %v1029 = vmul.f32 %v820, %v993
      %v1030 = vmul.f32 %v820, %v997
      %v1031 = vmul.f32 %v820, %v1001
      %v1032 = vmul.f32 %v820, %v1005
      %v1033 = vmul.f32 %v820, %v1009
      %v1034 = vmul.f32 %v824, %v981
      %v1035 = vmul.f32 %v824, %v985
      %v1036 = vmul.f32 %v824, %v989
      %v1037 = vmul.f32 %v824, %v993
      %v1038 = vmul.f32 %v824, %v997
      %v1039 = vmul.f32 %v824, %v1001
      %v1040 = vmul.f32 %v824, %v1005
      %v1041 = vmul.f32 %v824, %v1009
      %v1042 = vmul.f32 %v828, %v981
      %v1043 = vmul.f32 %v828, %v985
      %v1044 = vmul.f32 %v828, %v989
      %v1045 = vmul.f32 %v828, %v993
      %v1046 = vmul.f32 %v828, %v997
      %v1047 = vmul.f32 %v828, %v1001
      %v1048 = vmul.f32 %v828, %v1005
      %v1049 = vmul.f32 %v828, %v1009
      %v1050 = vmul.f32 %v832, %v981
      %v1051 = vmul.f32 %v832, %v985
      %v1052 = vmul.f32 %v832, %v989
      %v1053 = vmul.f32 %v832, %v993
      %v1054 = vmul.f32 %v832, %v997
      %v1055 = vmul.f32 %v832, %v1001
      %v1056 = vmul.f32 %v832, %v1005
      %v1057 = vmul.f32 %v832, %v1009
      %v1058 = vmul.f32 %v836, %v981
      %v1059 = vmul.f32 %v836, %v985
      %v1060 = vmul.f32 %v836, %v989
      %v1061 = vmul.f32 %v836, %v993
      %v1062 = vmul.f32 %v836, %v997
      %v1063 = vmul.f32 %v836, %v1001
      %v1064 = vmul.f32 %v836, %v1005
      %v1065 = vmul.f32 %v836, %v1009
      %v1066 = vmul.f32 %v840, %v981
      %v1067 = vmul.f32 %v840, %v985
      %v1068 = vmul.f32 %v840, %v989
      %v1069 = vmul.f32 %v840, %v993
      %v1070 = vmul.f32 %v840, %v997
      %v1071 = vmul.f32 %v840, %v1001
      %v1072 = vmul.f32 %v840, %v1005
      %v1073 = vmul.f32 %v840, %v1009
      %v1074 = vmul.f32 %v844, %v981
      %v1075 = vmul.f32 %v844, %v985
      %v1076 = vmul.f32 %v844, %v989
      %v1077 = vmul.f32 %v844, %v993
      %v1078 = vmul.f32 %v844, %v997
      %v1079 = vmul.f32 %v844, %v1001
      %v1080 = vmul.f32 %v844, %v1005
      %v1081 = vmul.f32 %v844, %v1009
      %v1082 = vmul.f32 %v848, %v981
      %v1083 = vmul.f32 %v848, %v985
      %v1084 = vmul.f32 %v848, %v989
      %v1085 = vmul.f32 %v848, %v993
      %v1086 = vmul.f32 %v848, %v997
      %v1087 = vmul.f32 %v848, %v1001
      %v1088 = vmul.f32 %v848, %v1005
      %v1089 = vmul.f32 %v848, %v1009
      %v1090 = vmul.f32 %v852, %v981
      %v1091 = vmul.f32 %v852, %v985
      %v1092 = vmul.f32 %v852, %v989
      %v1093 = vmul.f32 %v852, %v993
      %v1094 = vmul.f32 %v852, %v997
      %v1095 = vmul.f32 %v852, %v1001
      %v1096 = vmul.f32 %v852, %v1005
      %v1097 = vmul.f32 %v852, %v1009
      %v1098 = vmul.f32 %v856, %v981
      %v1099 = vmul.f32 %v856, %v985
      %v1100 = vmul.f32 %v856, %v989
      %v1101 = vmul.f32 %v856, %v993
      %v1102 = vmul.f32 %v856, %v997
      %v1103 = vmul.f32 %v856, %v1001
      %v1104 = vmul.f32 %v856, %v1005
      %v1105 = vmul.f32 %v856, %v1009
      %v1106 = vmul.f32 %v860, %v981
      %v1107 = vmul.f32 %v860, %v985
      %v1108 = vmul.f32 %v860, %v989
      %v1109 = vmul.f32 %v860, %v993
      %v1110 = vmul.f32 %v860, %v997
      %v1111 = vmul.f32 %v860, %v1001
      %v1112 = vmul.f32 %v860, %v1005
      %v1113 = vmul.f32 %v860, %v1009
      %v1114 = vmul.f32 %v864, %v981
      %v1115 = vmul.f32 %v864, %v985
      %v1116 = vmul.f32 %v864, %v989
      %v1117 = vmul.f32 %v864, %v993
      %v1118 = vmul.f32 %v864, %v997
      %v1119 = vmul.f32 %v864, %v1001
      %v1120 = vmul.f32 %v864, %v1005
      %v1121 = vmul.f32 %v864, %v1009
      %v1122 = vmul.f32 %v868, %v981
      %v1123 = vmul.f32 %v868, %v985
      %v1124 = vmul.f32 %v868, %v989
      %v1125 = vmul.f32 %v868, %v993
      %v1126 = vmul.f32 %v868, %v997
      %v1127 = vmul.f32 %v868, %v1001
      %v1128 = vmul.f32 %v868, %v1005
      %v1129 = vmul.f32 %v868, %v1009
      %v1130 = vmul.f32 %v872, %v981
      %v1131 = vmul.f32 %v872, %v985
      %v1132 = vmul.f32 %v872, %v989
      %v1133 = vmul.f32 %v872, %v993
      %v1134 = vmul.f32 %v872, %v997
      %v1135 = vmul.f32 %v872, %v1001
      %v1136 = vmul.f32 %v872, %v1005
      %v1137 = vmul.f32 %v872, %v1009
      %v1138 = vmul.f32 %v876, %v981
      %v1139 = vmul.f32 %v876, %v985
      %v1140 = vmul.f32 %v876, %v989
      %v1141 = vmul.f32 %v876, %v993
      %v1142 = vmul.f32 %v876, %v997
      %v1143 = vmul.f32 %v876, %v1001
      %v1144 = vmul.f32 %v876, %v1005
      %v1145 = vmul.f32 %v876, %v1009
      %v1146 = vmul.f32 %v880, %v981
      %v1147 = vmul.f32 %v880, %v985
      %v1148 = vmul.f32 %v880, %v989
      %v1149 = vmul.f32 %v880, %v993
      %v1150 = vmul.f32 %v880, %v997
      %v1151 = vmul.f32 %v880, %v1001
      %v1152 = vmul.f32 %v880, %v1005
      %v1153 = vmul.f32 %v880, %v1009
      %v1154 = vmul.f32 %v884, %v981
      %v1155 = vmul.f32 %v884, %v985
      %v1156 = vmul.f32 %v884, %v989
      %v1157 = vmul.f32 %v884, %v993
      %v1158 = vmul.f32 %v884, %v997
      %v1159 = vmul.f32 %v884, %v1001
      %v1160 = vmul.f32 %v884, %v1005
      %v1161 = vmul.f32 %v884, %v1009
      %v1162 = vmul.f32 %v888, %v981
      %v1163 = vmul.f32 %v888, %v985
      %v1164 = vmul.f32 %v888, %v989
      %v1165 = vmul.f32 %v888, %v993
      %v1166 = vmul.f32 %v888, %v997
      %v1167 = vmul.f32 %v888, %v1001
      %v1168 = vmul.f32 %v888, %v1005
      %v1169 = vmul.f32 %v888, %v1009
      %v1170 = vmul.f32 %v892, %v981
      %v1171 = vmul.f32 %v892, %v985
      %v1172 = vmul.f32 %v892, %v989
      %v1173 = vmul.f32 %v892, %v993
      %v1174 = vmul.f32 %v892, %v997
      %v1175 = vmul.f32 %v892, %v1001
      %v1176 = vmul.f32 %v892, %v1005
      %v1177 = vmul.f32 %v892, %v1009
      %v1178 = vmul.f32 %v896, %v981
      %v1179 = vmul.f32 %v896, %v985
      %v1180 = vmul.f32 %v896, %v989
      %v1181 = vmul.f32 %v896, %v993
      %v1182 = vmul.f32 %v896, %v997
      %v1183 = vmul.f32 %v896, %v1001
      %v1184 = vmul.f32 %v896, %v1005
      %v1185 = vmul.f32 %v896, %v1009
      %v1186 = vmul.f32 %v900, %v981
      %v1187 = vmul.f32 %v900, %v985
      %v1188 = vmul.f32 %v900, %v989
      %v1189 = vmul.f32 %v900, %v993
      %v1190 = vmul.f32 %v900, %v997
      %v1191 = vmul.f32 %v900, %v1001
      %v1192 = vmul.f32 %v900, %v1005
      %v1193 = vmul.f32 %v900, %v1009
      %v1194 = vmul.f32 %v904, %v981
      %v1195 = vmul.f32 %v904, %v985
      %v1196 = vmul.f32 %v904, %v989
      %v1197 = vmul.f32 %v904, %v993
      %v1198 = vmul.f32 %v904, %v997
      %v1199 = vmul.f32 %v904, %v1001
      %v1200 = vmul.f32 %v904, %v1005
      %v1201 = vmul.f32 %v904, %v1009
      %v1202 = vmul.f32 %v908, %v981
      %v1203 = vmul.f32 %v908, %v985
      %v1204 = vmul.f32 %v908, %v989
      %v1205 = vmul.f32 %v908, %v993
      %v1206 = vmul.f32 %v908, %v997
      %v1207 = vmul.f32 %v908, %v1001
      %v1208 = vmul.f32 %v908, %v1005
      %v1209 = vmul.f32 %v908, %v1009
      %v1210 = vmul.f32 %v912, %v981
      %v1211 = vmul.f32 %v912, %v985
      %v1212 = vmul.f32 %v912, %v989
      %v1213 = vmul.f32 %v912, %v993
      %v1214 = vmul.f32 %v912, %v997
      %v1215 = vmul.f32 %v912, %v1001
      %v1216 = vmul.f32 %v912, %v1005
      %v1217 = vmul.f32 %v912, %v1009
      %v1218 = vmul.f32 %v916, %v981
      %v1219 = vmul.f32 %v916, %v985
      %v1220 = vmul.f32 %v916, %v989
      %v1221 = vmul.f32 %v916, %v993
      %v1222 = vmul.f32 %v916, %v997
      %v1223 = vmul.f32 %v916, %v1001
      %v1224 = vmul.f32 %v916, %v1005
      %v1225 = vmul.f32 %v916, %v1009
      %v1226 = vmul.f32 %v920, %v981
      %v1227 = vmul.f32 %v920, %v985
      %v1228 = vmul.f32 %v920, %v989
      %v1229 = vmul.f32 %v920, %v993
      %v1230 = vmul.f32 %v920, %v997
      %v1231 = vmul.f32 %v920, %v1001
      %v1232 = vmul.f32 %v920, %v1005
      %v1233 = vmul.f32 %v920, %v1009
      %v1234 = vmul.f32 %v924, %v981
      %v1235 = vmul.f32 %v924, %v985
      %v1236 = vmul.f32 %v924, %v989
      %v1237 = vmul.f32 %v924, %v993
      %v1238 = vmul.f32 %v924, %v997
      %v1239 = vmul.f32 %v924, %v1001
      %v1240 = vmul.f32 %v924, %v1005
      %v1241 = vmul.f32 %v924, %v1009
      %v1242 = vmul.f32 %v928, %v981
      %v1243 = vmul.f32 %v928, %v985
      %v1244 = vmul.f32 %v928, %v989
      %v1245 = vmul.f32 %v928, %v993
      %v1246 = vmul.f32 %v928, %v997
      %v1247 = vmul.f32 %v928, %v1001
      %v1248 = vmul.f32 %v928, %v1005
      %v1249 = vmul.f32 %v928, %v1009
      %v1250 = vmul.f32 %v932, %v981
      %v1251 = vmul.f32 %v932, %v985
      %v1252 = vmul.f32 %v932, %v989
      %v1253 = vmul.f32 %v932, %v993
      %v1254 = vmul.f32 %v932, %v997
      %v1255 = vmul.f32 %v932, %v1001
      %v1256 = vmul.f32 %v932, %v1005
      %v1257 = vmul.f32 %v932, %v1009
      %v1258 = vmul.f32 %v936, %v981
      %v1259 = vmul.f32 %v936, %v985
      %v1260 = vmul.f32 %v936, %v989
      %v1261 = vmul.f32 %v936, %v993
      %v1262 = vmul.f32 %v936, %v997
      %v1263 = vmul.f32 %v936, %v1001
      %v1264 = vmul.f32 %v936, %v1005
      %v1265 = vmul.f32 %v936, %v1009
      %v1266 = vadd.f32 %v554, %v1010
      %v1267 = vadd.f32 %v555, %v1011
      %v1268 = vadd.f32 %v556, %v1012
      %v1269 = vadd.f32 %v557, %v1013
      %v1270 = vadd.f32 %v558, %v1014
      %v1271 = vadd.f32 %v559, %v1015
      %v1272 = vadd.f32 %v560, %v1016
      %v1273 = vadd.f32 %v561, %v1017
      %v1274 = vadd.f32 %v562, %v1018
      %v1275 = vadd.f32 %v563, %v1019
      %v1276 = vadd.f32 %v564, %v1020
      %v1277 = vadd.f32 %v565, %v1021
      %v1278 = vadd.f32 %v566, %v1022
      %v1279 = vadd.f32 %v567, %v1023
      %v1280 = vadd.f32 %v568, %v1024
      %v1281 = vadd.f32 %v569, %v1025
      %v1282 = vadd.f32 %v570, %v1026
      %v1283 = vadd.f32 %v571, %v1027
      %v1284 = vadd.f32 %v572, %v1028
      %v1285 = vadd.f32 %v573, %v1029
      %v1286 = vadd.f32 %v574, %v1030
      %v1287 = vadd.f32 %v575, %v1031
      %v1288 = vadd.f32 %v576, %v1032
      %v1289 = vadd.f32 %v577, %v1033
      %v1290 = vadd.f32 %v578, %v1034
      %v1291 = vadd.f32 %v579, %v1035
      %v1292 = vadd.f32 %v580, %v1036
      %v1293 = vadd.f32 %v581, %v1037
      %v1294 = vadd.f32 %v582, %v1038
      %v1295 = vadd.f32 %v583, %v1039
      %v1296 = vadd.f32 %v584, %v1040
      %v1297 = vadd.f32 %v585, %v1041
      %v1298 = vadd.f32 %v586, %v1042
      %v1299 = vadd.f32 %v587, %v1043
      %v1300 = vadd.f32 %v588, %v1044
      %v1301 = vadd.f32 %v589, %v1045
      %v1302 = vadd.f32 %v590, %v1046
      %v1303 = vadd.f32 %v591, %v1047
      %v1304 = vadd.f32 %v592, %v1048
      %v1305 = vadd.f32 %v593, %v1049
      %v1306 = vadd.f32 %v594, %v1050
      %v1307 = vadd.f32 %v595, %v1051
      %v1308 = vadd.f32 %v596, %v1052
      %v1309 = vadd.f32 %v597, %v1053
      %v1310 = vadd.f32 %v598, %v1054
      %v1311 = vadd.f32 %v599, %v1055
      %v1312 = vadd.f32 %v600, %v1056
      %v1313 = vadd.f32 %v601, %v1057
      %v1314 = vadd.f32 %v602, %v1058
      %v1315 = vadd.f32 %v603, %v1059
      %v1316 = vadd.f32 %v604, %v1060
      %v1317 = vadd.f32 %v605, %v1061
      %v1318 = vadd.f32 %v606, %v1062
      %v1319 = vadd.f32 %v607, %v1063
      %v1320 = vadd.f32 %v608, %v1064
      %v1321 = vadd.f32 %v609, %v1065
      %v1322 = vadd.f32 %v610, %v1066
      %v1323 = vadd.f32 %v611, %v1067
      %v1324 = vadd.f32 %v612, %v1068
      %v1325 = vadd.f32 %v613, %v1069
      %v1326 = vadd.f32 %v614, %v1070
      %v1327 = vadd.f32 %v615, %v1071
      %v1328 = vadd.f32 %v616, %v1072
      %v1329 = vadd.f32 %v617, %v1073
      %v1330 = vadd.f32 %v618, %v1074
      %v1331 = vadd.f32 %v619, %v1075
      %v1332 = vadd.f32 %v620, %v1076
      %v1333 = vadd.f32 %v621, %v1077
      %v1334 = vadd.f32 %v622, %v1078
      %v1335 = vadd.f32 %v623, %v1079
      %v1336 = vadd.f32 %v624, %v1080
      %v1337 = vadd.f32 %v625, %v1081
      %v1338 = vadd.f32 %v626, %v1082
      %v1339 = vadd.f32 %v627, %v1083
      %v1340 = vadd.f32 %v628, %v1084
      %v1341 = vadd.f32 %v629, %v1085
      %v1342 = vadd.f32 %v630, %v1086
      %v1343 = vadd.f32 %v631, %v1087
      %v1344 = vadd.f32 %v632, %v1088
      %v1345 = vadd.f32 %v633, %v1089
      %v1346 = vadd.f32 %v634, %v1090
      %v1347 = vadd.f32 %v635, %v1091
      %v1348 = vadd.f32 %v636, %v1092
      %v1349 = vadd.f32 %v637, %v1093
      %v1350 = vadd.f32 %v638, %v1094
      %v1351 = vadd.f32 %v639, %v1095
      %v1352 = vadd.f32 %v640, %v1096
      %v1353 = vadd.f32 %v641, %v1097
      %v1354 = vadd.f32 %v642, %v1098
      %v1355 = vadd.f32 %v643, %v1099
      %v1356 = vadd.f32 %v644, %v1100
      %v1357 = vadd.f32 %v645, %v1101
      %v1358 = vadd.f32 %v646, %v1102
      %v1359 = vadd.f32 %v647, %v1103
      %v1360 = vadd.f32 %v648, %v1104
      %v1361 = vadd.f32 %v649, %v1105
      %v1362 = vadd.f32 %v650, %v1106
      %v1363 = vadd.f32 %v651, %v1107
      %v1364 = vadd.f32 %v652, %v1108
      %v1365 = vadd.f32 %v653, %v1109
      %v1366 = vadd.f32 %v654, %v1110
      %v1367 = vadd.f32 %v655, %v1111
      %v1368 = vadd.f32 %v656, %v1112
      %v1369 = vadd.f32 %v657, %v1113
      %v1370 = vadd.f32 %v658, %v1114
      %v1371 = vadd.f32 %v659, %v1115
      %v1372 = vadd.f32 %v660, %v1116
      %v1373 = vadd.f32 %v661, %v1117
      %v1374 = vadd.f32 %v662, %v1118
      %v1375 = vadd.f32 %v663, %v1119
      %v1376 = vadd.f32 %v664, %v1120
      %v1377 = vadd.f32 %v665, %v1121
      %v1378 = vadd.f32 %v666, %v1122
      %v1379 = vadd.f32 %v667, %v1123
      %v1380 = vadd.f32 %v668, %v1124
      %v1381 = vadd.f32 %v669, %v1125
      %v1382 = vadd.f32 %v670, %v1126
      %v1383 = vadd.f32 %v671, %v1127
      %v1384 = vadd.f32 %v672, %v1128
      %v1385 = vadd.f32 %v673, %v1129
      %v1386 = vadd.f32 %v674, %v1130
      %v1387 = vadd.f32 %v675, %v1131
      %v1388 = vadd.f32 %v676, %v1132
      %v1389 = vadd.f32 %v677, %v1133
      %v1390 = vadd.f32 %v678, %v1134
      %v1391 = vadd.f32 %v679, %v1135
      %v1392 = vadd.f32 %v680, %v1136
      %v1393 = vadd.f32 %v681, %v1137
      %v1394 = vadd.f32 %v682, %v1138
      %v1395 = vadd.f32 %v683, %v1139
      %v1396 = vadd.f32 %v684, %v1140
      %v1397 = vadd.f32 %v685, %v1141
      %v1398 = vadd.f32 %v686, %v1142
      %v1399 = vadd.f32 %v687, %v1143
      %v1400 = vadd.f32 %v688, %v1144
      %v1401 = vadd.f32 %v689, %v1145
      %v1402 = vadd.f32 %v690, %v1146
      %v1403 = vadd.f32 %v691, %v1147
      %v1404 = vadd.f32 %v692, %v1148
      %v1405 = vadd.f32 %v693, %v1149
      %v1406 = vadd.f32 %v694, %v1150
      %v1407 = vadd.f32 %v695, %v1151
      %v1408 = vadd.f32 %v696, %v1152
      %v1409 = vadd.f32 %v697, %v1153
      %v1410 = vadd.f32 %v698, %v1154
      %v1411 = vadd.f32 %v699, %v1155
      %v1412 = vadd.f32 %v700, %v1156
      %v1413 = vadd.f32 %v701, %v1157
      %v1414 = vadd.f32 %v702, %v1158
      %v1415 = vadd.f32 %v703, %v1159
      %v1416 = vadd.f32 %v704, %v1160
      %v1417 = vadd.f32 %v705, %v1161
      %v1418 = vadd.f32 %v706, %v1162
      %v1419 = vadd.f32 %v707, %v1163
      %v1420 = vadd.f32 %v708, %v1164
      %v1421 = vadd.f32 %v709, %v1165
      %v1422 = vadd.f32 %v710, %v1166
      %v1423 = vadd.f32 %v711, %v1167
      %v1424 = vadd.f32 %v712, %v1168
      %v1425 = vadd.f32 %v713, %v1169
      %v1426 = vadd.f32 %v714, %v1170
      %v1427 = vadd.f32 %v715, %v1171
      %v1428 = vadd.f32 %v716, %v1172
      %v1429 = vadd.f32 %v717, %v1173
      %v1430 = vadd.f32 %v718, %v1174
      %v1431 = vadd.f32 %v719, %v1175
      %v1432 = vadd.f32 %v720, %v1176
      %v1433 = vadd.f32 %v721, %v1177
      %v1434 = vadd.f32 %v722, %v1178
      %v1435 = vadd.f32 %v723, %v1179
      %v1436 = vadd.f32 %v724, %v1180
      %v1437 = vadd.f32 %v725, %v1181
      %v1438 = vadd.f32 %v726, %v1182
      %v1439 = vadd.f32 %v727, %v1183
      %v1440 = vadd.f32 %v728, %v1184
      %v1441 = vadd.f32 %v729, %v1185
      %v1442 = vadd.f32 %v730, %v1186
      %v1443 = vadd.f32 %v731, %v1187
      %v1444 = vadd.f32 %v732, %v1188
      %v1445 = vadd.f32 %v733, %v1189
      %v1446 = vadd.f32 %v734, %v1190
      %v1447 = vadd.f32 %v735, %v1191
      %v1448 = vadd.f32 %v736, %v1192
      %v1449 = vadd.f32 %v737, %v1193
      %v1450 = vadd.f32 %v738, %v1194
      %v1451 = vadd.f32 %v739, %v1195
      %v1452 = vadd.f32 %v740, %v1196
      %v1453 = vadd.f32 %v741, %v1197
      %v1454 = vadd.f32 %v742, %v1198
      %v1455 = vadd.f32 %v743, %v1199
      %v1456 = vadd.f32 %v744, %v1200
      %v1457 = vadd.f32 %v745, %v1201
      %v1458 = vadd.f32 %v746, %v1202
      %v1459 = vadd.f32 %v747, %v1203
      %v1460 = vadd.f32 %v748, %v1204
      %v1461 = vadd.f32 %v749, %v1205
      %v1462 = vadd.f32 %v750, %v1206
      %v1463 = vadd.f32 %v751, %v1207
      %v1464 = vadd.f32 %v752, %v1208
      %v1465 = vadd.f32 %v753, %v1209
      %v1466 = vadd.f32 %v754, %v1210
      %v1467 = vadd.f32 %v755, %v1211
      %v1468 = vadd.f32 %v756, %v1212
      %v1469 = vadd.f32 %v757, %v1213
      %v1470 = vadd.f32 %v758, %v1214
      %v1471 = vadd.f32 %v759, %v1215
      %v1472 = vadd.f32 %v760, %v1216
      %v1473 = vadd.f32 %v761, %v1217
      %v1474 = vadd.f32 %v762, %v1218
      %v1475 = vadd.f32 %v763, %v1219
      %v1476 = vadd.f32 %v764, %v1220
      %v1477 = vadd.f32 %v765, %v1221
      %v1478 = vadd.f32 %v766, %v1222
      %v1479 = vadd.f32 %v767, %v1223
      %v1480 = vadd.f32 %v768, %v1224
      %v1481 = vadd.f32 %v769, %v1225
      %v1482 = vadd.f32 %v770, %v1226
      %v1483 = vadd.f32 %v771, %v1227
      %v1484 = vadd.f32 %v772, %v1228
      %v1485 = vadd.f32 %v773, %v1229
      %v1486 = vadd.f32 %v774, %v1230
      %v1487 = vadd.f32 %v775, %v1231
      %v1488 = vadd.f32 %v776, %v1232
      %v1489 = vadd.f32 %v777, %v1233
      %v1490 = vadd.f32 %v778, %v1234
      %v1491 = vadd.f32 %v779, %v1235
      %v1492 = vadd.f32 %v780, %v1236
      %v1493 = vadd.f32 %v781, %v1237
      %v1494 = vadd.f32 %v782, %v1238
      %v1495 = vadd.f32 %v783, %v1239
      %v1496 = vadd.f32 %v784, %v1240
      %v1497 = vadd.f32 %v785, %v1241
      %v1498 = vadd.f32 %v786, %v1242
      %v1499 = vadd.f32 %v787, %v1243
      %v1500 = vadd.f32 %v788, %v1244
      %v1501 = vadd.f32 %v789, %v1245
      %v1502 = vadd.f32 %v790, %v1246
      %v1503 = vadd.f32 %v791, %v1247
      %v1504 = vadd.f32 %v792, %v1248
      %v1505 = vadd.f32 %v793, %v1249
      %v1506 = vadd.f32 %v794, %v1250
      %v1507 = vadd.f32 %v795, %v1251
      %v1508 = vadd.f32 %v796, %v1252
      %v1509 = vadd.f32 %v797, %v1253
      %v1510 = vadd.f32 %v798, %v1254
      %v1511 = vadd.f32 %v799, %v1255
      %v1512 = vadd.f32 %v800, %v1256
      %v1513 = vadd.f32 %v801, %v1257
      %v1514 = vadd.f32 %v802, %v1258
      %v1515 = vadd.f32 %v803, %v1259
      %v1516 = vadd.f32 %v804, %v1260
      %v1517 = vadd.f32 %v805, %v1261
      %v1518 = vadd.f32 %v806, %v1262
      %v1519 = vadd.f32 %v807, %v1263
      %v1520 = vadd.f32 %v808, %v1264
      %v1521 = vadd.f32 %v809, %v1265
      %1522 = vset.pattern.permute.xlu0 2
      %1523 = vperm.xlu0 %1522, %v286
      %v1524 = vpop.permute.xlu0 %1523
      %1526 = vset.pattern.permute.xlu0 2
      %1527 = vperm.xlu0 %1526, %v287
      %v1528 = vpop.permute.xlu0 %1527
      %1530 = vset.pattern.permute.xlu0 2
      %1531 = vperm.xlu0 %1530, %v288
      %v1532 = vpop.permute.xlu0 %1531
      %1534 = vset.pattern.permute.xlu0 2
      %1535 = vperm.xlu0 %1534, %v289
      %v1536 = vpop.permute.xlu0 %1535
      %1538 = vset.pattern.permute.xlu0 2
      %1539 = vperm.xlu0 %1538, %v290
      %v1540 = vpop.permute.xlu0 %1539
      %1542 = vset.pattern.permute.xlu0 2
      %1543 = vperm.xlu0 %1542, %v291
      %v1544 = vpop.permute.xlu0 %1543
      %1546 = vset.pattern.permute.xlu0 2
      %1547 = vperm.xlu0 %1546, %v292
      %v1548 = vpop.permute.xlu0 %1547
      %1550 = vset.pattern.permute.xlu0 2
      %1551 = vperm.xlu0 %1550, %v293
      %v1552 = vpop.permute.xlu0 %1551
      %1554 = vset.pattern.permute.xlu0 2
      %1555 = vperm.xlu0 %1554, %v294
      %v1556 = vpop.permute.xlu0 %1555
      %1558 = vset.pattern.permute.xlu0 2
      %1559 = vperm.xlu0 %1558, %v295
      %v1560 = vpop.permute.xlu0 %1559
      %1562 = vset.pattern.permute.xlu0 2
      %1563 = vperm.xlu0 %1562, %v296
      %v1564 = vpop.permute.xlu0 %1563
      %1566 = vset.pattern.permute.xlu0 2
      %1567 = vperm.xlu0 %1566, %v297
      %v1568 = vpop.permute.xlu0 %1567
      %1570 = vset.pattern.permute.xlu0 2
      %1571 = vperm.xlu0 %1570, %v298
      %v1572 = vpop.permute.xlu0 %1571
      %1574 = vset.pattern.permute.xlu0 2
      %1575 = vperm.xlu0 %1574, %v299
      %v1576 = vpop.permute.xlu0 %1575
      %1578 = vset.pattern.permute.xlu0 2
      %1579 = vperm.xlu0 %1578, %v300
      %v1580 = vpop.permute.xlu0 %1579
      %1582 = vset.pattern.permute.xlu0 2
      %1583 = vperm.xlu0 %1582, %v301
      %v1584 = vpop.permute.xlu0 %1583
      %1586 = vset.pattern.permute.xlu0 2
      %1587 = vperm.xlu0 %1586, %v302
      %v1588 = vpop.permute.xlu0 %1587
      %1590 = vset.pattern.permute.xlu0 2
      %1591 = vperm.xlu0 %1590, %v303
      %v1592 = vpop.permute.xlu0 %1591
      %1594 = vset.pattern.permute.xlu0 2
      %1595 = vperm.xlu0 %1594, %v304
      %v1596 = vpop.permute.xlu0 %1595
      %1598 = vset.pattern.permute.xlu0 2
      %1599 = vperm.xlu0 %1598, %v305
      %v1600 = vpop.permute.xlu0 %1599
      %1602 = vset.pattern.permute.xlu0 2
      %1603 = vperm.xlu0 %1602, %v306
      %v1604 = vpop.permute.xlu0 %1603
      %1606 = vset.pattern.permute.xlu0 2
      %1607 = vperm.xlu0 %1606, %v307
      %v1608 = vpop.permute.xlu0 %1607
      %1610 = vset.pattern.permute.xlu0 2
      %1611 = vperm.xlu0 %1610, %v308
      %v1612 = vpop.permute.xlu0 %1611
      %1614 = vset.pattern.permute.xlu0 2
      %1615 = vperm.xlu0 %1614, %v309
      %v1616 = vpop.permute.xlu0 %1615
      %1618 = vset.pattern.permute.xlu0 2
      %1619 = vperm.xlu0 %1618, %v310
      %v1620 = vpop.permute.xlu0 %1619
      %1622 = vset.pattern.permute.xlu0 2
      %1623 = vperm.xlu0 %1622, %v311
      %v1624 = vpop.permute.xlu0 %1623
      %1626 = vset.pattern.permute.xlu0 2
      %1627 = vperm.xlu0 %1626, %v312
      %v1628 = vpop.permute.xlu0 %1627
      %1630 = vset.pattern.permute.xlu0 2
      %1631 = vperm.xlu0 %1630, %v313
      %v1632 = vpop.permute.xlu0 %1631
      %1634 = vset.pattern.permute.xlu0 2
      %1635 = vperm.xlu0 %1634, %v314
      %v1636 = vpop.permute.xlu0 %1635
      %1638 = vset.pattern.permute.xlu0 2
      %1639 = vperm.xlu0 %1638, %v315
      %v1640 = vpop.permute.xlu0 %1639
      %1642 = vset.pattern.permute.xlu0 2
      %1643 = vperm.xlu0 %1642, %v316
      %v1644 = vpop.permute.xlu0 %1643
      %1646 = vset.pattern.permute.xlu0 2
      %1647 = vperm.xlu0 %1646, %v317
      %v1648 = vpop.permute.xlu0 %1647
      %v1650 = vlaneseq
      %v1651 = vshrl.u32 %v1650, 7
      %v1652 = vsub.s32 2, %v1651
      %v1653 = vrot.slane %v282, %v1652
      %v1654 = vlaneseq
      %v1655 = vshrl.u32 %v1654, 7
      %v1656 = vsub.s32 6, %v1655
      %v1657 = vrot.slane %v282, %v1656
      %v1658 = vlaneseq
      %v1659 = vshrl.u32 %v1658, 7
      %v1660 = vsub.s32 2, %v1659
      %v1661 = vrot.slane %v283, %v1660
      %v1662 = vlaneseq
      %v1663 = vshrl.u32 %v1662, 7
      %v1664 = vsub.s32 6, %v1663
      %v1665 = vrot.slane %v283, %v1664
      %v1666 = vlaneseq
      %v1667 = vshrl.u32 %v1666, 7
      %v1668 = vsub.s32 2, %v1667
      %v1669 = vrot.slane %v284, %v1668
      %v1670 = vlaneseq
      %v1671 = vshrl.u32 %v1670, 7
      %v1672 = vsub.s32 6, %v1671
      %v1673 = vrot.slane %v284, %v1672
      %v1674 = vlaneseq
      %v1675 = vshrl.u32 %v1674, 7
      %v1676 = vsub.s32 2, %v1675
      %v1677 = vrot.slane %v285, %v1676
      %v1678 = vlaneseq
      %v1679 = vshrl.u32 %v1678, 7
      %v1680 = vsub.s32 6, %v1679
      %v1681 = vrot.slane %v285, %v1680
      %v1690 = vlaneseq
      %v1691 = vshrl.u32 %v1690, 7
      %v1692 = vsub.s32 2, %v1691
      %v1693 = vrot.slane %v1653, %v1692
      %v1694 = vlaneseq
      %v1695 = vshrl.u32 %v1694, 7
      %v1696 = vsub.s32 2, %v1695
      %v1697 = vrot.slane %v1657, %v1696
      %v1698 = vlaneseq
      %v1699 = vshrl.u32 %v1698, 7
      %v1700 = vsub.s32 2, %v1699
      %v1701 = vrot.slane %v1661, %v1700
      %v1702 = vlaneseq
      %v1703 = vshrl.u32 %v1702, 7
      %v1704 = vsub.s32 2, %v1703
      %v1705 = vrot.slane %v1665, %v1704
      %v1706 = vlaneseq
      %v1707 = vshrl.u32 %v1706, 7
      %v1708 = vsub.s32 2, %v1707
      %v1709 = vrot.slane %v1669, %v1708
      %v1710 = vlaneseq
      %v1711 = vshrl.u32 %v1710, 7
      %v1712 = vsub.s32 2, %v1711
      %v1713 = vrot.slane %v1673, %v1712
      %v1714 = vlaneseq
      %v1715 = vshrl.u32 %v1714, 7
      %v1716 = vsub.s32 2, %v1715
      %v1717 = vrot.slane %v1677, %v1716
      %v1718 = vlaneseq
      %v1719 = vshrl.u32 %v1718, 7
      %v1720 = vsub.s32 2, %v1719
      %v1721 = vrot.slane %v1681, %v1720
      %v1722 = vmul.f32 %v1524, %v1693
      %v1723 = vmul.f32 %v1524, %v1697
      %v1724 = vmul.f32 %v1524, %v1701
      %v1725 = vmul.f32 %v1524, %v1705
      %v1726 = vmul.f32 %v1524, %v1709
      %v1727 = vmul.f32 %v1524, %v1713
      %v1728 = vmul.f32 %v1524, %v1717
      %v1729 = vmul.f32 %v1524, %v1721
      %v1730 = vmul.f32 %v1528, %v1693
      %v1731 = vmul.f32 %v1528, %v1697
      %v1732 = vmul.f32 %v1528, %v1701
      %v1733 = vmul.f32 %v1528, %v1705
      %v1734 = vmul.f32 %v1528, %v1709
      %v1735 = vmul.f32 %v1528, %v1713
      %v1736 = vmul.f32 %v1528, %v1717
      %v1737 = vmul.f32 %v1528, %v1721
      %v1738 = vmul.f32 %v1532, %v1693
      %v1739 = vmul.f32 %v1532, %v1697
      %v1740 = vmul.f32 %v1532, %v1701
      %v1741 = vmul.f32 %v1532, %v1705
      %v1742 = vmul.f32 %v1532, %v1709
      %v1743 = vmul.f32 %v1532, %v1713
      %v1744 = vmul.f32 %v1532, %v1717
      %v1745 = vmul.f32 %v1532, %v1721
      %v1746 = vmul.f32 %v1536, %v1693
      %v1747 = vmul.f32 %v1536, %v1697
      %v1748 = vmul.f32 %v1536, %v1701
      %v1749 = vmul.f32 %v1536, %v1705
      %v1750 = vmul.f32 %v1536, %v1709
      %v1751 = vmul.f32 %v1536, %v1713
      %v1752 = vmul.f32 %v1536, %v1717
      %v1753 = vmul.f32 %v1536, %v1721
      %v1754 = vmul.f32 %v1540, %v1693
      %v1755 = vmul.f32 %v1540, %v1697
      %v1756 = vmul.f32 %v1540, %v1701
      %v1757 = vmul.f32 %v1540, %v1705
      %v1758 = vmul.f32 %v1540, %v1709
      %v1759 = vmul.f32 %v1540, %v1713
      %v1760 = vmul.f32 %v1540, %v1717
      %v1761 = vmul.f32 %v1540, %v1721
      %v1762 = vmul.f32 %v1544, %v1693
      %v1763 = vmul.f32 %v1544, %v1697
      %v1764 = vmul.f32 %v1544, %v1701
      %v1765 = vmul.f32 %v1544, %v1705
      %v1766 = vmul.f32 %v1544, %v1709
      %v1767 = vmul.f32 %v1544, %v1713
      %v1768 = vmul.f32 %v1544, %v1717
      %v1769 = vmul.f32 %v1544, %v1721
      %v1770 = vmul.f32 %v1548, %v1693
      %v1771 = vmul.f32 %v1548, %v1697
      %v1772 = vmul.f32 %v1548, %v1701
      %v1773 = vmul.f32 %v1548, %v1705
      %v1774 = vmul.f32 %v1548, %v1709
      %v1775 = vmul.f32 %v1548, %v1713
      %v1776 = vmul.f32 %v1548, %v1717
      %v1777 = vmul.f32 %v1548, %v1721
      %v1778 = vmul.f32 %v1552, %v1693
      %v1779 = vmul.f32 %v1552, %v1697
      %v1780 = vmul.f32 %v1552, %v1701
      %v1781 = vmul.f32 %v1552, %v1705
      %v1782 = vmul.f32 %v1552, %v1709
      %v1783 = vmul.f32 %v1552, %v1713
      %v1784 = vmul.f32 %v1552, %v1717
      %v1785 = vmul.f32 %v1552, %v1721
      %v1786 = vmul.f32 %v1556, %v1693
      %v1787 = vmul.f32 %v1556, %v1697
      %v1788 = vmul.f32 %v1556, %v1701
      %v1789 = vmul.f32 %v1556, %v1705
      %v1790 = vmul.f32 %v1556, %v1709
      %v1791 = vmul.f32 %v1556, %v1713
      %v1792 = vmul.f32 %v1556, %v1717
      %v1793 = vmul.f32 %v1556, %v1721
      %v1794 = vmul.f32 %v1560, %v1693
      %v1795 = vmul.f32 %v1560, %v1697
      %v1796 = vmul.f32 %v1560, %v1701
      %v1797 = vmul.f32 %v1560, %v1705
      %v1798 = vmul.f32 %v1560, %v1709
      %v1799 = vmul.f32 %v1560, %v1713
      %v1800 = vmul.f32 %v1560, %v1717
      %v1801 = vmul.f32 %v1560, %v1721
      %v1802 = vmul.f32 %v1564, %v1693
      %v1803 = vmul.f32 %v1564, %v1697
      %v1804 = vmul.f32 %v1564, %v1701
      %v1805 = vmul.f32 %v1564, %v1705
      %v1806 = vmul.f32 %v1564, %v1709
      %v1807 = vmul.f32 %v1564, %v1713
      %v1808 = vmul.f32 %v1564, %v1717
      %v1809 = vmul.f32 %v1564, %v1721
      %v1810 = vmul.f32 %v1568, %v1693
      %v1811 = vmul.f32 %v1568, %v1697
      %v1812 = vmul.f32 %v1568, %v1701
      %v1813 = vmul.f32 %v1568, %v1705
      %v1814 = vmul.f32 %v1568, %v1709
      %v1815 = vmul.f32 %v1568, %v1713
      %v1816 = vmul.f32 %v1568, %v1717
      %v1817 = vmul.f32 %v1568, %v1721
      %v1818 = vmul.f32 %v1572, %v1693
      %v1819 = vmul.f32 %v1572, %v1697
      %v1820 = vmul.f32 %v1572, %v1701
      %v1821 = vmul.f32 %v1572, %v1705
      %v1822 = vmul.f32 %v1572, %v1709
      %v1823 = vmul.f32 %v1572, %v1713
      %v1824 = vmul.f32 %v1572, %v1717
      %v1825 = vmul.f32 %v1572, %v1721
      %v1826 = vmul.f32 %v1576, %v1693
      %v1827 = vmul.f32 %v1576, %v1697
      %v1828 = vmul.f32 %v1576, %v1701
      %v1829 = vmul.f32 %v1576, %v1705
      %v1830 = vmul.f32 %v1576, %v1709
      %v1831 = vmul.f32 %v1576, %v1713
      %v1832 = vmul.f32 %v1576, %v1717
      %v1833 = vmul.f32 %v1576, %v1721
      %v1834 = vmul.f32 %v1580, %v1693
      %v1835 = vmul.f32 %v1580, %v1697
      %v1836 = vmul.f32 %v1580, %v1701
      %v1837 = vmul.f32 %v1580, %v1705
      %v1838 = vmul.f32 %v1580, %v1709
      %v1839 = vmul.f32 %v1580, %v1713
      %v1840 = vmul.f32 %v1580, %v1717
      %v1841 = vmul.f32 %v1580, %v1721
      %v1842 = vmul.f32 %v1584, %v1693
      %v1843 = vmul.f32 %v1584, %v1697
      %v1844 = vmul.f32 %v1584, %v1701
      %v1845 = vmul.f32 %v1584, %v1705
      %v1846 = vmul.f32 %v1584, %v1709
      %v1847 = vmul.f32 %v1584, %v1713
      %v1848 = vmul.f32 %v1584, %v1717
      %v1849 = vmul.f32 %v1584, %v1721
      %v1850 = vmul.f32 %v1588, %v1693
      %v1851 = vmul.f32 %v1588, %v1697
      %v1852 = vmul.f32 %v1588, %v1701
      %v1853 = vmul.f32 %v1588, %v1705
      %v1854 = vmul.f32 %v1588, %v1709
      %v1855 = vmul.f32 %v1588, %v1713
      %v1856 = vmul.f32 %v1588, %v1717
      %v1857 = vmul.f32 %v1588, %v1721
      %v1858 = vmul.f32 %v1592, %v1693
      %v1859 = vmul.f32 %v1592, %v1697
      %v1860 = vmul.f32 %v1592, %v1701
      %v1861 = vmul.f32 %v1592, %v1705
      %v1862 = vmul.f32 %v1592, %v1709
      %v1863 = vmul.f32 %v1592, %v1713
      %v1864 = vmul.f32 %v1592, %v1717
      %v1865 = vmul.f32 %v1592, %v1721
      %v1866 = vmul.f32 %v1596, %v1693
      %v1867 = vmul.f32 %v1596, %v1697
      %v1868 = vmul.f32 %v1596, %v1701
      %v1869 = vmul.f32 %v1596, %v1705
      %v1870 = vmul.f32 %v1596, %v1709
      %v1871 = vmul.f32 %v1596, %v1713
      %v1872 = vmul.f32 %v1596, %v1717
      %v1873 = vmul.f32 %v1596, %v1721
      %v1874 = vmul.f32 %v1600, %v1693
      %v1875 = vmul.f32 %v1600, %v1697
      %v1876 = vmul.f32 %v1600, %v1701
      %v1877 = vmul.f32 %v1600, %v1705
      %v1878 = vmul.f32 %v1600, %v1709
      %v1879 = vmul.f32 %v1600, %v1713
      %v1880 = vmul.f32 %v1600, %v1717
      %v1881 = vmul.f32 %v1600, %v1721
      %v1882 = vmul.f32 %v1604, %v1693
      %v1883 = vmul.f32 %v1604, %v1697
      %v1884 = vmul.f32 %v1604, %v1701
      %v1885 = vmul.f32 %v1604, %v1705
      %v1886 = vmul.f32 %v1604, %v1709
      %v1887 = vmul.f32 %v1604, %v1713
      %v1888 = vmul.f32 %v1604, %v1717
      %v1889 = vmul.f32 %v1604, %v1721
      %v1890 = vmul.f32 %v1608, %v1693
      %v1891 = vmul.f32 %v1608, %v1697
      %v1892 = vmul.f32 %v1608, %v1701
      %v1893 = vmul.f32 %v1608, %v1705
      %v1894 = vmul.f32 %v1608, %v1709
      %v1895 = vmul.f32 %v1608, %v1713
      %v1896 = vmul.f32 %v1608, %v1717
      %v1897 = vmul.f32 %v1608, %v1721
      %v1898 = vmul.f32 %v1612, %v1693
      %v1899 = vmul.f32 %v1612, %v1697
      %v1900 = vmul.f32 %v1612, %v1701
      %v1901 = vmul.f32 %v1612, %v1705
      %v1902 = vmul.f32 %v1612, %v1709
      %v1903 = vmul.f32 %v1612, %v1713
      %v1904 = vmul.f32 %v1612, %v1717
      %v1905 = vmul.f32 %v1612, %v1721
      %v1906 = vmul.f32 %v1616, %v1693
      %v1907 = vmul.f32 %v1616, %v1697
      %v1908 = vmul.f32 %v1616, %v1701
      %v1909 = vmul.f32 %v1616, %v1705
      %v1910 = vmul.f32 %v1616, %v1709
      %v1911 = vmul.f32 %v1616, %v1713
      %v1912 = vmul.f32 %v1616, %v1717
      %v1913 = vmul.f32 %v1616, %v1721
      %v1914 = vmul.f32 %v1620, %v1693
      %v1915 = vmul.f32 %v1620, %v1697
      %v1916 = vmul.f32 %v1620, %v1701
      %v1917 = vmul.f32 %v1620, %v1705
      %v1918 = vmul.f32 %v1620, %v1709
      %v1919 = vmul.f32 %v1620, %v1713
      %v1920 = vmul.f32 %v1620, %v1717
      %v1921 = vmul.f32 %v1620, %v1721
      %v1922 = vmul.f32 %v1624, %v1693
      %v1923 = vmul.f32 %v1624, %v1697
      %v1924 = vmul.f32 %v1624, %v1701
      %v1925 = vmul.f32 %v1624, %v1705
      %v1926 = vmul.f32 %v1624, %v1709
      %v1927 = vmul.f32 %v1624, %v1713
      %v1928 = vmul.f32 %v1624, %v1717
      %v1929 = vmul.f32 %v1624, %v1721
      %v1930 = vmul.f32 %v1628, %v1693
      %v1931 = vmul.f32 %v1628, %v1697
      %v1932 = vmul.f32 %v1628, %v1701
      %v1933 = vmul.f32 %v1628, %v1705
      %v1934 = vmul.f32 %v1628, %v1709
      %v1935 = vmul.f32 %v1628, %v1713
      %v1936 = vmul.f32 %v1628, %v1717
      %v1937 = vmul.f32 %v1628, %v1721
      %v1938 = vmul.f32 %v1632, %v1693
      %v1939 = vmul.f32 %v1632, %v1697
      %v1940 = vmul.f32 %v1632, %v1701
      %v1941 = vmul.f32 %v1632, %v1705
      %v1942 = vmul.f32 %v1632, %v1709
      %v1943 = vmul.f32 %v1632, %v1713
      %v1944 = vmul.f32 %v1632, %v1717
      %v1945 = vmul.f32 %v1632, %v1721
      %v1946 = vmul.f32 %v1636, %v1693
      %v1947 = vmul.f32 %v1636, %v1697
      %v1948 = vmul.f32 %v1636, %v1701
      %v1949 = vmul.f32 %v1636, %v1705
      %v1950 = vmul.f32 %v1636, %v1709
      %v1951 = vmul.f32 %v1636, %v1713
      %v1952 = vmul.f32 %v1636, %v1717
      %v1953 = vmul.f32 %v1636, %v1721
      %v1954 = vmul.f32 %v1640, %v1693
      %v1955 = vmul.f32 %v1640, %v1697
      %v1956 = vmul.f32 %v1640, %v1701
      %v1957 = vmul.f32 %v1640, %v1705
      %v1958 = vmul.f32 %v1640, %v1709
      %v1959 = vmul.f32 %v1640, %v1713
      %v1960 = vmul.f32 %v1640, %v1717
      %v1961 = vmul.f32 %v1640, %v1721
      %v1962 = vmul.f32 %v1644, %v1693
      %v1963 = vmul.f32 %v1644, %v1697
      %v1964 = vmul.f32 %v1644, %v1701
      %v1965 = vmul.f32 %v1644, %v1705
      %v1966 = vmul.f32 %v1644, %v1709
      %v1967 = vmul.f32 %v1644, %v1713
      %v1968 = vmul.f32 %v1644, %v1717
      %v1969 = vmul.f32 %v1644, %v1721
      %v1970 = vmul.f32 %v1648, %v1693
      %v1971 = vmul.f32 %v1648, %v1697
      %v1972 = vmul.f32 %v1648, %v1701
      %v1973 = vmul.f32 %v1648, %v1705
      %v1974 = vmul.f32 %v1648, %v1709
      %v1975 = vmul.f32 %v1648, %v1713
      %v1976 = vmul.f32 %v1648, %v1717
      %v1977 = vmul.f32 %v1648, %v1721
      %v1978 = vadd.f32 %v1266, %v1722
      %v1979 = vadd.f32 %v1267, %v1723
      %v1980 = vadd.f32 %v1268, %v1724
      %v1981 = vadd.f32 %v1269, %v1725
      %v1982 = vadd.f32 %v1270, %v1726
      %v1983 = vadd.f32 %v1271, %v1727
      %v1984 = vadd.f32 %v1272, %v1728
      %v1985 = vadd.f32 %v1273, %v1729
      %v1986 = vadd.f32 %v1274, %v1730
      %v1987 = vadd.f32 %v1275, %v1731
      %v1988 = vadd.f32 %v1276, %v1732
      %v1989 = vadd.f32 %v1277, %v1733
      %v1990 = vadd.f32 %v1278, %v1734
      %v1991 = vadd.f32 %v1279, %v1735
      %v1992 = vadd.f32 %v1280, %v1736
      %v1993 = vadd.f32 %v1281, %v1737
      %v1994 = vadd.f32 %v1282, %v1738
      %v1995 = vadd.f32 %v1283, %v1739
      %v1996 = vadd.f32 %v1284, %v1740
      %v1997 = vadd.f32 %v1285, %v1741
      %v1998 = vadd.f32 %v1286, %v1742
      %v1999 = vadd.f32 %v1287, %v1743
      %v2000 = vadd.f32 %v1288, %v1744
      %v2001 = vadd.f32 %v1289, %v1745
      %v2002 = vadd.f32 %v1290, %v1746
      %v2003 = vadd.f32 %v1291, %v1747
      %v2004 = vadd.f32 %v1292, %v1748
      %v2005 = vadd.f32 %v1293, %v1749
      %v2006 = vadd.f32 %v1294, %v1750
      %v2007 = vadd.f32 %v1295, %v1751
      %v2008 = vadd.f32 %v1296, %v1752
      %v2009 = vadd.f32 %v1297, %v1753
      %v2010 = vadd.f32 %v1298, %v1754
      %v2011 = vadd.f32 %v1299, %v1755
      %v2012 = vadd.f32 %v1300, %v1756
      %v2013 = vadd.f32 %v1301, %v1757
      %v2014 = vadd.f32 %v1302, %v1758
      %v2015 = vadd.f32 %v1303, %v1759
      %v2016 = vadd.f32 %v1304, %v1760
      %v2017 = vadd.f32 %v1305, %v1761
      %v2018 = vadd.f32 %v1306, %v1762
      %v2019 = vadd.f32 %v1307, %v1763
      %v2020 = vadd.f32 %v1308, %v1764
      %v2021 = vadd.f32 %v1309, %v1765
      %v2022 = vadd.f32 %v1310, %v1766
      %v2023 = vadd.f32 %v1311, %v1767
      %v2024 = vadd.f32 %v1312, %v1768
      %v2025 = vadd.f32 %v1313, %v1769
      %v2026 = vadd.f32 %v1314, %v1770
      %v2027 = vadd.f32 %v1315, %v1771
      %v2028 = vadd.f32 %v1316, %v1772
      %v2029 = vadd.f32 %v1317, %v1773
      %v2030 = vadd.f32 %v1318, %v1774
      %v2031 = vadd.f32 %v1319, %v1775
      %v2032 = vadd.f32 %v1320, %v1776
      %v2033 = vadd.f32 %v1321, %v1777
      %v2034 = vadd.f32 %v1322, %v1778
      %v2035 = vadd.f32 %v1323, %v1779
      %v2036 = vadd.f32 %v1324, %v1780
      %v2037 = vadd.f32 %v1325, %v1781
      %v2038 = vadd.f32 %v1326, %v1782
      %v2039 = vadd.f32 %v1327, %v1783
      %v2040 = vadd.f32 %v1328, %v1784
      %v2041 = vadd.f32 %v1329, %v1785
      %v2042 = vadd.f32 %v1330, %v1786
      %v2043 = vadd.f32 %v1331, %v1787
      %v2044 = vadd.f32 %v1332, %v1788
      %v2045 = vadd.f32 %v1333, %v1789
      %v2046 = vadd.f32 %v1334, %v1790
      %v2047 = vadd.f32 %v1335, %v1791
      %v2048 = vadd.f32 %v1336, %v1792
      %v2049 = vadd.f32 %v1337, %v1793
      %v2050 = vadd.f32 %v1338, %v1794
      %v2051 = vadd.f32 %v1339, %v1795
      %v2052 = vadd.f32 %v1340, %v1796
      %v2053 = vadd.f32 %v1341, %v1797
      %v2054 = vadd.f32 %v1342, %v1798
      %v2055 = vadd.f32 %v1343, %v1799
      %v2056 = vadd.f32 %v1344, %v1800
      %v2057 = vadd.f32 %v1345, %v1801
      %v2058 = vadd.f32 %v1346, %v1802
      %v2059 = vadd.f32 %v1347, %v1803
      %v2060 = vadd.f32 %v1348, %v1804
      %v2061 = vadd.f32 %v1349, %v1805
      %v2062 = vadd.f32 %v1350, %v1806
      %v2063 = vadd.f32 %v1351, %v1807
      %v2064 = vadd.f32 %v1352, %v1808
      %v2065 = vadd.f32 %v1353, %v1809
      %v2066 = vadd.f32 %v1354, %v1810
      %v2067 = vadd.f32 %v1355, %v1811
      %v2068 = vadd.f32 %v1356, %v1812
      %v2069 = vadd.f32 %v1357, %v1813
      %v2070 = vadd.f32 %v1358, %v1814
      %v2071 = vadd.f32 %v1359, %v1815
      %v2072 = vadd.f32 %v1360, %v1816
      %v2073 = vadd.f32 %v1361, %v1817
      %v2074 = vadd.f32 %v1362, %v1818
      %v2075 = vadd.f32 %v1363, %v1819
      %v2076 = vadd.f32 %v1364, %v1820
      %v2077 = vadd.f32 %v1365, %v1821
      %v2078 = vadd.f32 %v1366, %v1822
      %v2079 = vadd.f32 %v1367, %v1823
      %v2080 = vadd.f32 %v1368, %v1824
      %v2081 = vadd.f32 %v1369, %v1825
      %v2082 = vadd.f32 %v1370, %v1826
      %v2083 = vadd.f32 %v1371, %v1827
      %v2084 = vadd.f32 %v1372, %v1828
      %v2085 = vadd.f32 %v1373, %v1829
      %v2086 = vadd.f32 %v1374, %v1830
      %v2087 = vadd.f32 %v1375, %v1831
      %v2088 = vadd.f32 %v1376, %v1832
      %v2089 = vadd.f32 %v1377, %v1833
      %v2090 = vadd.f32 %v1378, %v1834
      %v2091 = vadd.f32 %v1379, %v1835
      %v2092 = vadd.f32 %v1380, %v1836
      %v2093 = vadd.f32 %v1381, %v1837
      %v2094 = vadd.f32 %v1382, %v1838
      %v2095 = vadd.f32 %v1383, %v1839
      %v2096 = vadd.f32 %v1384, %v1840
      %v2097 = vadd.f32 %v1385, %v1841
      %v2098 = vadd.f32 %v1386, %v1842
      %v2099 = vadd.f32 %v1387, %v1843
      %v2100 = vadd.f32 %v1388, %v1844
      %v2101 = vadd.f32 %v1389, %v1845
      %v2102 = vadd.f32 %v1390, %v1846
      %v2103 = vadd.f32 %v1391, %v1847
      %v2104 = vadd.f32 %v1392, %v1848
      %v2105 = vadd.f32 %v1393, %v1849
      %v2106 = vadd.f32 %v1394, %v1850
      %v2107 = vadd.f32 %v1395, %v1851
      %v2108 = vadd.f32 %v1396, %v1852
      %v2109 = vadd.f32 %v1397, %v1853
      %v2110 = vadd.f32 %v1398, %v1854
      %v2111 = vadd.f32 %v1399, %v1855
      %v2112 = vadd.f32 %v1400, %v1856
      %v2113 = vadd.f32 %v1401, %v1857
      %v2114 = vadd.f32 %v1402, %v1858
      %v2115 = vadd.f32 %v1403, %v1859
      %v2116 = vadd.f32 %v1404, %v1860
      %v2117 = vadd.f32 %v1405, %v1861
      %v2118 = vadd.f32 %v1406, %v1862
      %v2119 = vadd.f32 %v1407, %v1863
      %v2120 = vadd.f32 %v1408, %v1864
      %v2121 = vadd.f32 %v1409, %v1865
      %v2122 = vadd.f32 %v1410, %v1866
      %v2123 = vadd.f32 %v1411, %v1867
      %v2124 = vadd.f32 %v1412, %v1868
      %v2125 = vadd.f32 %v1413, %v1869
      %v2126 = vadd.f32 %v1414, %v1870
      %v2127 = vadd.f32 %v1415, %v1871
      %v2128 = vadd.f32 %v1416, %v1872
      %v2129 = vadd.f32 %v1417, %v1873
      %v2130 = vadd.f32 %v1418, %v1874
      %v2131 = vadd.f32 %v1419, %v1875
      %v2132 = vadd.f32 %v1420, %v1876
      %v2133 = vadd.f32 %v1421, %v1877
      %v2134 = vadd.f32 %v1422, %v1878
      %v2135 = vadd.f32 %v1423, %v1879
      %v2136 = vadd.f32 %v1424, %v1880
      %v2137 = vadd.f32 %v1425, %v1881
      %v2138 = vadd.f32 %v1426, %v1882
      %v2139 = vadd.f32 %v1427, %v1883
      %v2140 = vadd.f32 %v1428, %v1884
      %v2141 = vadd.f32 %v1429, %v1885
      %v2142 = vadd.f32 %v1430, %v1886
      %v2143 = vadd.f32 %v1431, %v1887
      %v2144 = vadd.f32 %v1432, %v1888
      %v2145 = vadd.f32 %v1433, %v1889
      %v2146 = vadd.f32 %v1434, %v1890
      %v2147 = vadd.f32 %v1435, %v1891
      %v2148 = vadd.f32 %v1436, %v1892
      %v2149 = vadd.f32 %v1437, %v1893
      %v2150 = vadd.f32 %v1438, %v1894
      %v2151 = vadd.f32 %v1439, %v1895
      %v2152 = vadd.f32 %v1440, %v1896
      %v2153 = vadd.f32 %v1441, %v1897
      %v2154 = vadd.f32 %v1442, %v1898
      %v2155 = vadd.f32 %v1443, %v1899
      %v2156 = vadd.f32 %v1444, %v1900
      %v2157 = vadd.f32 %v1445, %v1901
      %v2158 = vadd.f32 %v1446, %v1902
      %v2159 = vadd.f32 %v1447, %v1903
      %v2160 = vadd.f32 %v1448, %v1904
      %v2161 = vadd.f32 %v1449, %v1905
      %v2162 = vadd.f32 %v1450, %v1906
      %v2163 = vadd.f32 %v1451, %v1907
      %v2164 = vadd.f32 %v1452, %v1908
      %v2165 = vadd.f32 %v1453, %v1909
      %v2166 = vadd.f32 %v1454, %v1910
      %v2167 = vadd.f32 %v1455, %v1911
      %v2168 = vadd.f32 %v1456, %v1912
      %v2169 = vadd.f32 %v1457, %v1913
      %v2170 = vadd.f32 %v1458, %v1914
      %v2171 = vadd.f32 %v1459, %v1915
      %v2172 = vadd.f32 %v1460, %v1916
      %v2173 = vadd.f32 %v1461, %v1917
      %v2174 = vadd.f32 %v1462, %v1918
      %v2175 = vadd.f32 %v1463, %v1919
      %v2176 = vadd.f32 %v1464, %v1920
      %v2177 = vadd.f32 %v1465, %v1921
      %v2178 = vadd.f32 %v1466, %v1922
      %v2179 = vadd.f32 %v1467, %v1923
      %v2180 = vadd.f32 %v1468, %v1924
      %v2181 = vadd.f32 %v1469, %v1925
      %v2182 = vadd.f32 %v1470, %v1926
      %v2183 = vadd.f32 %v1471, %v1927
      %v2184 = vadd.f32 %v1472, %v1928
      %v2185 = vadd.f32 %v1473, %v1929
      %v2186 = vadd.f32 %v1474, %v1930
      %v2187 = vadd.f32 %v1475, %v1931
      %v2188 = vadd.f32 %v1476, %v1932
      %v2189 = vadd.f32 %v1477, %v1933
      %v2190 = vadd.f32 %v1478, %v1934
      %v2191 = vadd.f32 %v1479, %v1935
      %v2192 = vadd.f32 %v1480, %v1936
      %v2193 = vadd.f32 %v1481, %v1937
      %v2194 = vadd.f32 %v1482, %v1938
      %v2195 = vadd.f32 %v1483, %v1939
      %v2196 = vadd.f32 %v1484, %v1940
      %v2197 = vadd.f32 %v1485, %v1941
      %v2198 = vadd.f32 %v1486, %v1942
      %v2199 = vadd.f32 %v1487, %v1943
      %v2200 = vadd.f32 %v1488, %v1944
      %v2201 = vadd.f32 %v1489, %v1945
      %v2202 = vadd.f32 %v1490, %v1946
      %v2203 = vadd.f32 %v1491, %v1947
      %v2204 = vadd.f32 %v1492, %v1948
      %v2205 = vadd.f32 %v1493, %v1949
      %v2206 = vadd.f32 %v1494, %v1950
      %v2207 = vadd.f32 %v1495, %v1951
      %v2208 = vadd.f32 %v1496, %v1952
      %v2209 = vadd.f32 %v1497, %v1953
      %v2210 = vadd.f32 %v1498, %v1954
      %v2211 = vadd.f32 %v1499, %v1955
      %v2212 = vadd.f32 %v1500, %v1956
      %v2213 = vadd.f32 %v1501, %v1957
      %v2214 = vadd.f32 %v1502, %v1958
      %v2215 = vadd.f32 %v1503, %v1959
      %v2216 = vadd.f32 %v1504, %v1960
      %v2217 = vadd.f32 %v1505, %v1961
      %v2218 = vadd.f32 %v1506, %v1962
      %v2219 = vadd.f32 %v1507, %v1963
      %v2220 = vadd.f32 %v1508, %v1964
      %v2221 = vadd.f32 %v1509, %v1965
      %v2222 = vadd.f32 %v1510, %v1966
      %v2223 = vadd.f32 %v1511, %v1967
      %v2224 = vadd.f32 %v1512, %v1968
      %v2225 = vadd.f32 %v1513, %v1969
      %v2226 = vadd.f32 %v1514, %v1970
      %v2227 = vadd.f32 %v1515, %v1971
      %v2228 = vadd.f32 %v1516, %v1972
      %v2229 = vadd.f32 %v1517, %v1973
      %v2230 = vadd.f32 %v1518, %v1974
      %v2231 = vadd.f32 %v1519, %v1975
      %v2232 = vadd.f32 %v1520, %v1976
      %v2233 = vadd.f32 %v1521, %v1977
      %v2234 = vld [vmem:[%s2] sm:$0xff]
      %v2235 = vld [vmem:[%s2 + $0x8] sm:$0xff]
      %v2236 = vld [vmem:[%s2 + $0x10] sm:$0xff]
      %v2237 = vld [vmem:[%s2 + $0x18] sm:$0xff]
      %v2238 = vld [vmem:[%s2 + $0x20] sm:$0xff]
      %v2239 = vld [vmem:[%s2 + $0x28] sm:$0xff]
      %v2240 = vld [vmem:[%s2 + $0x30] sm:$0xff]
      %v2241 = vld [vmem:[%s2 + $0x38] sm:$0xff]
      %v2242 = vld [vmem:[%s2 + $0x40] sm:$0xff]
      %v2243 = vld [vmem:[%s2 + $0x48] sm:$0xff]
      %v2244 = vld [vmem:[%s2 + $0x50] sm:$0xff]
      %v2245 = vld [vmem:[%s2 + $0x58] sm:$0xff]
      %v2246 = vld [vmem:[%s2 + $0x60] sm:$0xff]
      %v2247 = vld [vmem:[%s2 + $0x68] sm:$0xff]
      %v2248 = vld [vmem:[%s2 + $0x70] sm:$0xff]
      %v2249 = vld [vmem:[%s2 + $0x78] sm:$0xff]
      %v2250 = vld [vmem:[%s2 + $0x80] sm:$0xff]
      %v2251 = vld [vmem:[%s2 + $0x88] sm:$0xff]
      %v2252 = vld [vmem:[%s2 + $0x90] sm:$0xff]
      %v2253 = vld [vmem:[%s2 + $0x98] sm:$0xff]
      %v2254 = vld [vmem:[%s2 + $0xa0] sm:$0xff]
      %v2255 = vld [vmem:[%s2 + $0xa8] sm:$0xff]
      %v2256 = vld [vmem:[%s2 + $0xb0] sm:$0xff]
      %v2257 = vld [vmem:[%s2 + $0xb8] sm:$0xff]
      %v2258 = vld [vmem:[%s2 + $0xc0] sm:$0xff]
      %v2259 = vld [vmem:[%s2 + $0xc8] sm:$0xff]
      %v2260 = vld [vmem:[%s2 + $0xd0] sm:$0xff]
      %v2261 = vld [vmem:[%s2 + $0xd8] sm:$0xff]
      %v2262 = vld [vmem:[%s2 + $0xe0] sm:$0xff]
      %v2263 = vld [vmem:[%s2 + $0xe8] sm:$0xff]
      %v2264 = vld [vmem:[%s2 + $0xf0] sm:$0xff]
      %v2265 = vld [vmem:[%s2 + $0xf8] sm:$0xff]
      %2267 = vset.pattern.permute.xlu0 0
      %2268 = vperm.xlu0 %2267, %v2234
      %v2269 = vpop.permute.xlu0 %2268
      %2272 = vset.pattern.permute.xlu0 0
      %2273 = vperm.xlu0 %2272, %v2235
      %v2274 = vpop.permute.xlu0 %2273
      %2277 = vset.pattern.permute.xlu0 0
      %2278 = vperm.xlu0 %2277, %v2236
      %v2279 = vpop.permute.xlu0 %2278
      %2282 = vset.pattern.permute.xlu0 0
      %2283 = vperm.xlu0 %2282, %v2237
      %v2284 = vpop.permute.xlu0 %2283
      %2287 = vset.pattern.permute.xlu0 0
      %2288 = vperm.xlu0 %2287, %v2238
      %v2289 = vpop.permute.xlu0 %2288
      %2292 = vset.pattern.permute.xlu0 0
      %2293 = vperm.xlu0 %2292, %v2239
      %v2294 = vpop.permute.xlu0 %2293
      %2297 = vset.pattern.permute.xlu0 0
      %2298 = vperm.xlu0 %2297, %v2240
      %v2299 = vpop.permute.xlu0 %2298
      %2302 = vset.pattern.permute.xlu0 0
      %2303 = vperm.xlu0 %2302, %v2241
      %v2304 = vpop.permute.xlu0 %2303
      %2307 = vset.pattern.permute.xlu0 0
      %2308 = vperm.xlu0 %2307, %v2242
      %v2309 = vpop.permute.xlu0 %2308
      %2312 = vset.pattern.permute.xlu0 0
      %2313 = vperm.xlu0 %2312, %v2243
      %v2314 = vpop.permute.xlu0 %2313
      %2317 = vset.pattern.permute.xlu0 0
      %2318 = vperm.xlu0 %2317, %v2244
      %v2319 = vpop.permute.xlu0 %2318
      %2322 = vset.pattern.permute.xlu0 0
      %2323 = vperm.xlu0 %2322, %v2245
      %v2324 = vpop.permute.xlu0 %2323
      %2327 = vset.pattern.permute.xlu0 0
      %2328 = vperm.xlu0 %2327, %v2246
      %v2329 = vpop.permute.xlu0 %2328
      %2332 = vset.pattern.permute.xlu0 0
      %2333 = vperm.xlu0 %2332, %v2247
      %v2334 = vpop.permute.xlu0 %2333
      %2337 = vset.pattern.permute.xlu0 0
      %2338 = vperm.xlu0 %2337, %v2248
      %v2339 = vpop.permute.xlu0 %2338
      %2342 = vset.pattern.permute.xlu0 0
      %2343 = vperm.xlu0 %2342, %v2249
      %v2344 = vpop.permute.xlu0 %2343
      %2347 = vset.pattern.permute.xlu0 0
      %2348 = vperm.xlu0 %2347, %v2250
      %v2349 = vpop.permute.xlu0 %2348
      %2352 = vset.pattern.permute.xlu0 0
      %2353 = vperm.xlu0 %2352, %v2251
      %v2354 = vpop.permute.xlu0 %2353
      %2357 = vset.pattern.permute.xlu0 0
      %2358 = vperm.xlu0 %2357, %v2252
      %v2359 = vpop.permute.xlu0 %2358
      %2362 = vset.pattern.permute.xlu0 0
      %2363 = vperm.xlu0 %2362, %v2253
      %v2364 = vpop.permute.xlu0 %2363
      %2367 = vset.pattern.permute.xlu0 0
      %2368 = vperm.xlu0 %2367, %v2254
      %v2369 = vpop.permute.xlu0 %2368
      %2372 = vset.pattern.permute.xlu0 0
      %2373 = vperm.xlu0 %2372, %v2255
      %v2374 = vpop.permute.xlu0 %2373
      %2377 = vset.pattern.permute.xlu0 0
      %2378 = vperm.xlu0 %2377, %v2256
      %v2379 = vpop.permute.xlu0 %2378
      %2382 = vset.pattern.permute.xlu0 0
      %2383 = vperm.xlu0 %2382, %v2257
      %v2384 = vpop.permute.xlu0 %2383
      %2387 = vset.pattern.permute.xlu0 0
      %2388 = vperm.xlu0 %2387, %v2258
      %v2389 = vpop.permute.xlu0 %2388
      %2392 = vset.pattern.permute.xlu0 0
      %2393 = vperm.xlu0 %2392, %v2259
      %v2394 = vpop.permute.xlu0 %2393
      %2397 = vset.pattern.permute.xlu0 0
      %2398 = vperm.xlu0 %2397, %v2260
      %v2399 = vpop.permute.xlu0 %2398
      %2402 = vset.pattern.permute.xlu0 0
      %2403 = vperm.xlu0 %2402, %v2261
      %v2404 = vpop.permute.xlu0 %2403
      %2407 = vset.pattern.permute.xlu0 0
      %2408 = vperm.xlu0 %2407, %v2262
      %v2409 = vpop.permute.xlu0 %2408
      %2412 = vset.pattern.permute.xlu0 0
      %2413 = vperm.xlu0 %2412, %v2263
      %v2414 = vpop.permute.xlu0 %2413
      %2417 = vset.pattern.permute.xlu0 0
      %2418 = vperm.xlu0 %2417, %v2264
      %v2419 = vpop.permute.xlu0 %2418
      %2422 = vset.pattern.permute.xlu0 0
      %2423 = vperm.xlu0 %2422, %v2265
      %v2424 = vpop.permute.xlu0 %2423
      %v2426 = vadd.f32 %v1978, %v2269
      %v2427 = vadd.f32 %v1979, %v2269
      %v2428 = vadd.f32 %v1980, %v2269
      %v2429 = vadd.f32 %v1981, %v2269
      %v2430 = vadd.f32 %v1982, %v2269
      %v2431 = vadd.f32 %v1983, %v2269
      %v2432 = vadd.f32 %v1984, %v2269
      %v2433 = vadd.f32 %v1985, %v2269
      %v2434 = vadd.f32 %v1986, %v2274
      %v2435 = vadd.f32 %v1987, %v2274
      %v2436 = vadd.f32 %v1988, %v2274
      %v2437 = vadd.f32 %v1989, %v2274
      %v2438 = vadd.f32 %v1990, %v2274
      %v2439 = vadd.f32 %v1991, %v2274
      %v2440 = vadd.f32 %v1992, %v2274
      %v2441 = vadd.f32 %v1993, %v2274
      %v2442 = vadd.f32 %v1994, %v2279
      %v2443 = vadd.f32 %v1995, %v2279
      %v2444 = vadd.f32 %v1996, %v2279
      %v2445 = vadd.f32 %v1997, %v2279
      %v2446 = vadd.f32 %v1998, %v2279
      %v2447 = vadd.f32 %v1999, %v2279
      %v2448 = vadd.f32 %v2000, %v2279
      %v2449 = vadd.f32 %v2001, %v2279
      %v2450 = vadd.f32 %v2002, %v2284
      %v2451 = vadd.f32 %v2003, %v2284
      %v2452 = vadd.f32 %v2004, %v2284
      %v2453 = vadd.f32 %v2005, %v2284
      %v2454 = vadd.f32 %v2006, %v2284
      %v2455 = vadd.f32 %v2007, %v2284
      %v2456 = vadd.f32 %v2008, %v2284
      %v2457 = vadd.f32 %v2009, %v2284
      %v2458 = vadd.f32 %v2010, %v2289
      %v2459 = vadd.f32 %v2011, %v2289
      %v2460 = vadd.f32 %v2012, %v2289
      %v2461 = vadd.f32 %v2013, %v2289
      %v2462 = vadd.f32 %v2014, %v2289
      %v2463 = vadd.f32 %v2015, %v2289
      %v2464 = vadd.f32 %v2016, %v2289
      %v2465 = vadd.f32 %v2017, %v2289
      %v2466 = vadd.f32 %v2018, %v2294
      %v2467 = vadd.f32 %v2019, %v2294
      %v2468 = vadd.f32 %v2020, %v2294
      %v2469 = vadd.f32 %v2021, %v2294
      %v2470 = vadd.f32 %v2022, %v2294
      %v2471 = vadd.f32 %v2023, %v2294
      %v2472 = vadd.f32 %v2024, %v2294
      %v2473 = vadd.f32 %v2025, %v2294
      %v2474 = vadd.f32 %v2026, %v2299
      %v2475 = vadd.f32 %v2027, %v2299
      %v2476 = vadd.f32 %v2028, %v2299
      %v2477 = vadd.f32 %v2029, %v2299
      %v2478 = vadd.f32 %v2030, %v2299
      %v2479 = vadd.f32 %v2031, %v2299
      %v2480 = vadd.f32 %v2032, %v2299
      %v2481 = vadd.f32 %v2033, %v2299
      %v2482 = vadd.f32 %v2034, %v2304
      %v2483 = vadd.f32 %v2035, %v2304
      %v2484 = vadd.f32 %v2036, %v2304
      %v2485 = vadd.f32 %v2037, %v2304
      %v2486 = vadd.f32 %v2038, %v2304
      %v2487 = vadd.f32 %v2039, %v2304
      %v2488 = vadd.f32 %v2040, %v2304
      %v2489 = vadd.f32 %v2041, %v2304
      %v2490 = vadd.f32 %v2042, %v2309
      %v2491 = vadd.f32 %v2043, %v2309
      %v2492 = vadd.f32 %v2044, %v2309
      %v2493 = vadd.f32 %v2045, %v2309
      %v2494 = vadd.f32 %v2046, %v2309
      %v2495 = vadd.f32 %v2047, %v2309
      %v2496 = vadd.f32 %v2048, %v2309
      %v2497 = vadd.f32 %v2049, %v2309
      %v2498 = vadd.f32 %v2050, %v2314
      %v2499 = vadd.f32 %v2051, %v2314
      %v2500 = vadd.f32 %v2052, %v2314
      %v2501 = vadd.f32 %v2053, %v2314
      %v2502 = vadd.f32 %v2054, %v2314
      %v2503 = vadd.f32 %v2055, %v2314
      %v2504 = vadd.f32 %v2056, %v2314
      %v2505 = vadd.f32 %v2057, %v2314
      %v2506 = vadd.f32 %v2058, %v2319
      %v2507 = vadd.f32 %v2059, %v2319
      %v2508 = vadd.f32 %v2060, %v2319
      %v2509 = vadd.f32 %v2061, %v2319
      %v2510 = vadd.f32 %v2062, %v2319
      %v2511 = vadd.f32 %v2063, %v2319
      %v2512 = vadd.f32 %v2064, %v2319
      %v2513 = vadd.f32 %v2065, %v2319
      %v2514 = vadd.f32 %v2066, %v2324
      %v2515 = vadd.f32 %v2067, %v2324
      %v2516 = vadd.f32 %v2068, %v2324
      %v2517 = vadd.f32 %v2069, %v2324
      %v2518 = vadd.f32 %v2070, %v2324
      %v2519 = vadd.f32 %v2071, %v2324
      %v2520 = vadd.f32 %v2072, %v2324
      %v2521 = vadd.f32 %v2073, %v2324
      %v2522 = vadd.f32 %v2074, %v2329
      %v2523 = vadd.f32 %v2075, %v2329
      %v2524 = vadd.f32 %v2076, %v2329
      %v2525 = vadd.f32 %v2077, %v2329
      %v2526 = vadd.f32 %v2078, %v2329
      %v2527 = vadd.f32 %v2079, %v2329
      %v2528 = vadd.f32 %v2080, %v2329
      %v2529 = vadd.f32 %v2081, %v2329
      %v2530 = vadd.f32 %v2082, %v2334
      %v2531 = vadd.f32 %v2083, %v2334
      %v2532 = vadd.f32 %v2084, %v2334
      %v2533 = vadd.f32 %v2085, %v2334
      %v2534 = vadd.f32 %v2086, %v2334
      %v2535 = vadd.f32 %v2087, %v2334
      %v2536 = vadd.f32 %v2088, %v2334
      %v2537 = vadd.f32 %v2089, %v2334
      %v2538 = vadd.f32 %v2090, %v2339
      %v2539 = vadd.f32 %v2091, %v2339
      %v2540 = vadd.f32 %v2092, %v2339
      %v2541 = vadd.f32 %v2093, %v2339
      %v2542 = vadd.f32 %v2094, %v2339
      %v2543 = vadd.f32 %v2095, %v2339
      %v2544 = vadd.f32 %v2096, %v2339
      %v2545 = vadd.f32 %v2097, %v2339
      %v2546 = vadd.f32 %v2098, %v2344
      %v2547 = vadd.f32 %v2099, %v2344
      %v2548 = vadd.f32 %v2100, %v2344
      %v2549 = vadd.f32 %v2101, %v2344
      %v2550 = vadd.f32 %v2102, %v2344
      %v2551 = vadd.f32 %v2103, %v2344
      %v2552 = vadd.f32 %v2104, %v2344
      %v2553 = vadd.f32 %v2105, %v2344
      %v2554 = vadd.f32 %v2106, %v2349
      %v2555 = vadd.f32 %v2107, %v2349
      %v2556 = vadd.f32 %v2108, %v2349
      %v2557 = vadd.f32 %v2109, %v2349
      %v2558 = vadd.f32 %v2110, %v2349
      %v2559 = vadd.f32 %v2111, %v2349
      %v2560 = vadd.f32 %v2112, %v2349
      %v2561 = vadd.f32 %v2113, %v2349
      %v2562 = vadd.f32 %v2114, %v2354
      %v2563 = vadd.f32 %v2115, %v2354
      %v2564 = vadd.f32 %v2116, %v2354
      %v2565 = vadd.f32 %v2117, %v2354
      %v2566 = vadd.f32 %v2118, %v2354
      %v2567 = vadd.f32 %v2119, %v2354
      %v2568 = vadd.f32 %v2120, %v2354
      %v2569 = vadd.f32 %v2121, %v2354
      %v2570 = vadd.f32 %v2122, %v2359
      %v2571 = vadd.f32 %v2123, %v2359
      %v2572 = vadd.f32 %v2124, %v2359
      %v2573 = vadd.f32 %v2125, %v2359
      %v2574 = vadd.f32 %v2126, %v2359
      %v2575 = vadd.f32 %v2127, %v2359
      %v2576 = vadd.f32 %v2128, %v2359
      %v2577 = vadd.f32 %v2129, %v2359
      %v2578 = vadd.f32 %v2130, %v2364
      %v2579 = vadd.f32 %v2131, %v2364
      %v2580 = vadd.f32 %v2132, %v2364
      %v2581 = vadd.f32 %v2133, %v2364
      %v2582 = vadd.f32 %v2134, %v2364
      %v2583 = vadd.f32 %v2135, %v2364
      %v2584 = vadd.f32 %v2136, %v2364
      %v2585 = vadd.f32 %v2137, %v2364
      %v2586 = vadd.f32 %v2138, %v2369
      %v2587 = vadd.f32 %v2139, %v2369
      %v2588 = vadd.f32 %v2140, %v2369
      %v2589 = vadd.f32 %v2141, %v2369
      %v2590 = vadd.f32 %v2142, %v2369
      %v2591 = vadd.f32 %v2143, %v2369
      %v2592 = vadd.f32 %v2144, %v2369
      %v2593 = vadd.f32 %v2145, %v2369
      %v2594 = vadd.f32 %v2146, %v2374
      %v2595 = vadd.f32 %v2147, %v2374
      %v2596 = vadd.f32 %v2148, %v2374
      %v2597 = vadd.f32 %v2149, %v2374
      %v2598 = vadd.f32 %v2150, %v2374
      %v2599 = vadd.f32 %v2151, %v2374
      %v2600 = vadd.f32 %v2152, %v2374
      %v2601 = vadd.f32 %v2153, %v2374
      %v2602 = vadd.f32 %v2154, %v2379
      %v2603 = vadd.f32 %v2155, %v2379
      %v2604 = vadd.f32 %v2156, %v2379
      %v2605 = vadd.f32 %v2157, %v2379
      %v2606 = vadd.f32 %v2158, %v2379
      %v2607 = vadd.f32 %v2159, %v2379
      %v2608 = vadd.f32 %v2160, %v2379
      %v2609 = vadd.f32 %v2161, %v2379
      %v2610 = vadd.f32 %v2162, %v2384
      %v2611 = vadd.f32 %v2163, %v2384
      %v2612 = vadd.f32 %v2164, %v2384
      %v2613 = vadd.f32 %v2165, %v2384
      %v2614 = vadd.f32 %v2166, %v2384
      %v2615 = vadd.f32 %v2167, %v2384
      %v2616 = vadd.f32 %v2168, %v2384
      %v2617 = vadd.f32 %v2169, %v2384
      %v2618 = vadd.f32 %v2170, %v2389
      %v2619 = vadd.f32 %v2171, %v2389
      %v2620 = vadd.f32 %v2172, %v2389
      %v2621 = vadd.f32 %v2173, %v2389
      %v2622 = vadd.f32 %v2174, %v2389
      %v2623 = vadd.f32 %v2175, %v2389
      %v2624 = vadd.f32 %v2176, %v2389
      %v2625 = vadd.f32 %v2177, %v2389
      %v2626 = vadd.f32 %v2178, %v2394
      %v2627 = vadd.f32 %v2179, %v2394
      %v2628 = vadd.f32 %v2180, %v2394
      %v2629 = vadd.f32 %v2181, %v2394
      %v2630 = vadd.f32 %v2182, %v2394
      %v2631 = vadd.f32 %v2183, %v2394
      %v2632 = vadd.f32 %v2184, %v2394
      %v2633 = vadd.f32 %v2185, %v2394
      %v2634 = vadd.f32 %v2186, %v2399
      %v2635 = vadd.f32 %v2187, %v2399
      %v2636 = vadd.f32 %v2188, %v2399
      %v2637 = vadd.f32 %v2189, %v2399
      %v2638 = vadd.f32 %v2190, %v2399
      %v2639 = vadd.f32 %v2191, %v2399
      %v2640 = vadd.f32 %v2192, %v2399
      %v2641 = vadd.f32 %v2193, %v2399
      %v2642 = vadd.f32 %v2194, %v2404
      %v2643 = vadd.f32 %v2195, %v2404
      %v2644 = vadd.f32 %v2196, %v2404
      %v2645 = vadd.f32 %v2197, %v2404
      %v2646 = vadd.f32 %v2198, %v2404
      %v2647 = vadd.f32 %v2199, %v2404
      %v2648 = vadd.f32 %v2200, %v2404
      %v2649 = vadd.f32 %v2201, %v2404
      %v2650 = vadd.f32 %v2202, %v2409
      %v2651 = vadd.f32 %v2203, %v2409
      %v2652 = vadd.f32 %v2204, %v2409
      %v2653 = vadd.f32 %v2205, %v2409
      %v2654 = vadd.f32 %v2206, %v2409
      %v2655 = vadd.f32 %v2207, %v2409
      %v2656 = vadd.f32 %v2208, %v2409
      %v2657 = vadd.f32 %v2209, %v2409
      %v2658 = vadd.f32 %v2210, %v2414
      %v2659 = vadd.f32 %v2211, %v2414
      %v2660 = vadd.f32 %v2212, %v2414
      %v2661 = vadd.f32 %v2213, %v2414
      %v2662 = vadd.f32 %v2214, %v2414
      %v2663 = vadd.f32 %v2215, %v2414
      %v2664 = vadd.f32 %v2216, %v2414
      %v2665 = vadd.f32 %v2217, %v2414
      %v2666 = vadd.f32 %v2218, %v2419
      %v2667 = vadd.f32 %v2219, %v2419
      %v2668 = vadd.f32 %v2220, %v2419
      %v2669 = vadd.f32 %v2221, %v2419
      %v2670 = vadd.f32 %v2222, %v2419
      %v2671 = vadd.f32 %v2223, %v2419
      %v2672 = vadd.f32 %v2224, %v2419
      %v2673 = vadd.f32 %v2225, %v2419
      %v2674 = vadd.f32 %v2226, %v2424
      %v2675 = vadd.f32 %v2227, %v2424
      %v2676 = vadd.f32 %v2228, %v2424
      %v2677 = vadd.f32 %v2229, %v2424
      %v2678 = vadd.f32 %v2230, %v2424
      %v2679 = vadd.f32 %v2231, %v2424
      %v2680 = vadd.f32 %v2232, %v2424
      %v2681 = vadd.f32 %v2233, %v2424
      %v2682 = vtanh.pop %v2426
      %v2683 = vtanh.pop %v2427
      %v2684 = vtanh.pop %v2428
      %v2685 = vtanh.pop %v2429
      %v2686 = vtanh.pop %v2430
      %v2687 = vtanh.pop %v2431
      %v2688 = vtanh.pop %v2432
      %v2689 = vtanh.pop %v2433
      %v2690 = vtanh.pop %v2434
      %v2691 = vtanh.pop %v2435
      %v2692 = vtanh.pop %v2436
      %v2693 = vtanh.pop %v2437
      %v2694 = vtanh.pop %v2438
      %v2695 = vtanh.pop %v2439
      %v2696 = vtanh.pop %v2440
      %v2697 = vtanh.pop %v2441
      %v2698 = vtanh.pop %v2442
      %v2699 = vtanh.pop %v2443
      %v2700 = vtanh.pop %v2444
      %v2701 = vtanh.pop %v2445
      %v2702 = vtanh.pop %v2446
      %v2703 = vtanh.pop %v2447
      %v2704 = vtanh.pop %v2448
      %v2705 = vtanh.pop %v2449
      %v2706 = vtanh.pop %v2450
      %v2707 = vtanh.pop %v2451
      %v2708 = vtanh.pop %v2452
      %v2709 = vtanh.pop %v2453
      %v2710 = vtanh.pop %v2454
      %v2711 = vtanh.pop %v2455
      %v2712 = vtanh.pop %v2456
      %v2713 = vtanh.pop %v2457
      %v2714 = vtanh.pop %v2458
      %v2715 = vtanh.pop %v2459
      %v2716 = vtanh.pop %v2460
      %v2717 = vtanh.pop %v2461
      %v2718 = vtanh.pop %v2462
      %v2719 = vtanh.pop %v2463
      %v2720 = vtanh.pop %v2464
      %v2721 = vtanh.pop %v2465
      %v2722 = vtanh.pop %v2466
      %v2723 = vtanh.pop %v2467
      %v2724 = vtanh.pop %v2468
      %v2725 = vtanh.pop %v2469
      %v2726 = vtanh.pop %v2470
      %v2727 = vtanh.pop %v2471
      %v2728 = vtanh.pop %v2472
      %v2729 = vtanh.pop %v2473
      %v2730 = vtanh.pop %v2474
      %v2731 = vtanh.pop %v2475
      %v2732 = vtanh.pop %v2476
      %v2733 = vtanh.pop %v2477
      %v2734 = vtanh.pop %v2478
      %v2735 = vtanh.pop %v2479
      %v2736 = vtanh.pop %v2480
      %v2737 = vtanh.pop %v2481
      %v2738 = vtanh.pop %v2482
      %v2739 = vtanh.pop %v2483
      %v2740 = vtanh.pop %v2484
      %v2741 = vtanh.pop %v2485
      %v2742 = vtanh.pop %v2486
      %v2743 = vtanh.pop %v2487
      %v2744 = vtanh.pop %v2488
      %v2745 = vtanh.pop %v2489
      %v2746 = vtanh.pop %v2490
      %v2747 = vtanh.pop %v2491
      %v2748 = vtanh.pop %v2492
      %v2749 = vtanh.pop %v2493
      %v2750 = vtanh.pop %v2494
      %v2751 = vtanh.pop %v2495
      %v2752 = vtanh.pop %v2496
      %v2753 = vtanh.pop %v2497
      %v2754 = vtanh.pop %v2498
      %v2755 = vtanh.pop %v2499
      %v2756 = vtanh.pop %v2500
      %v2757 = vtanh.pop %v2501
      %v2758 = vtanh.pop %v2502
      %v2759 = vtanh.pop %v2503
      %v2760 = vtanh.pop %v2504
      %v2761 = vtanh.pop %v2505
      %v2762 = vtanh.pop %v2506
      %v2763 = vtanh.pop %v2507
      %v2764 = vtanh.pop %v2508
      %v2765 = vtanh.pop %v2509
      %v2766 = vtanh.pop %v2510
      %v2767 = vtanh.pop %v2511
      %v2768 = vtanh.pop %v2512
      %v2769 = vtanh.pop %v2513
      %v2770 = vtanh.pop %v2514
      %v2771 = vtanh.pop %v2515
      %v2772 = vtanh.pop %v2516
      %v2773 = vtanh.pop %v2517
      %v2774 = vtanh.pop %v2518
      %v2775 = vtanh.pop %v2519
      %v2776 = vtanh.pop %v2520
      %v2777 = vtanh.pop %v2521
      %v2778 = vtanh.pop %v2522
      %v2779 = vtanh.pop %v2523
      %v2780 = vtanh.pop %v2524
      %v2781 = vtanh.pop %v2525
      %v2782 = vtanh.pop %v2526
      %v2783 = vtanh.pop %v2527
      %v2784 = vtanh.pop %v2528
      %v2785 = vtanh.pop %v2529
      %v2786 = vtanh.pop %v2530
      %v2787 = vtanh.pop %v2531
      %v2788 = vtanh.pop %v2532
      %v2789 = vtanh.pop %v2533
      %v2790 = vtanh.pop %v2534
      %v2791 = vtanh.pop %v2535
      %v2792 = vtanh.pop %v2536
      %v2793 = vtanh.pop %v2537
      %v2794 = vtanh.pop %v2538
      %v2795 = vtanh.pop %v2539
      %v2796 = vtanh.pop %v2540
      %v2797 = vtanh.pop %v2541
      %v2798 = vtanh.pop %v2542
      %v2799 = vtanh.pop %v2543
      %v2800 = vtanh.pop %v2544
      %v2801 = vtanh.pop %v2545
      %v2802 = vtanh.pop %v2546
      %v2803 = vtanh.pop %v2547
      %v2804 = vtanh.pop %v2548
      %v2805 = vtanh.pop %v2549
      %v2806 = vtanh.pop %v2550
      %v2807 = vtanh.pop %v2551
      %v2808 = vtanh.pop %v2552
      %v2809 = vtanh.pop %v2553
      %v2810 = vtanh.pop %v2554
      %v2811 = vtanh.pop %v2555
      %v2812 = vtanh.pop %v2556
      %v2813 = vtanh.pop %v2557
      %v2814 = vtanh.pop %v2558
      %v2815 = vtanh.pop %v2559
      %v2816 = vtanh.pop %v2560
      %v2817 = vtanh.pop %v2561
      %v2818 = vtanh.pop %v2562
      %v2819 = vtanh.pop %v2563
      %v2820 = vtanh.pop %v2564
      %v2821 = vtanh.pop %v2565
      %v2822 = vtanh.pop %v2566
      %v2823 = vtanh.pop %v2567
      %v2824 = vtanh.pop %v2568
      %v2825 = vtanh.pop %v2569
      %v2826 = vtanh.pop %v2570
      %v2827 = vtanh.pop %v2571
      %v2828 = vtanh.pop %v2572
      %v2829 = vtanh.pop %v2573
      %v2830 = vtanh.pop %v2574
      %v2831 = vtanh.pop %v2575
      %v2832 = vtanh.pop %v2576
      %v2833 = vtanh.pop %v2577
      %v2834 = vtanh.pop %v2578
      %v2835 = vtanh.pop %v2579
      %v2836 = vtanh.pop %v2580
      %v2837 = vtanh.pop %v2581
      %v2838 = vtanh.pop %v2582
      %v2839 = vtanh.pop %v2583
      %v2840 = vtanh.pop %v2584
      %v2841 = vtanh.pop %v2585
      %v2842 = vtanh.pop %v2586
      %v2843 = vtanh.pop %v2587
      %v2844 = vtanh.pop %v2588
      %v2845 = vtanh.pop %v2589
      %v2846 = vtanh.pop %v2590
      %v2847 = vtanh.pop %v2591
      %v2848 = vtanh.pop %v2592
      %v2849 = vtanh.pop %v2593
      %v2850 = vtanh.pop %v2594
      %v2851 = vtanh.pop %v2595
      %v2852 = vtanh.pop %v2596
      %v2853 = vtanh.pop %v2597
      %v2854 = vtanh.pop %v2598
      %v2855 = vtanh.pop %v2599
      %v2856 = vtanh.pop %v2600
      %v2857 = vtanh.pop %v2601
      %v2858 = vtanh.pop %v2602
      %v2859 = vtanh.pop %v2603
      %v2860 = vtanh.pop %v2604
      %v2861 = vtanh.pop %v2605
      %v2862 = vtanh.pop %v2606
      %v2863 = vtanh.pop %v2607
      %v2864 = vtanh.pop %v2608
      %v2865 = vtanh.pop %v2609
      %v2866 = vtanh.pop %v2610
      %v2867 = vtanh.pop %v2611
      %v2868 = vtanh.pop %v2612
      %v2869 = vtanh.pop %v2613
      %v2870 = vtanh.pop %v2614
      %v2871 = vtanh.pop %v2615
      %v2872 = vtanh.pop %v2616
      %v2873 = vtanh.pop %v2617
      %v2874 = vtanh.pop %v2618
      %v2875 = vtanh.pop %v2619
      %v2876 = vtanh.pop %v2620
      %v2877 = vtanh.pop %v2621
      %v2878 = vtanh.pop %v2622
      %v2879 = vtanh.pop %v2623
      %v2880 = vtanh.pop %v2624
      %v2881 = vtanh.pop %v2625
      %v2882 = vtanh.pop %v2626
      %v2883 = vtanh.pop %v2627
      %v2884 = vtanh.pop %v2628
      %v2885 = vtanh.pop %v2629
      %v2886 = vtanh.pop %v2630
      %v2887 = vtanh.pop %v2631
      %v2888 = vtanh.pop %v2632
      %v2889 = vtanh.pop %v2633
      %v2890 = vtanh.pop %v2634
      %v2891 = vtanh.pop %v2635
      %v2892 = vtanh.pop %v2636
      %v2893 = vtanh.pop %v2637
      %v2894 = vtanh.pop %v2638
      %v2895 = vtanh.pop %v2639
      %v2896 = vtanh.pop %v2640
      %v2897 = vtanh.pop %v2641
      %v2898 = vtanh.pop %v2642
      %v2899 = vtanh.pop %v2643
      %v2900 = vtanh.pop %v2644
      %v2901 = vtanh.pop %v2645
      %v2902 = vtanh.pop %v2646
      %v2903 = vtanh.pop %v2647
      %v2904 = vtanh.pop %v2648
      %v2905 = vtanh.pop %v2649
      %v2906 = vtanh.pop %v2650
      %v2907 = vtanh.pop %v2651
      %v2908 = vtanh.pop %v2652
      %v2909 = vtanh.pop %v2653
      %v2910 = vtanh.pop %v2654
      %v2911 = vtanh.pop %v2655
      %v2912 = vtanh.pop %v2656
      %v2913 = vtanh.pop %v2657
      %v2914 = vtanh.pop %v2658
      %v2915 = vtanh.pop %v2659
      %v2916 = vtanh.pop %v2660
      %v2917 = vtanh.pop %v2661
      %v2918 = vtanh.pop %v2662
      %v2919 = vtanh.pop %v2663
      %v2920 = vtanh.pop %v2664
      %v2921 = vtanh.pop %v2665
      %v2922 = vtanh.pop %v2666
      %v2923 = vtanh.pop %v2667
      %v2924 = vtanh.pop %v2668
      %v2925 = vtanh.pop %v2669
      %v2926 = vtanh.pop %v2670
      %v2927 = vtanh.pop %v2671
      %v2928 = vtanh.pop %v2672
      %v2929 = vtanh.pop %v2673
      %v2930 = vtanh.pop %v2674
      %v2931 = vtanh.pop %v2675
      %v2932 = vtanh.pop %v2676
      %v2933 = vtanh.pop %v2677
      %v2934 = vtanh.pop %v2678
      %v2935 = vtanh.pop %v2679
      %v2936 = vtanh.pop %v2680
      %v2937 = vtanh.pop %v2681
      %v2938 = vld [vmem:[%s3] sm:$0xff]
      %v2939 = vld [vmem:[%s3 + $0x8] sm:$0xff]
      %v2940 = vld [vmem:[%s3 + $0x10] sm:$0xff]
      %v2941 = vld [vmem:[%s3 + $0x18] sm:$0xff]
      %v2942 = vld [vmem:[%s3 + $0x20] sm:$0xff]
      %v2943 = vld [vmem:[%s3 + $0x28] sm:$0xff]
      %v2944 = vld [vmem:[%s3 + $0x30] sm:$0xff]
      %v2945 = vld [vmem:[%s3 + $0x38] sm:$0xff]
      %v2946 = vld [vmem:[%s3 + $0x40] sm:$0xff]
      %v2947 = vld [vmem:[%s3 + $0x48] sm:$0xff]
      %v2948 = vld [vmem:[%s3 + $0x50] sm:$0xff]
      %v2949 = vld [vmem:[%s3 + $0x58] sm:$0xff]
      %v2950 = vld [vmem:[%s3 + $0x60] sm:$0xff]
      %v2951 = vld [vmem:[%s3 + $0x68] sm:$0xff]
      %v2952 = vld [vmem:[%s3 + $0x70] sm:$0xff]
      %v2953 = vld [vmem:[%s3 + $0x78] sm:$0xff]
      %v2954 = vld [vmem:[%s3 + $0x80] sm:$0xff]
      %v2955 = vld [vmem:[%s3 + $0x88] sm:$0xff]
      %v2956 = vld [vmem:[%s3 + $0x90] sm:$0xff]
      %v2957 = vld [vmem:[%s3 + $0x98] sm:$0xff]
      %v2958 = vld [vmem:[%s3 + $0xa0] sm:$0xff]
      %v2959 = vld [vmem:[%s3 + $0xa8] sm:$0xff]
      %v2960 = vld [vmem:[%s3 + $0xb0] sm:$0xff]
      %v2961 = vld [vmem:[%s3 + $0xb8] sm:$0xff]
      %v2962 = vld [vmem:[%s3 + $0xc0] sm:$0xff]
      %v2963 = vld [vmem:[%s3 + $0xc8] sm:$0xff]
      %v2964 = vld [vmem:[%s3 + $0xd0] sm:$0xff]
      %v2965 = vld [vmem:[%s3 + $0xd8] sm:$0xff]
      %v2966 = vld [vmem:[%s3 + $0xe0] sm:$0xff]
      %v2967 = vld [vmem:[%s3 + $0xe8] sm:$0xff]
      %v2968 = vld [vmem:[%s3 + $0xf0] sm:$0xff]
      %v2969 = vld [vmem:[%s3 + $0xf8] sm:$0xff]
      %v2970 = vld [vmem:[%s4] sm:$0xff]
      %v2971 = vld [vmem:[%s4 + $0x8] sm:$0xff]
      %v2972 = vld [vmem:[%s4 + $0x10] sm:$0xff]
      %v2973 = vld [vmem:[%s4 + $0x18] sm:$0xff]
      %v2974 = vld [vmem:[%s4 + $0x20] sm:$0xff]
      %v2975 = vld [vmem:[%s4 + $0x28] sm:$0xff]
      %v2976 = vld [vmem:[%s4 + $0x30] sm:$0xff]
      %v2977 = vld [vmem:[%s4 + $0x38] sm:$0xff]
      %v2978 = vld [vmem:[%s4 + $0x40] sm:$0xff]
      %v2979 = vld [vmem:[%s4 + $0x48] sm:$0xff]
      %v2980 = vld [vmem:[%s4 + $0x50] sm:$0xff]
      %v2981 = vld [vmem:[%s4 + $0x58] sm:$0xff]
      %v2982 = vld [vmem:[%s4 + $0x60] sm:$0xff]
      %v2983 = vld [vmem:[%s4 + $0x68] sm:$0xff]
      %v2984 = vld [vmem:[%s4 + $0x70] sm:$0xff]
      %v2985 = vld [vmem:[%s4 + $0x78] sm:$0xff]
      %v2986 = vld [vmem:[%s4 + $0x80] sm:$0xff]
      %v2987 = vld [vmem:[%s4 + $0x88] sm:$0xff]
      %v2988 = vld [vmem:[%s4 + $0x90] sm:$0xff]
      %v2989 = vld [vmem:[%s4 + $0x98] sm:$0xff]
      %v2990 = vld [vmem:[%s4 + $0xa0] sm:$0xff]
      %v2991 = vld [vmem:[%s4 + $0xa8] sm:$0xff]
      %v2992 = vld [vmem:[%s4 + $0xb0] sm:$0xff]
      %v2993 = vld [vmem:[%s4 + $0xb8] sm:$0xff]
      %v2994 = vld [vmem:[%s4 + $0xc0] sm:$0xff]
      %v2995 = vld [vmem:[%s4 + $0xc8] sm:$0xff]
      %v2996 = vld [vmem:[%s4 + $0xd0] sm:$0xff]
      %v2997 = vld [vmem:[%s4 + $0xd8] sm:$0xff]
      %v2998 = vld [vmem:[%s4 + $0xe0] sm:$0xff]
      %v2999 = vld [vmem:[%s4 + $0xe8] sm:$0xff]
      %v3000 = vld [vmem:[%s4 + $0xf0] sm:$0xff]
      %v3001 = vld [vmem:[%s4 + $0xf8] sm:$0xff]
      %v3002 = vpack.c.bf16 %v2690, %v2682
      %v3003 = vpack.c.bf16 %v2691, %v2683
      %v3004 = vpack.c.bf16 %v2692, %v2684
      %v3005 = vpack.c.bf16 %v2693, %v2685
      %v3006 = vpack.c.bf16 %v2694, %v2686
      %v3007 = vpack.c.bf16 %v2695, %v2687
      %v3008 = vpack.c.bf16 %v2696, %v2688
      %v3009 = vpack.c.bf16 %v2697, %v2689
      %v3010 = vpack.c.bf16 %v2706, %v2698
      %v3011 = vpack.c.bf16 %v2707, %v2699
      %v3012 = vpack.c.bf16 %v2708, %v2700
      %v3013 = vpack.c.bf16 %v2709, %v2701
      %v3014 = vpack.c.bf16 %v2710, %v2702
      %v3015 = vpack.c.bf16 %v2711, %v2703
      %v3016 = vpack.c.bf16 %v2712, %v2704
      %v3017 = vpack.c.bf16 %v2713, %v2705
      %v3018 = vpack.c.bf16 %v2722, %v2714
      %v3019 = vpack.c.bf16 %v2723, %v2715
      %v3020 = vpack.c.bf16 %v2724, %v2716
      %v3021 = vpack.c.bf16 %v2725, %v2717
      %v3022 = vpack.c.bf16 %v2726, %v2718
      %v3023 = vpack.c.bf16 %v2727, %v2719
      %v3024 = vpack.c.bf16 %v2728, %v2720
      %v3025 = vpack.c.bf16 %v2729, %v2721
      %v3026 = vpack.c.bf16 %v2738, %v2730
      %v3027 = vpack.c.bf16 %v2739, %v2731
      %v3028 = vpack.c.bf16 %v2740, %v2732
      %v3029 = vpack.c.bf16 %v2741, %v2733
      %v3030 = vpack.c.bf16 %v2742, %v2734
      %v3031 = vpack.c.bf16 %v2743, %v2735
      %v3032 = vpack.c.bf16 %v2744, %v2736
      %v3033 = vpack.c.bf16 %v2745, %v2737
      %v3034 = vpack.c.bf16 %v2754, %v2746
      %v3035 = vpack.c.bf16 %v2755, %v2747
      %v3036 = vpack.c.bf16 %v2756, %v2748
      %v3037 = vpack.c.bf16 %v2757, %v2749
      %v3038 = vpack.c.bf16 %v2758, %v2750
      %v3039 = vpack.c.bf16 %v2759, %v2751
      %v3040 = vpack.c.bf16 %v2760, %v2752
      %v3041 = vpack.c.bf16 %v2761, %v2753
      %v3042 = vpack.c.bf16 %v2770, %v2762
      %v3043 = vpack.c.bf16 %v2771, %v2763
      %v3044 = vpack.c.bf16 %v2772, %v2764
      %v3045 = vpack.c.bf16 %v2773, %v2765
      %v3046 = vpack.c.bf16 %v2774, %v2766
      %v3047 = vpack.c.bf16 %v2775, %v2767
      %v3048 = vpack.c.bf16 %v2776, %v2768
      %v3049 = vpack.c.bf16 %v2777, %v2769
      %v3050 = vpack.c.bf16 %v2786, %v2778
      %v3051 = vpack.c.bf16 %v2787, %v2779
      %v3052 = vpack.c.bf16 %v2788, %v2780
      %v3053 = vpack.c.bf16 %v2789, %v2781
      %v3054 = vpack.c.bf16 %v2790, %v2782
      %v3055 = vpack.c.bf16 %v2791, %v2783
      %v3056 = vpack.c.bf16 %v2792, %v2784
      %v3057 = vpack.c.bf16 %v2793, %v2785
      %v3058 = vpack.c.bf16 %v2802, %v2794
      %v3059 = vpack.c.bf16 %v2803, %v2795
      %v3060 = vpack.c.bf16 %v2804, %v2796
      %v3061 = vpack.c.bf16 %v2805, %v2797
      %v3062 = vpack.c.bf16 %v2806, %v2798
      %v3063 = vpack.c.bf16 %v2807, %v2799
      %v3064 = vpack.c.bf16 %v2808, %v2800
      %v3065 = vpack.c.bf16 %v2809, %v2801
      %v3066 = vpack.c.bf16 %v2818, %v2810
      %v3067 = vpack.c.bf16 %v2819, %v2811
      %v3068 = vpack.c.bf16 %v2820, %v2812
      %v3069 = vpack.c.bf16 %v2821, %v2813
      %v3070 = vpack.c.bf16 %v2822, %v2814
      %v3071 = vpack.c.bf16 %v2823, %v2815
      %v3072 = vpack.c.bf16 %v2824, %v2816
      %v3073 = vpack.c.bf16 %v2825, %v2817
      %v3074 = vpack.c.bf16 %v2834, %v2826
      %v3075 = vpack.c.bf16 %v2835, %v2827
      %v3076 = vpack.c.bf16 %v2836, %v2828
      %v3077 = vpack.c.bf16 %v2837, %v2829
      %v3078 = vpack.c.bf16 %v2838, %v2830
      %v3079 = vpack.c.bf16 %v2839, %v2831
      %v3080 = vpack.c.bf16 %v2840, %v2832
      %v3081 = vpack.c.bf16 %v2841, %v2833
      %v3082 = vpack.c.bf16 %v2850, %v2842
      %v3083 = vpack.c.bf16 %v2851, %v2843
      %v3084 = vpack.c.bf16 %v2852, %v2844
      %v3085 = vpack.c.bf16 %v2853, %v2845
      %v3086 = vpack.c.bf16 %v2854, %v2846
      %v3087 = vpack.c.bf16 %v2855, %v2847
      %v3088 = vpack.c.bf16 %v2856, %v2848
      %v3089 = vpack.c.bf16 %v2857, %v2849
      %v3090 = vpack.c.bf16 %v2866, %v2858
      %v3091 = vpack.c.bf16 %v2867, %v2859
      %v3092 = vpack.c.bf16 %v2868, %v2860
      %v3093 = vpack.c.bf16 %v2869, %v2861
      %v3094 = vpack.c.bf16 %v2870, %v2862
      %v3095 = vpack.c.bf16 %v2871, %v2863
      %v3096 = vpack.c.bf16 %v2872, %v2864
      %v3097 = vpack.c.bf16 %v2873, %v2865
      %v3098 = vpack.c.bf16 %v2882, %v2874
      %v3099 = vpack.c.bf16 %v2883, %v2875
      %v3100 = vpack.c.bf16 %v2884, %v2876
      %v3101 = vpack.c.bf16 %v2885, %v2877
      %v3102 = vpack.c.bf16 %v2886, %v2878
      %v3103 = vpack.c.bf16 %v2887, %v2879
      %v3104 = vpack.c.bf16 %v2888, %v2880
      %v3105 = vpack.c.bf16 %v2889, %v2881
      %v3106 = vpack.c.bf16 %v2898, %v2890
      %v3107 = vpack.c.bf16 %v2899, %v2891
      %v3108 = vpack.c.bf16 %v2900, %v2892
      %v3109 = vpack.c.bf16 %v2901, %v2893
      %v3110 = vpack.c.bf16 %v2902, %v2894
      %v3111 = vpack.c.bf16 %v2903, %v2895
      %v3112 = vpack.c.bf16 %v2904, %v2896
      %v3113 = vpack.c.bf16 %v2905, %v2897
      %v3114 = vpack.c.bf16 %v2914, %v2906
      %v3115 = vpack.c.bf16 %v2915, %v2907
      %v3116 = vpack.c.bf16 %v2916, %v2908
      %v3117 = vpack.c.bf16 %v2917, %v2909
      %v3118 = vpack.c.bf16 %v2918, %v2910
      %v3119 = vpack.c.bf16 %v2919, %v2911
      %v3120 = vpack.c.bf16 %v2920, %v2912
      %v3121 = vpack.c.bf16 %v2921, %v2913
      %v3122 = vpack.c.bf16 %v2930, %v2922
      %v3123 = vpack.c.bf16 %v2931, %v2923
      %v3124 = vpack.c.bf16 %v2932, %v2924
      %v3125 = vpack.c.bf16 %v2933, %v2925
      %v3126 = vpack.c.bf16 %v2934, %v2926
      %v3127 = vpack.c.bf16 %v2935, %v2927
      %v3128 = vpack.c.bf16 %v2936, %v2928
      %v3129 = vpack.c.bf16 %v2937, %v2929
      %3131 = vset.pattern.permute.xlu0 0
      %3132 = vperm.xlu0 %3131, %v2970
      %v3133 = vpop.permute.xlu0 %3132
      %3136 = vset.pattern.permute.xlu0 0
      %3137 = vperm.xlu0 %3136, %v2971
      %v3138 = vpop.permute.xlu0 %3137
      %3141 = vset.pattern.permute.xlu0 0
      %3142 = vperm.xlu0 %3141, %v2972
      %v3143 = vpop.permute.xlu0 %3142
      %3146 = vset.pattern.permute.xlu0 0
      %3147 = vperm.xlu0 %3146, %v2973
      %v3148 = vpop.permute.xlu0 %3147
      %3151 = vset.pattern.permute.xlu0 0
      %3152 = vperm.xlu0 %3151, %v2974
      %v3153 = vpop.permute.xlu0 %3152
      %3156 = vset.pattern.permute.xlu0 0
      %3157 = vperm.xlu0 %3156, %v2975
      %v3158 = vpop.permute.xlu0 %3157
      %3161 = vset.pattern.permute.xlu0 0
      %3162 = vperm.xlu0 %3161, %v2976
      %v3163 = vpop.permute.xlu0 %3162
      %3166 = vset.pattern.permute.xlu0 0
      %3167 = vperm.xlu0 %3166, %v2977
      %v3168 = vpop.permute.xlu0 %3167
      %3171 = vset.pattern.permute.xlu0 0
      %3172 = vperm.xlu0 %3171, %v2978
      %v3173 = vpop.permute.xlu0 %3172
      %3176 = vset.pattern.permute.xlu0 0
      %3177 = vperm.xlu0 %3176, %v2979
      %v3178 = vpop.permute.xlu0 %3177
      %3181 = vset.pattern.permute.xlu0 0
      %3182 = vperm.xlu0 %3181, %v2980
      %v3183 = vpop.permute.xlu0 %3182
      %3186 = vset.pattern.permute.xlu0 0
      %3187 = vperm.xlu0 %3186, %v2981
      %v3188 = vpop.permute.xlu0 %3187
      %3191 = vset.pattern.permute.xlu0 0
      %3192 = vperm.xlu0 %3191, %v2982
      %v3193 = vpop.permute.xlu0 %3192
      %3196 = vset.pattern.permute.xlu0 0
      %3197 = vperm.xlu0 %3196, %v2983
      %v3198 = vpop.permute.xlu0 %3197
      %3201 = vset.pattern.permute.xlu0 0
      %3202 = vperm.xlu0 %3201, %v2984
      %v3203 = vpop.permute.xlu0 %3202
      %3206 = vset.pattern.permute.xlu0 0
      %3207 = vperm.xlu0 %3206, %v2985
      %v3208 = vpop.permute.xlu0 %3207
      %3211 = vset.pattern.permute.xlu0 0
      %3212 = vperm.xlu0 %3211, %v2986
      %v3213 = vpop.permute.xlu0 %3212
      %3216 = vset.pattern.permute.xlu0 0
      %3217 = vperm.xlu0 %3216, %v2987
      %v3218 = vpop.permute.xlu0 %3217
      %3221 = vset.pattern.permute.xlu0 0
      %3222 = vperm.xlu0 %3221, %v2988
      %v3223 = vpop.permute.xlu0 %3222
      %3226 = vset.pattern.permute.xlu0 0
      %3227 = vperm.xlu0 %3226, %v2989
      %v3228 = vpop.permute.xlu0 %3227
      %3231 = vset.pattern.permute.xlu0 0
      %3232 = vperm.xlu0 %3231, %v2990
      %v3233 = vpop.permute.xlu0 %3232
      %3236 = vset.pattern.permute.xlu0 0
      %3237 = vperm.xlu0 %3236, %v2991
      %v3238 = vpop.permute.xlu0 %3237
      %3241 = vset.pattern.permute.xlu0 0
      %3242 = vperm.xlu0 %3241, %v2992
      %v3243 = vpop.permute.xlu0 %3242
      %3246 = vset.pattern.permute.xlu0 0
      %3247 = vperm.xlu0 %3246, %v2993
      %v3248 = vpop.permute.xlu0 %3247
      %3251 = vset.pattern.permute.xlu0 0
      %3252 = vperm.xlu0 %3251, %v2994
      %v3253 = vpop.permute.xlu0 %3252
      %3256 = vset.pattern.permute.xlu0 0
      %3257 = vperm.xlu0 %3256, %v2995
      %v3258 = vpop.permute.xlu0 %3257
      %3261 = vset.pattern.permute.xlu0 0
      %3262 = vperm.xlu0 %3261, %v2996
      %v3263 = vpop.permute.xlu0 %3262
      %3266 = vset.pattern.permute.xlu0 0
      %3267 = vperm.xlu0 %3266, %v2997
      %v3268 = vpop.permute.xlu0 %3267
      %3271 = vset.pattern.permute.xlu0 0
      %3272 = vperm.xlu0 %3271, %v2998
      %v3273 = vpop.permute.xlu0 %3272
      %3276 = vset.pattern.permute.xlu0 0
      %3277 = vperm.xlu0 %3276, %v2999
      %v3278 = vpop.permute.xlu0 %3277
      %3281 = vset.pattern.permute.xlu0 0
      %3282 = vperm.xlu0 %3281, %v3000
      %v3283 = vpop.permute.xlu0 %3282
      %3286 = vset.pattern.permute.xlu0 0
      %3287 = vperm.xlu0 %3286, %v3001
      %v3288 = vpop.permute.xlu0 %3287
      %v3322 = vunpack.c.l.b16 %v2938
      %v3323 = vunpack.c.h.b16 %v2938
      %v3324 = vunpack.c.l.b16 %v2939
      %v3325 = vunpack.c.h.b16 %v2939
      %v3326 = vunpack.c.l.b16 %v2940
      %v3327 = vunpack.c.h.b16 %v2940
      %v3328 = vunpack.c.l.b16 %v2941
      %v3329 = vunpack.c.h.b16 %v2941
      %v3330 = vunpack.c.l.b16 %v2942
      %v3331 = vunpack.c.h.b16 %v2942
      %v3332 = vunpack.c.l.b16 %v2943
      %v3333 = vunpack.c.h.b16 %v2943
      %v3334 = vunpack.c.l.b16 %v2944
      %v3335 = vunpack.c.h.b16 %v2944
      %v3336 = vunpack.c.l.b16 %v2945
      %v3337 = vunpack.c.h.b16 %v2945
      %v3338 = vunpack.c.l.b16 %v2946
      %v3339 = vunpack.c.h.b16 %v2946
      %v3340 = vunpack.c.l.b16 %v2947
      %v3341 = vunpack.c.h.b16 %v2947
      %v3342 = vunpack.c.l.b16 %v2948
      %v3343 = vunpack.c.h.b16 %v2948
      %v3344 = vunpack.c.l.b16 %v2949
      %v3345 = vunpack.c.h.b16 %v2949
      %v3346 = vunpack.c.l.b16 %v2950
      %v3347 = vunpack.c.h.b16 %v2950
      %v3348 = vunpack.c.l.b16 %v2951
      %v3349 = vunpack.c.h.b16 %v2951
      %v3350 = vunpack.c.l.b16 %v2952
      %v3351 = vunpack.c.h.b16 %v2952
      %v3352 = vunpack.c.l.b16 %v2953
      %v3353 = vunpack.c.h.b16 %v2953
      %v3354 = vunpack.c.l.b16 %v2954
      %v3355 = vunpack.c.h.b16 %v2954
      %v3356 = vunpack.c.l.b16 %v2955
      %v3357 = vunpack.c.h.b16 %v2955
      %v3358 = vunpack.c.l.b16 %v2956
      %v3359 = vunpack.c.h.b16 %v2956
      %v3360 = vunpack.c.l.b16 %v2957
      %v3361 = vunpack.c.h.b16 %v2957
      %v3362 = vunpack.c.l.b16 %v2958
      %v3363 = vunpack.c.h.b16 %v2958
      %v3364 = vunpack.c.l.b16 %v2959
      %v3365 = vunpack.c.h.b16 %v2959
      %v3366 = vunpack.c.l.b16 %v2960
      %v3367 = vunpack.c.h.b16 %v2960
      %v3368 = vunpack.c.l.b16 %v2961
      %v3369 = vunpack.c.h.b16 %v2961
      %v3370 = vunpack.c.l.b16 %v2962
      %v3371 = vunpack.c.h.b16 %v2962
      %v3372 = vunpack.c.l.b16 %v2963
      %v3373 = vunpack.c.h.b16 %v2963
      %v3374 = vunpack.c.l.b16 %v2964
      %v3375 = vunpack.c.h.b16 %v2964
      %v3376 = vunpack.c.l.b16 %v2965
      %v3377 = vunpack.c.h.b16 %v2965
      %v3378 = vunpack.c.l.b16 %v2966
      %v3379 = vunpack.c.h.b16 %v2966
      %v3380 = vunpack.c.l.b16 %v2967
      %v3381 = vunpack.c.h.b16 %v2967
      %v3382 = vunpack.c.l.b16 %v2968
      %v3383 = vunpack.c.h.b16 %v2968
      %v3384 = vunpack.c.l.b16 %v2969
      %v3385 = vunpack.c.h.b16 %v2969
      %v3386 = vpack.c.b16 %v3324, %v3322
      %v3387 = vpack.c.b16 %v3325, %v3323
      %v3388 = vpack.c.b16 %v3328, %v3326
      %v3389 = vpack.c.b16 %v3329, %v3327
      %v3390 = vpack.c.b16 %v3332, %v3330
      %v3391 = vpack.c.b16 %v3333, %v3331
      %v3392 = vpack.c.b16 %v3336, %v3334
      %v3393 = vpack.c.b16 %v3337, %v3335
      %v3394 = vpack.c.b16 %v3340, %v3338
      %v3395 = vpack.c.b16 %v3341, %v3339
      %v3396 = vpack.c.b16 %v3344, %v3342
      %v3397 = vpack.c.b16 %v3345, %v3343
      %v3398 = vpack.c.b16 %v3348, %v3346
      %v3399 = vpack.c.b16 %v3349, %v3347
      %v3400 = vpack.c.b16 %v3352, %v3350
      %v3401 = vpack.c.b16 %v3353, %v3351
      %v3402 = vpack.c.b16 %v3356, %v3354
      %v3403 = vpack.c.b16 %v3357, %v3355
      %v3404 = vpack.c.b16 %v3360, %v3358
      %v3405 = vpack.c.b16 %v3361, %v3359
      %v3406 = vpack.c.b16 %v3364, %v3362
      %v3407 = vpack.c.b16 %v3365, %v3363
      %v3408 = vpack.c.b16 %v3368, %v3366
      %v3409 = vpack.c.b16 %v3369, %v3367
      %v3410 = vpack.c.b16 %v3372, %v3370
      %v3411 = vpack.c.b16 %v3373, %v3371
      %v3412 = vpack.c.b16 %v3376, %v3374
      %v3413 = vpack.c.b16 %v3377, %v3375
      %v3414 = vpack.c.b16 %v3380, %v3378
      %v3415 = vpack.c.b16 %v3381, %v3379
      %v3416 = vpack.c.b16 %v3384, %v3382
      %v3417 = vpack.c.b16 %v3385, %v3383
      %3450 = vmatprep.subr.bf16.mxu0 %v3059
      %3451 = vmatpush1.bf16.msra.mxu0 %v3058
      %3452 = vmatprep.subr.bf16.mxu0 %v3051
      %3453 = vmatpush1.bf16.msra.mxu0 %v3050
      %3454 = vmatprep.subr.bf16.mxu0 %v3043
      %3455 = vmatpush1.bf16.msra.mxu0 %v3042
      %3456 = vmatprep.subr.bf16.mxu0 %v3035
      %3457 = vmatpush1.bf16.msra.mxu0 %v3034
      %3458 = vmatprep.subr.bf16.mxu0 %v3027
      %3459 = vmatpush1.bf16.msra.mxu0 %v3026
      %3460 = vmatprep.subr.bf16.mxu0 %v3019
      %3461 = vmatpush1.bf16.msra.mxu0 %v3018
      %3462 = vmatprep.subr.bf16.mxu0 %v3011
      %3463 = vmatpush1.bf16.msra.mxu0 %v3010
      %3464 = vmatprep.subr.bf16.mxu0 %v3003
      %3465 = vmatpush1.bf16.msra.mxu0 %v3002
      %3466 = vmatprep.subr.bf16.mxu0 %v3123
      %3467 = vmatpush2.bf16.msra.mxu0 %v3122
      %3468 = vmatprep.subr.bf16.mxu0 %v3115
      %3469 = vmatpush2.bf16.msra.mxu0 %v3114
      %3470 = vmatprep.subr.bf16.mxu0 %v3107
      %3471 = vmatpush2.bf16.msra.mxu0 %v3106
      %3472 = vmatprep.subr.bf16.mxu0 %v3099
      %3473 = vmatpush2.bf16.msra.mxu0 %v3098
      %3474 = vmatprep.subr.bf16.mxu0 %v3091
      %3475 = vmatpush2.bf16.msra.mxu0 %v3090
      %3476 = vmatprep.subr.bf16.mxu0 %v3083
      %3477 = vmatpush2.bf16.msra.mxu0 %v3082
      %3478 = vmatprep.subr.bf16.mxu0 %v3075
      %3479 = vmatpush2.bf16.msra.mxu0 %v3074
      %3480 = vmatprep.subr.bf16.mxu0 %v3067
      %3481 = vmatpush2.bf16.msra.mxu0 %v3066
      %3482 = vmatprep.mubr.bf16.mxu0 %v3387
      %3483 = vmatmul.mubr.bf16.gmra.mxu0 %v3386
      %v3484 = vpop.f32.mrf.mxu0
      %v3485 = vadd.f32 %v3133, %v3484
      %v3486 = vpop.f32.mrf.mxu0
      %v3487 = vadd.f32 %v3133, %v3486
      %v3488 = vpop.f32.mrf.mxu0
      %v3489 = vadd.f32 %v3138, %v3488
      %v3490 = vpop.f32.mrf.mxu0
      %v3491 = vadd.f32 %v3138, %v3490
      %3492 = vmatprep.mubr.bf16.mxu0 %v3389
      %3493 = vmatmul.mubr.bf16.gmra.mxu0 %v3388
      %v3494 = vpop.f32.mrf.mxu0
      %v3495 = vadd.f32 %v3143, %v3494
      %v3496 = vpop.f32.mrf.mxu0
      %v3497 = vadd.f32 %v3143, %v3496
      %v3498 = vpop.f32.mrf.mxu0
      %v3499 = vadd.f32 %v3148, %v3498
      %v3500 = vpop.f32.mrf.mxu0
      %v3501 = vadd.f32 %v3148, %v3500
      %3502 = vmatprep.mubr.bf16.mxu0 %v3391
      %3503 = vmatmul.mubr.bf16.gmra.mxu0 %v3390
      %v3504 = vpop.f32.mrf.mxu0
      %v3505 = vadd.f32 %v3153, %v3504
      %v3506 = vpop.f32.mrf.mxu0
      %v3507 = vadd.f32 %v3153, %v3506
      %v3508 = vpop.f32.mrf.mxu0
      %v3509 = vadd.f32 %v3158, %v3508
      %v3510 = vpop.f32.mrf.mxu0
      %v3511 = vadd.f32 %v3158, %v3510
      %3512 = vmatprep.mubr.bf16.mxu0 %v3393
      %3513 = vmatmul.mubr.bf16.gmra.mxu0 %v3392
      %v3514 = vpop.f32.mrf.mxu0
      %v3515 = vadd.f32 %v3163, %v3514
      %v3516 = vpop.f32.mrf.mxu0
      %v3517 = vadd.f32 %v3163, %v3516
      %v3518 = vpop.f32.mrf.mxu0
      %v3519 = vadd.f32 %v3168, %v3518
      %v3520 = vpop.f32.mrf.mxu0
      %v3521 = vadd.f32 %v3168, %v3520
      %3522 = vmatprep.mubr.bf16.mxu0 %v3395
      %3523 = vmatmul.mubr.bf16.gmra.mxu0 %v3394
      %v3524 = vpop.f32.mrf.mxu0
      %v3525 = vadd.f32 %v3173, %v3524
      %v3526 = vpop.f32.mrf.mxu0
      %v3527 = vadd.f32 %v3173, %v3526
      %v3528 = vpop.f32.mrf.mxu0
      %v3529 = vadd.f32 %v3178, %v3528
      %v3530 = vpop.f32.mrf.mxu0
      %v3531 = vadd.f32 %v3178, %v3530
      %3532 = vmatprep.mubr.bf16.mxu0 %v3397
      %3533 = vmatmul.mubr.bf16.gmra.mxu0 %v3396
      %v3534 = vpop.f32.mrf.mxu0
      %v3535 = vadd.f32 %v3183, %v3534
      %v3536 = vpop.f32.mrf.mxu0
      %v3537 = vadd.f32 %v3183, %v3536
      %v3538 = vpop.f32.mrf.mxu0
      %v3539 = vadd.f32 %v3188, %v3538
      %v3540 = vpop.f32.mrf.mxu0
      %v3541 = vadd.f32 %v3188, %v3540
      %3542 = vmatprep.mubr.bf16.mxu0 %v3399
      %3543 = vmatmul.mubr.bf16.gmra.mxu0 %v3398
      %v3544 = vpop.f32.mrf.mxu0
      %v3545 = vadd.f32 %v3193, %v3544
      %v3546 = vpop.f32.mrf.mxu0
      %v3547 = vadd.f32 %v3193, %v3546
      %v3548 = vpop.f32.mrf.mxu0
      %v3549 = vadd.f32 %v3198, %v3548
      %v3550 = vpop.f32.mrf.mxu0
      %v3551 = vadd.f32 %v3198, %v3550
      %3552 = vmatprep.mubr.bf16.mxu0 %v3401
      %3553 = vmatmul.mubr.bf16.gmra.mxu0 %v3400
      %v3554 = vpop.f32.mrf.mxu0
      %v3555 = vadd.f32 %v3203, %v3554
      %v3556 = vpop.f32.mrf.mxu0
      %v3557 = vadd.f32 %v3203, %v3556
      %v3558 = vpop.f32.mrf.mxu0
      %v3559 = vadd.f32 %v3208, %v3558
      %v3560 = vpop.f32.mrf.mxu0
      %v3561 = vadd.f32 %v3208, %v3560
      %3562 = vmatprep.mubr.bf16.mxu0 %v3403
      %3563 = vmatmul.mubr.bf16.gmra.mxu0 %v3402
      %v3564 = vpop.f32.mrf.mxu0
      %v3565 = vadd.f32 %v3213, %v3564
      %v3566 = vpop.f32.mrf.mxu0
      %v3567 = vadd.f32 %v3213, %v3566
      %v3568 = vpop.f32.mrf.mxu0
      %v3569 = vadd.f32 %v3218, %v3568
      %v3570 = vpop.f32.mrf.mxu0
      %v3571 = vadd.f32 %v3218, %v3570
      %3572 = vmatprep.mubr.bf16.mxu0 %v3405
      %3573 = vmatmul.mubr.bf16.gmra.mxu0 %v3404
      %v3574 = vpop.f32.mrf.mxu0
      %v3575 = vadd.f32 %v3223, %v3574
      %v3576 = vpop.f32.mrf.mxu0
      %v3577 = vadd.f32 %v3223, %v3576
      %v3578 = vpop.f32.mrf.mxu0
      %v3579 = vadd.f32 %v3228, %v3578
      %v3580 = vpop.f32.mrf.mxu0
      %v3581 = vadd.f32 %v3228, %v3580
      %3582 = vmatprep.mubr.bf16.mxu0 %v3407
      %3583 = vmatmul.mubr.bf16.gmra.mxu0 %v3406
      %v3584 = vpop.f32.mrf.mxu0
      %v3585 = vadd.f32 %v3233, %v3584
      %v3586 = vpop.f32.mrf.mxu0
      %v3587 = vadd.f32 %v3233, %v3586
      %v3588 = vpop.f32.mrf.mxu0
      %v3589 = vadd.f32 %v3238, %v3588
      %v3590 = vpop.f32.mrf.mxu0
      %v3591 = vadd.f32 %v3238, %v3590
      %3592 = vmatprep.mubr.bf16.mxu0 %v3409
      %3593 = vmatmul.mubr.bf16.gmra.mxu0 %v3408
      %v3594 = vpop.f32.mrf.mxu0
      %v3595 = vadd.f32 %v3243, %v3594
      %v3596 = vpop.f32.mrf.mxu0
      %v3597 = vadd.f32 %v3243, %v3596
      %v3598 = vpop.f32.mrf.mxu0
      %v3599 = vadd.f32 %v3248, %v3598
      %v3600 = vpop.f32.mrf.mxu0
      %v3601 = vadd.f32 %v3248, %v3600
      %3602 = vmatprep.mubr.bf16.mxu0 %v3411
      %3603 = vmatmul.mubr.bf16.gmra.mxu0 %v3410
      %v3604 = vpop.f32.mrf.mxu0
      %v3605 = vadd.f32 %v3253, %v3604
      %v3606 = vpop.f32.mrf.mxu0
      %v3607 = vadd.f32 %v3253, %v3606
      %v3608 = vpop.f32.mrf.mxu0
      %v3609 = vadd.f32 %v3258, %v3608
      %v3610 = vpop.f32.mrf.mxu0
      %v3611 = vadd.f32 %v3258, %v3610
      %3612 = vmatprep.mubr.bf16.mxu0 %v3413
      %3613 = vmatmul.mubr.bf16.gmra.mxu0 %v3412
      %v3614 = vpop.f32.mrf.mxu0
      %v3615 = vadd.f32 %v3263, %v3614
      %v3616 = vpop.f32.mrf.mxu0
      %v3617 = vadd.f32 %v3263, %v3616
      %v3618 = vpop.f32.mrf.mxu0
      %v3619 = vadd.f32 %v3268, %v3618
      %v3620 = vpop.f32.mrf.mxu0
      %v3621 = vadd.f32 %v3268, %v3620
      %3622 = vmatprep.mubr.bf16.mxu0 %v3415
      %3623 = vmatmul.mubr.bf16.gmra.mxu0 %v3414
      %v3624 = vpop.f32.mrf.mxu0
      %v3625 = vadd.f32 %v3273, %v3624
      %v3626 = vpop.f32.mrf.mxu0
      %v3627 = vadd.f32 %v3273, %v3626
      %v3628 = vpop.f32.mrf.mxu0
      %v3629 = vadd.f32 %v3278, %v3628
      %v3630 = vpop.f32.mrf.mxu0
      %v3631 = vadd.f32 %v3278, %v3630
      %3632 = vmatprep.mubr.bf16.mxu0 %v3417
      %3633 = vmatmul.mubr.bf16.gmra.mxu0 %v3416
      %v3634 = vpop.f32.mrf.mxu0
      %v3635 = vadd.f32 %v3283, %v3634
      %v3636 = vpop.f32.mrf.mxu0
      %v3637 = vadd.f32 %v3283, %v3636
      %v3638 = vpop.f32.mrf.mxu0
      %v3639 = vadd.f32 %v3288, %v3638
      %v3640 = vpop.f32.mrf.mxu0
      %v3641 = vadd.f32 %v3288, %v3640
      %3642 = vdwg.mxu0
      %3643 = vmatprep.subr.bf16.mxu0 %v3061
      %3644 = vmatpush1.bf16.msra.mxu0 %v3060
      %3645 = vmatprep.subr.bf16.mxu0 %v3053
      %3646 = vmatpush1.bf16.msra.mxu0 %v3052
      %3647 = vmatprep.subr.bf16.mxu0 %v3045
      %3648 = vmatpush1.bf16.msra.mxu0 %v3044
      %3649 = vmatprep.subr.bf16.mxu0 %v3037
      %3650 = vmatpush1.bf16.msra.mxu0 %v3036
      %3651 = vmatprep.subr.bf16.mxu0 %v3029
      %3652 = vmatpush1.bf16.msra.mxu0 %v3028
      %3653 = vmatprep.subr.bf16.mxu0 %v3021
      %3654 = vmatpush1.bf16.msra.mxu0 %v3020
      %3655 = vmatprep.subr.bf16.mxu0 %v3013
      %3656 = vmatpush1.bf16.msra.mxu0 %v3012
      %3657 = vmatprep.subr.bf16.mxu0 %v3005
      %3658 = vmatpush1.bf16.msra.mxu0 %v3004
      %3659 = vmatprep.subr.bf16.mxu0 %v3125
      %3660 = vmatpush2.bf16.msra.mxu0 %v3124
      %3661 = vmatprep.subr.bf16.mxu0 %v3117
      %3662 = vmatpush2.bf16.msra.mxu0 %v3116
      %3663 = vmatprep.subr.bf16.mxu0 %v3109
      %3664 = vmatpush2.bf16.msra.mxu0 %v3108
      %3665 = vmatprep.subr.bf16.mxu0 %v3101
      %3666 = vmatpush2.bf16.msra.mxu0 %v3100
      %3667 = vmatprep.subr.bf16.mxu0 %v3093
      %3668 = vmatpush2.bf16.msra.mxu0 %v3092
      %3669 = vmatprep.subr.bf16.mxu0 %v3085
      %3670 = vmatpush2.bf16.msra.mxu0 %v3084
      %3671 = vmatprep.subr.bf16.mxu0 %v3077
      %3672 = vmatpush2.bf16.msra.mxu0 %v3076
      %3673 = vmatprep.subr.bf16.mxu0 %v3069
      %3674 = vmatpush2.bf16.msra.mxu0 %v3068
      %3675 = vmatprep.mubr.bf16.mxu0 %v3387
      %3676 = vmatmul.mubr.bf16.gmra.mxu0 %v3386
      %v3677 = vpop.f32.mrf.mxu0
      %v3678 = vadd.f32 %v3133, %v3677
      %v3679 = vpop.f32.mrf.mxu0
      %v3680 = vadd.f32 %v3133, %v3679
      %v3681 = vpop.f32.mrf.mxu0
      %v3682 = vadd.f32 %v3138, %v3681
      %v3683 = vpop.f32.mrf.mxu0
      %v3684 = vadd.f32 %v3138, %v3683
      %3685 = vmatprep.mubr.bf16.mxu0 %v3389
      %3686 = vmatmul.mubr.bf16.gmra.mxu0 %v3388
      %v3687 = vpop.f32.mrf.mxu0
      %v3688 = vadd.f32 %v3143, %v3687
      %v3689 = vpop.f32.mrf.mxu0
      %v3690 = vadd.f32 %v3143, %v3689
      %v3691 = vpop.f32.mrf.mxu0
      %v3692 = vadd.f32 %v3148, %v3691
      %v3693 = vpop.f32.mrf.mxu0
      %v3694 = vadd.f32 %v3148, %v3693
      %3695 = vmatprep.mubr.bf16.mxu0 %v3391
      %3696 = vmatmul.mubr.bf16.gmra.mxu0 %v3390
      %v3697 = vpop.f32.mrf.mxu0
      %v3698 = vadd.f32 %v3153, %v3697
      %v3699 = vpop.f32.mrf.mxu0
      %v3700 = vadd.f32 %v3153, %v3699
      %v3701 = vpop.f32.mrf.mxu0
      %v3702 = vadd.f32 %v3158, %v3701
      %v3703 = vpop.f32.mrf.mxu0
      %v3704 = vadd.f32 %v3158, %v3703
      %3705 = vmatprep.mubr.bf16.mxu0 %v3393
      %3706 = vmatmul.mubr.bf16.gmra.mxu0 %v3392
      %v3707 = vpop.f32.mrf.mxu0
      %v3708 = vadd.f32 %v3163, %v3707
      %v3709 = vpop.f32.mrf.mxu0
      %v3710 = vadd.f32 %v3163, %v3709
      %v3711 = vpop.f32.mrf.mxu0
      %v3712 = vadd.f32 %v3168, %v3711
      %v3713 = vpop.f32.mrf.mxu0
      %v3714 = vadd.f32 %v3168, %v3713
      %3715 = vmatprep.mubr.bf16.mxu0 %v3395
      %3716 = vmatmul.mubr.bf16.gmra.mxu0 %v3394
      %v3717 = vpop.f32.mrf.mxu0
      %v3718 = vadd.f32 %v3173, %v3717
      %v3719 = vpop.f32.mrf.mxu0
      %v3720 = vadd.f32 %v3173, %v3719
      %v3721 = vpop.f32.mrf.mxu0
      %v3722 = vadd.f32 %v3178, %v3721
      %v3723 = vpop.f32.mrf.mxu0
      %v3724 = vadd.f32 %v3178, %v3723
      %3725 = vmatprep.mubr.bf16.mxu0 %v3397
      %3726 = vmatmul.mubr.bf16.gmra.mxu0 %v3396
      %v3727 = vpop.f32.mrf.mxu0
      %v3728 = vadd.f32 %v3183, %v3727
      %v3729 = vpop.f32.mrf.mxu0
      %v3730 = vadd.f32 %v3183, %v3729
      %v3731 = vpop.f32.mrf.mxu0
      %v3732 = vadd.f32 %v3188, %v3731
      %v3733 = vpop.f32.mrf.mxu0
      %v3734 = vadd.f32 %v3188, %v3733
      %3735 = vmatprep.mubr.bf16.mxu0 %v3399
      %3736 = vmatmul.mubr.bf16.gmra.mxu0 %v3398
      %v3737 = vpop.f32.mrf.mxu0
      %v3738 = vadd.f32 %v3193, %v3737
      %v3739 = vpop.f32.mrf.mxu0
      %v3740 = vadd.f32 %v3193, %v3739
      %v3741 = vpop.f32.mrf.mxu0
      %v3742 = vadd.f32 %v3198, %v3741
      %v3743 = vpop.f32.mrf.mxu0
      %v3744 = vadd.f32 %v3198, %v3743
      %3745 = vmatprep.mubr.bf16.mxu0 %v3401
      %3746 = vmatmul.mubr.bf16.gmra.mxu0 %v3400
      %v3747 = vpop.f32.mrf.mxu0
      %v3748 = vadd.f32 %v3203, %v3747
      %v3749 = vpop.f32.mrf.mxu0
      %v3750 = vadd.f32 %v3203, %v3749
      %v3751 = vpop.f32.mrf.mxu0
      %v3752 = vadd.f32 %v3208, %v3751
      %v3753 = vpop.f32.mrf.mxu0
      %v3754 = vadd.f32 %v3208, %v3753
      %3755 = vmatprep.mubr.bf16.mxu0 %v3403
      %3756 = vmatmul.mubr.bf16.gmra.mxu0 %v3402
      %v3757 = vpop.f32.mrf.mxu0
      %v3758 = vadd.f32 %v3213, %v3757
      %v3759 = vpop.f32.mrf.mxu0
      %v3760 = vadd.f32 %v3213, %v3759
      %v3761 = vpop.f32.mrf.mxu0
      %v3762 = vadd.f32 %v3218, %v3761
      %v3763 = vpop.f32.mrf.mxu0
      %v3764 = vadd.f32 %v3218, %v3763
      %3765 = vmatprep.mubr.bf16.mxu0 %v3405
      %3766 = vmatmul.mubr.bf16.gmra.mxu0 %v3404
      %v3767 = vpop.f32.mrf.mxu0
      %v3768 = vadd.f32 %v3223, %v3767
      %v3769 = vpop.f32.mrf.mxu0
      %v3770 = vadd.f32 %v3223, %v3769
      %v3771 = vpop.f32.mrf.mxu0
      %v3772 = vadd.f32 %v3228, %v3771
      %v3773 = vpop.f32.mrf.mxu0
      %v3774 = vadd.f32 %v3228, %v3773
      %3775 = vmatprep.mubr.bf16.mxu0 %v3407
      %3776 = vmatmul.mubr.bf16.gmra.mxu0 %v3406
      %v3777 = vpop.f32.mrf.mxu0
      %v3778 = vadd.f32 %v3233, %v3777
      %v3779 = vpop.f32.mrf.mxu0
      %v3780 = vadd.f32 %v3233, %v3779
      %v3781 = vpop.f32.mrf.mxu0
      %v3782 = vadd.f32 %v3238, %v3781
      %v3783 = vpop.f32.mrf.mxu0
      %v3784 = vadd.f32 %v3238, %v3783
      %3785 = vmatprep.mubr.bf16.mxu0 %v3409
      %3786 = vmatmul.mubr.bf16.gmra.mxu0 %v3408
      %v3787 = vpop.f32.mrf.mxu0
      %v3788 = vadd.f32 %v3243, %v3787
      %v3789 = vpop.f32.mrf.mxu0
      %v3790 = vadd.f32 %v3243, %v3789
      %v3791 = vpop.f32.mrf.mxu0
      %v3792 = vadd.f32 %v3248, %v3791
      %v3793 = vpop.f32.mrf.mxu0
      %v3794 = vadd.f32 %v3248, %v3793
      %3795 = vmatprep.mubr.bf16.mxu0 %v3411
      %3796 = vmatmul.mubr.bf16.gmra.mxu0 %v3410
      %v3797 = vpop.f32.mrf.mxu0
      %v3798 = vadd.f32 %v3253, %v3797
      %v3799 = vpop.f32.mrf.mxu0
      %v3800 = vadd.f32 %v3253, %v3799
      %v3801 = vpop.f32.mrf.mxu0
      %v3802 = vadd.f32 %v3258, %v3801
      %v3803 = vpop.f32.mrf.mxu0
      %v3804 = vadd.f32 %v3258, %v3803
      %3805 = vmatprep.mubr.bf16.mxu0 %v3413
      %3806 = vmatmul.mubr.bf16.gmra.mxu0 %v3412
      %v3807 = vpop.f32.mrf.mxu0
      %v3808 = vadd.f32 %v3263, %v3807
      %v3809 = vpop.f32.mrf.mxu0
      %v3810 = vadd.f32 %v3263, %v3809
      %v3811 = vpop.f32.mrf.mxu0
      %v3812 = vadd.f32 %v3268, %v3811
      %v3813 = vpop.f32.mrf.mxu0
      %v3814 = vadd.f32 %v3268, %v3813
      %3815 = vmatprep.mubr.bf16.mxu0 %v3415
      %3816 = vmatmul.mubr.bf16.gmra.mxu0 %v3414
      %v3817 = vpop.f32.mrf.mxu0
      %v3818 = vadd.f32 %v3273, %v3817
      %v3819 = vpop.f32.mrf.mxu0
      %v3820 = vadd.f32 %v3273, %v3819
      %v3821 = vpop.f32.mrf.mxu0
      %v3822 = vadd.f32 %v3278, %v3821
      %v3823 = vpop.f32.mrf.mxu0
      %v3824 = vadd.f32 %v3278, %v3823
      %3825 = vmatprep.mubr.bf16.mxu0 %v3417
      %3826 = vmatmul.mubr.bf16.gmra.mxu0 %v3416
      %v3827 = vpop.f32.mrf.mxu0
      %v3828 = vadd.f32 %v3283, %v3827
      %v3829 = vpop.f32.mrf.mxu0
      %v3830 = vadd.f32 %v3283, %v3829
      %v3831 = vpop.f32.mrf.mxu0
      %v3832 = vadd.f32 %v3288, %v3831
      %v3833 = vpop.f32.mrf.mxu0
      %v3834 = vadd.f32 %v3288, %v3833
      %3835 = vdwg.mxu0
      %3836 = vmatprep.subr.bf16.mxu0 %v3063
      %3837 = vmatpush1.bf16.msra.mxu0 %v3062
      %3838 = vmatprep.subr.bf16.mxu0 %v3055
      %3839 = vmatpush1.bf16.msra.mxu0 %v3054
      %3840 = vmatprep.subr.bf16.mxu0 %v3047
      %3841 = vmatpush1.bf16.msra.mxu0 %v3046
      %3842 = vmatprep.subr.bf16.mxu0 %v3039
      %3843 = vmatpush1.bf16.msra.mxu0 %v3038
      %3844 = vmatprep.subr.bf16.mxu0 %v3031
      %3845 = vmatpush1.bf16.msra.mxu0 %v3030
      %3846 = vmatprep.subr.bf16.mxu0 %v3023
      %3847 = vmatpush1.bf16.msra.mxu0 %v3022
      %3848 = vmatprep.subr.bf16.mxu0 %v3015
      %3849 = vmatpush1.bf16.msra.mxu0 %v3014
      %3850 = vmatprep.subr.bf16.mxu0 %v3007
      %3851 = vmatpush1.bf16.msra.mxu0 %v3006
      %3852 = vmatprep.subr.bf16.mxu0 %v3127
      %3853 = vmatpush2.bf16.msra.mxu0 %v3126
      %3854 = vmatprep.subr.bf16.mxu0 %v3119
      %3855 = vmatpush2.bf16.msra.mxu0 %v3118
      %3856 = vmatprep.subr.bf16.mxu0 %v3111
      %3857 = vmatpush2.bf16.msra.mxu0 %v3110
      %3858 = vmatprep.subr.bf16.mxu0 %v3103
      %3859 = vmatpush2.bf16.msra.mxu0 %v3102
      %3860 = vmatprep.subr.bf16.mxu0 %v3095
      %3861 = vmatpush2.bf16.msra.mxu0 %v3094
      %3862 = vmatprep.subr.bf16.mxu0 %v3087
      %3863 = vmatpush2.bf16.msra.mxu0 %v3086
      %3864 = vmatprep.subr.bf16.mxu0 %v3079
      %3865 = vmatpush2.bf16.msra.mxu0 %v3078
      %3866 = vmatprep.subr.bf16.mxu0 %v3071
      %3867 = vmatpush2.bf16.msra.mxu0 %v3070
      %3868 = vmatprep.mubr.bf16.mxu0 %v3387
      %3869 = vmatmul.mubr.bf16.gmra.mxu0 %v3386
      %v3870 = vpop.f32.mrf.mxu0
      %v3871 = vadd.f32 %v3133, %v3870
      %v3872 = vpop.f32.mrf.mxu0
      %v3873 = vadd.f32 %v3133, %v3872
      %v3874 = vpop.f32.mrf.mxu0
      %v3875 = vadd.f32 %v3138, %v3874
      %v3876 = vpop.f32.mrf.mxu0
      %v3877 = vadd.f32 %v3138, %v3876
      %3878 = vmatprep.mubr.bf16.mxu0 %v3389
      %3879 = vmatmul.mubr.bf16.gmra.mxu0 %v3388
      %v3880 = vpop.f32.mrf.mxu0
      %v3881 = vadd.f32 %v3143, %v3880
      %v3882 = vpop.f32.mrf.mxu0
      %v3883 = vadd.f32 %v3143, %v3882
      %v3884 = vpop.f32.mrf.mxu0
      %v3885 = vadd.f32 %v3148, %v3884
      %v3886 = vpop.f32.mrf.mxu0
      %v3887 = vadd.f32 %v3148, %v3886
      %3888 = vmatprep.mubr.bf16.mxu0 %v3391
      %3889 = vmatmul.mubr.bf16.gmra.mxu0 %v3390
      %v3890 = vpop.f32.mrf.mxu0
      %v3891 = vadd.f32 %v3153, %v3890
      %v3892 = vpop.f32.mrf.mxu0
      %v3893 = vadd.f32 %v3153, %v3892
      %v3894 = vpop.f32.mrf.mxu0
      %v3895 = vadd.f32 %v3158, %v3894
      %v3896 = vpop.f32.mrf.mxu0
      %v3897 = vadd.f32 %v3158, %v3896
      %3898 = vmatprep.mubr.bf16.mxu0 %v3393
      %3899 = vmatmul.mubr.bf16.gmra.mxu0 %v3392
      %v3900 = vpop.f32.mrf.mxu0
      %v3901 = vadd.f32 %v3163, %v3900
      %v3902 = vpop.f32.mrf.mxu0
      %v3903 = vadd.f32 %v3163, %v3902
      %v3904 = vpop.f32.mrf.mxu0
      %v3905 = vadd.f32 %v3168, %v3904
      %v3906 = vpop.f32.mrf.mxu0
      %v3907 = vadd.f32 %v3168, %v3906
      %3908 = vmatprep.mubr.bf16.mxu0 %v3395
      %3909 = vmatmul.mubr.bf16.gmra.mxu0 %v3394
      %v3910 = vpop.f32.mrf.mxu0
      %v3911 = vadd.f32 %v3173, %v3910
      %v3912 = vpop.f32.mrf.mxu0
      %v3913 = vadd.f32 %v3173, %v3912
      %v3914 = vpop.f32.mrf.mxu0
      %v3915 = vadd.f32 %v3178, %v3914
      %v3916 = vpop.f32.mrf.mxu0
      %v3917 = vadd.f32 %v3178, %v3916
      %3918 = vmatprep.mubr.bf16.mxu0 %v3397
      %3919 = vmatmul.mubr.bf16.gmra.mxu0 %v3396
      %v3920 = vpop.f32.mrf.mxu0
      %v3921 = vadd.f32 %v3183, %v3920
      %v3922 = vpop.f32.mrf.mxu0
      %v3923 = vadd.f32 %v3183, %v3922
      %v3924 = vpop.f32.mrf.mxu0
      %v3925 = vadd.f32 %v3188, %v3924
      %v3926 = vpop.f32.mrf.mxu0
      %v3927 = vadd.f32 %v3188, %v3926
      %3928 = vmatprep.mubr.bf16.mxu0 %v3399
      %3929 = vmatmul.mubr.bf16.gmra.mxu0 %v3398
      %v3930 = vpop.f32.mrf.mxu0
      %v3931 = vadd.f32 %v3193, %v3930
      %v3932 = vpop.f32.mrf.mxu0
      %v3933 = vadd.f32 %v3193, %v3932
      %v3934 = vpop.f32.mrf.mxu0
      %v3935 = vadd.f32 %v3198, %v3934
      %v3936 = vpop.f32.mrf.mxu0
      %v3937 = vadd.f32 %v3198, %v3936
      %3938 = vmatprep.mubr.bf16.mxu0 %v3401
      %3939 = vmatmul.mubr.bf16.gmra.mxu0 %v3400
      %v3940 = vpop.f32.mrf.mxu0
      %v3941 = vadd.f32 %v3203, %v3940
      %v3942 = vpop.f32.mrf.mxu0
      %v3943 = vadd.f32 %v3203, %v3942
      %v3944 = vpop.f32.mrf.mxu0
      %v3945 = vadd.f32 %v3208, %v3944
      %v3946 = vpop.f32.mrf.mxu0
      %v3947 = vadd.f32 %v3208, %v3946
      %3948 = vmatprep.mubr.bf16.mxu0 %v3403
      %3949 = vmatmul.mubr.bf16.gmra.mxu0 %v3402
      %v3950 = vpop.f32.mrf.mxu0
      %v3951 = vadd.f32 %v3213, %v3950
      %v3952 = vpop.f32.mrf.mxu0
      %v3953 = vadd.f32 %v3213, %v3952
      %v3954 = vpop.f32.mrf.mxu0
      %v3955 = vadd.f32 %v3218, %v3954
      %v3956 = vpop.f32.mrf.mxu0
      %v3957 = vadd.f32 %v3218, %v3956
      %3958 = vmatprep.mubr.bf16.mxu0 %v3405
      %3959 = vmatmul.mubr.bf16.gmra.mxu0 %v3404
      %v3960 = vpop.f32.mrf.mxu0
      %v3961 = vadd.f32 %v3223, %v3960
      %v3962 = vpop.f32.mrf.mxu0
      %v3963 = vadd.f32 %v3223, %v3962
      %v3964 = vpop.f32.mrf.mxu0
      %v3965 = vadd.f32 %v3228, %v3964
      %v3966 = vpop.f32.mrf.mxu0
      %v3967 = vadd.f32 %v3228, %v3966
      %3968 = vmatprep.mubr.bf16.mxu0 %v3407
      %3969 = vmatmul.mubr.bf16.gmra.mxu0 %v3406
      %v3970 = vpop.f32.mrf.mxu0
      %v3971 = vadd.f32 %v3233, %v3970
      %v3972 = vpop.f32.mrf.mxu0
      %v3973 = vadd.f32 %v3233, %v3972
      %v3974 = vpop.f32.mrf.mxu0
      %v3975 = vadd.f32 %v3238, %v3974
      %v3976 = vpop.f32.mrf.mxu0
      %v3977 = vadd.f32 %v3238, %v3976
      %3978 = vmatprep.mubr.bf16.mxu0 %v3409
      %3979 = vmatmul.mubr.bf16.gmra.mxu0 %v3408
      %v3980 = vpop.f32.mrf.mxu0
      %v3981 = vadd.f32 %v3243, %v3980
      %v3982 = vpop.f32.mrf.mxu0
      %v3983 = vadd.f32 %v3243, %v3982
      %v3984 = vpop.f32.mrf.mxu0
      %v3985 = vadd.f32 %v3248, %v3984
      %v3986 = vpop.f32.mrf.mxu0
      %v3987 = vadd.f32 %v3248, %v3986
      %3988 = vmatprep.mubr.bf16.mxu0 %v3411
      %3989 = vmatmul.mubr.bf16.gmra.mxu0 %v3410
      %v3990 = vpop.f32.mrf.mxu0
      %v3991 = vadd.f32 %v3253, %v3990
      %v3992 = vpop.f32.mrf.mxu0
      %v3993 = vadd.f32 %v3253, %v3992
      %v3994 = vpop.f32.mrf.mxu0
      %v3995 = vadd.f32 %v3258, %v3994
      %v3996 = vpop.f32.mrf.mxu0
      %v3997 = vadd.f32 %v3258, %v3996
      %3998 = vmatprep.mubr.bf16.mxu0 %v3413
      %3999 = vmatmul.mubr.bf16.gmra.mxu0 %v3412
      %v4000 = vpop.f32.mrf.mxu0
      %v4001 = vadd.f32 %v3263, %v4000
      %v4002 = vpop.f32.mrf.mxu0
      %v4003 = vadd.f32 %v3263, %v4002
      %v4004 = vpop.f32.mrf.mxu0
      %v4005 = vadd.f32 %v3268, %v4004
      %v4006 = vpop.f32.mrf.mxu0
      %v4007 = vadd.f32 %v3268, %v4006
      %4008 = vmatprep.mubr.bf16.mxu0 %v3415
      %4009 = vmatmul.mubr.bf16.gmra.mxu0 %v3414
      %v4010 = vpop.f32.mrf.mxu0
      %v4011 = vadd.f32 %v3273, %v4010
      %v4012 = vpop.f32.mrf.mxu0
      %v4013 = vadd.f32 %v3273, %v4012
      %v4014 = vpop.f32.mrf.mxu0
      %v4015 = vadd.f32 %v3278, %v4014
      %v4016 = vpop.f32.mrf.mxu0
      %v4017 = vadd.f32 %v3278, %v4016
      %4018 = vmatprep.mubr.bf16.mxu0 %v3417
      %4019 = vmatmul.mubr.bf16.gmra.mxu0 %v3416
      %v4020 = vpop.f32.mrf.mxu0
      %v4021 = vadd.f32 %v3283, %v4020
      %v4022 = vpop.f32.mrf.mxu0
      %v4023 = vadd.f32 %v3283, %v4022
      %v4024 = vpop.f32.mrf.mxu0
      %v4025 = vadd.f32 %v3288, %v4024
      %v4026 = vpop.f32.mrf.mxu0
      %v4027 = vadd.f32 %v3288, %v4026
      %4028 = vdwg.mxu0
      %4029 = vmatprep.subr.bf16.mxu0 %v3065
      %4030 = vmatpush1.bf16.msra.mxu0 %v3064
      %4031 = vmatprep.subr.bf16.mxu0 %v3057
      %4032 = vmatpush1.bf16.msra.mxu0 %v3056
      %4033 = vmatprep.subr.bf16.mxu0 %v3049
      %4034 = vmatpush1.bf16.msra.mxu0 %v3048
      %4035 = vmatprep.subr.bf16.mxu0 %v3041
      %4036 = vmatpush1.bf16.msra.mxu0 %v3040
      %4037 = vmatprep.subr.bf16.mxu0 %v3033
      %4038 = vmatpush1.bf16.msra.mxu0 %v3032
      %4039 = vmatprep.subr.bf16.mxu0 %v3025
      %4040 = vmatpush1.bf16.msra.mxu0 %v3024
      %4041 = vmatprep.subr.bf16.mxu0 %v3017
      %4042 = vmatpush1.bf16.msra.mxu0 %v3016
      %4043 = vmatprep.subr.bf16.mxu0 %v3009
      %4044 = vmatpush1.bf16.msra.mxu0 %v3008
      %4045 = vmatprep.subr.bf16.mxu0 %v3129
      %4046 = vmatpush2.bf16.msra.mxu0 %v3128
      %4047 = vmatprep.subr.bf16.mxu0 %v3121
      %4048 = vmatpush2.bf16.msra.mxu0 %v3120
      %4049 = vmatprep.subr.bf16.mxu0 %v3113
      %4050 = vmatpush2.bf16.msra.mxu0 %v3112
      %4051 = vmatprep.subr.bf16.mxu0 %v3105
      %4052 = vmatpush2.bf16.msra.mxu0 %v3104
      %4053 = vmatprep.subr.bf16.mxu0 %v3097
      %4054 = vmatpush2.bf16.msra.mxu0 %v3096
      %4055 = vmatprep.subr.bf16.mxu0 %v3089
      %4056 = vmatpush2.bf16.msra.mxu0 %v3088
      %4057 = vmatprep.subr.bf16.mxu0 %v3081
      %4058 = vmatpush2.bf16.msra.mxu0 %v3080
      %4059 = vmatprep.subr.bf16.mxu0 %v3073
      %4060 = vmatpush2.bf16.msra.mxu0 %v3072
      %4061 = vmatprep.mubr.bf16.mxu0 %v3387
      %4062 = vmatmul.mubr.bf16.gmra.mxu0 %v3386
      %v4063 = vpop.f32.mrf.mxu0
      %v4064 = vadd.f32 %v3133, %v4063
      %v4065 = vpop.f32.mrf.mxu0
      %v4066 = vadd.f32 %v3133, %v4065
      %v4067 = vpop.f32.mrf.mxu0
      %v4068 = vadd.f32 %v3138, %v4067
      %v4069 = vpop.f32.mrf.mxu0
      %v4070 = vadd.f32 %v3138, %v4069
      %4071 = vmatprep.mubr.bf16.mxu0 %v3389
      %4072 = vmatmul.mubr.bf16.gmra.mxu0 %v3388
      %v4073 = vpop.f32.mrf.mxu0
      %v4074 = vadd.f32 %v3143, %v4073
      %v4075 = vpop.f32.mrf.mxu0
      %v4076 = vadd.f32 %v3143, %v4075
      %v4077 = vpop.f32.mrf.mxu0
      %v4078 = vadd.f32 %v3148, %v4077
      %v4079 = vpop.f32.mrf.mxu0
      %v4080 = vadd.f32 %v3148, %v4079
      %4081 = vmatprep.mubr.bf16.mxu0 %v3391
      %4082 = vmatmul.mubr.bf16.gmra.mxu0 %v3390
      %v4083 = vpop.f32.mrf.mxu0
      %v4084 = vadd.f32 %v3153, %v4083
      %v4085 = vpop.f32.mrf.mxu0
      %v4086 = vadd.f32 %v3153, %v4085
      %v4087 = vpop.f32.mrf.mxu0
      %v4088 = vadd.f32 %v3158, %v4087
      %v4089 = vpop.f32.mrf.mxu0
      %v4090 = vadd.f32 %v3158, %v4089
      %4091 = vmatprep.mubr.bf16.mxu0 %v3393
      %4092 = vmatmul.mubr.bf16.gmra.mxu0 %v3392
      %v4093 = vpop.f32.mrf.mxu0
      %v4094 = vadd.f32 %v3163, %v4093
      %v4095 = vpop.f32.mrf.mxu0
      %v4096 = vadd.f32 %v3163, %v4095
      %v4097 = vpop.f32.mrf.mxu0
      %v4098 = vadd.f32 %v3168, %v4097
      %v4099 = vpop.f32.mrf.mxu0
      %v4100 = vadd.f32 %v3168, %v4099
      %4101 = vmatprep.mubr.bf16.mxu0 %v3395
      %4102 = vmatmul.mubr.bf16.gmra.mxu0 %v3394
      %v4103 = vpop.f32.mrf.mxu0
      %v4104 = vadd.f32 %v3173, %v4103
      %v4105 = vpop.f32.mrf.mxu0
      %v4106 = vadd.f32 %v3173, %v4105
      %v4107 = vpop.f32.mrf.mxu0
      %v4108 = vadd.f32 %v3178, %v4107
      %v4109 = vpop.f32.mrf.mxu0
      %v4110 = vadd.f32 %v3178, %v4109
      %4111 = vmatprep.mubr.bf16.mxu0 %v3397
      %4112 = vmatmul.mubr.bf16.gmra.mxu0 %v3396
      %v4113 = vpop.f32.mrf.mxu0
      %v4114 = vadd.f32 %v3183, %v4113
      %v4115 = vpop.f32.mrf.mxu0
      %v4116 = vadd.f32 %v3183, %v4115
      %v4117 = vpop.f32.mrf.mxu0
      %v4118 = vadd.f32 %v3188, %v4117
      %v4119 = vpop.f32.mrf.mxu0
      %v4120 = vadd.f32 %v3188, %v4119
      %4121 = vmatprep.mubr.bf16.mxu0 %v3399
      %4122 = vmatmul.mubr.bf16.gmra.mxu0 %v3398
      %v4123 = vpop.f32.mrf.mxu0
      %v4124 = vadd.f32 %v3193, %v4123
      %v4125 = vpop.f32.mrf.mxu0
      %v4126 = vadd.f32 %v3193, %v4125
      %v4127 = vpop.f32.mrf.mxu0
      %v4128 = vadd.f32 %v3198, %v4127
      %v4129 = vpop.f32.mrf.mxu0
      %v4130 = vadd.f32 %v3198, %v4129
      %4131 = vmatprep.mubr.bf16.mxu0 %v3401
      %4132 = vmatmul.mubr.bf16.gmra.mxu0 %v3400
      %v4133 = vpop.f32.mrf.mxu0
      %v4134 = vadd.f32 %v3203, %v4133
      %v4135 = vpop.f32.mrf.mxu0
      %v4136 = vadd.f32 %v3203, %v4135
      %v4137 = vpop.f32.mrf.mxu0
      %v4138 = vadd.f32 %v3208, %v4137
      %v4139 = vpop.f32.mrf.mxu0
      %v4140 = vadd.f32 %v3208, %v4139
      %4141 = vmatprep.mubr.bf16.mxu0 %v3403
      %4142 = vmatmul.mubr.bf16.gmra.mxu0 %v3402
      %v4143 = vpop.f32.mrf.mxu0
      %v4144 = vadd.f32 %v3213, %v4143
      %v4145 = vpop.f32.mrf.mxu0
      %v4146 = vadd.f32 %v3213, %v4145
      %v4147 = vpop.f32.mrf.mxu0
      %v4148 = vadd.f32 %v3218, %v4147
      %v4149 = vpop.f32.mrf.mxu0
      %v4150 = vadd.f32 %v3218, %v4149
      %4151 = vmatprep.mubr.bf16.mxu0 %v3405
      %4152 = vmatmul.mubr.bf16.gmra.mxu0 %v3404
      %v4153 = vpop.f32.mrf.mxu0
      %v4154 = vadd.f32 %v3223, %v4153
      %v4155 = vpop.f32.mrf.mxu0
      %v4156 = vadd.f32 %v3223, %v4155
      %v4157 = vpop.f32.mrf.mxu0
      %v4158 = vadd.f32 %v3228, %v4157
      %v4159 = vpop.f32.mrf.mxu0
      %v4160 = vadd.f32 %v3228, %v4159
      %4161 = vmatprep.mubr.bf16.mxu0 %v3407
      %4162 = vmatmul.mubr.bf16.gmra.mxu0 %v3406
      %v4163 = vpop.f32.mrf.mxu0
      %v4164 = vadd.f32 %v3233, %v4163
      %v4165 = vpop.f32.mrf.mxu0
      %v4166 = vadd.f32 %v3233, %v4165
      %v4167 = vpop.f32.mrf.mxu0
      %v4168 = vadd.f32 %v3238, %v4167
      %v4169 = vpop.f32.mrf.mxu0
      %v4170 = vadd.f32 %v3238, %v4169
      %4171 = vmatprep.mubr.bf16.mxu0 %v3409
      %4172 = vmatmul.mubr.bf16.gmra.mxu0 %v3408
      %v4173 = vpop.f32.mrf.mxu0
      %v4174 = vadd.f32 %v3243, %v4173
      %v4175 = vpop.f32.mrf.mxu0
      %v4176 = vadd.f32 %v3243, %v4175
      %v4177 = vpop.f32.mrf.mxu0
      %v4178 = vadd.f32 %v3248, %v4177
      %v4179 = vpop.f32.mrf.mxu0
      %v4180 = vadd.f32 %v3248, %v4179
      %4181 = vmatprep.mubr.bf16.mxu0 %v3411
      %4182 = vmatmul.mubr.bf16.gmra.mxu0 %v3410
      %v4183 = vpop.f32.mrf.mxu0
      %v4184 = vadd.f32 %v3253, %v4183
      %v4185 = vpop.f32.mrf.mxu0
      %v4186 = vadd.f32 %v3253, %v4185
      %v4187 = vpop.f32.mrf.mxu0
      %v4188 = vadd.f32 %v3258, %v4187
      %v4189 = vpop.f32.mrf.mxu0
      %v4190 = vadd.f32 %v3258, %v4189
      %4191 = vmatprep.mubr.bf16.mxu0 %v3413
      %4192 = vmatmul.mubr.bf16.gmra.mxu0 %v3412
      %v4193 = vpop.f32.mrf.mxu0
      %v4194 = vadd.f32 %v3263, %v4193
      %v4195 = vpop.f32.mrf.mxu0
      %v4196 = vadd.f32 %v3263, %v4195
      %v4197 = vpop.f32.mrf.mxu0
      %v4198 = vadd.f32 %v3268, %v4197
      %v4199 = vpop.f32.mrf.mxu0
      %v4200 = vadd.f32 %v3268, %v4199
      %4201 = vmatprep.mubr.bf16.mxu0 %v3415
      %4202 = vmatmul.mubr.bf16.gmra.mxu0 %v3414
      %v4203 = vpop.f32.mrf.mxu0
      %v4204 = vadd.f32 %v3273, %v4203
      %v4205 = vpop.f32.mrf.mxu0
      %v4206 = vadd.f32 %v3273, %v4205
      %v4207 = vpop.f32.mrf.mxu0
      %v4208 = vadd.f32 %v3278, %v4207
      %v4209 = vpop.f32.mrf.mxu0
      %v4210 = vadd.f32 %v3278, %v4209
      %4211 = vmatprep.mubr.bf16.mxu0 %v3417
      %4212 = vmatmul.mubr.bf16.gmra.mxu0 %v3416
      %v4213 = vpop.f32.mrf.mxu0
      %v4214 = vadd.f32 %v3283, %v4213
      %v4215 = vpop.f32.mrf.mxu0
      %v4216 = vadd.f32 %v3283, %v4215
      %v4217 = vpop.f32.mrf.mxu0
      %v4218 = vadd.f32 %v3288, %v4217
      %v4219 = vpop.f32.mrf.mxu0
      %v4220 = vadd.f32 %v3288, %v4219
      %4221 = vdwg.mxu0
      %v4222 = vtanh.pop %v3485
      %v4223 = vtanh.pop %v3487
      %v4224 = vtanh.pop %v3678
      %v4225 = vtanh.pop %v3680
      %v4226 = vtanh.pop %v3871
      %v4227 = vtanh.pop %v3873
      %v4228 = vtanh.pop %v4064
      %v4229 = vtanh.pop %v4066
      %v4230 = vtanh.pop %v3489
      %v4231 = vtanh.pop %v3491
      %v4232 = vtanh.pop %v3682
      %v4233 = vtanh.pop %v3684
      %v4234 = vtanh.pop %v3875
      %v4235 = vtanh.pop %v3877
      %v4236 = vtanh.pop %v4068
      %v4237 = vtanh.pop %v4070
      %v4238 = vtanh.pop %v3495
      %v4239 = vtanh.pop %v3497
      %v4240 = vtanh.pop %v3688
      %v4241 = vtanh.pop %v3690
      %v4242 = vtanh.pop %v3881
      %v4243 = vtanh.pop %v3883
      %v4244 = vtanh.pop %v4074
      %v4245 = vtanh.pop %v4076
      %v4246 = vtanh.pop %v3499
      %v4247 = vtanh.pop %v3501
      %v4248 = vtanh.pop %v3692
      %v4249 = vtanh.pop %v3694
      %v4250 = vtanh.pop %v3885
      %v4251 = vtanh.pop %v3887
      %v4252 = vtanh.pop %v4078
      %v4253 = vtanh.pop %v4080
      %v4254 = vtanh.pop %v3505
      %v4255 = vtanh.pop %v3507
      %v4256 = vtanh.pop %v3698
      %v4257 = vtanh.pop %v3700
      %v4258 = vtanh.pop %v3891
      %v4259 = vtanh.pop %v3893
      %v4260 = vtanh.pop %v4084
      %v4261 = vtanh.pop %v4086
      %v4262 = vtanh.pop %v3509
      %v4263 = vtanh.pop %v3511
      %v4264 = vtanh.pop %v3702
      %v4265 = vtanh.pop %v3704
      %v4266 = vtanh.pop %v3895
      %v4267 = vtanh.pop %v3897
      %v4268 = vtanh.pop %v4088
      %v4269 = vtanh.pop %v4090
      %v4270 = vtanh.pop %v3515
      %v4271 = vtanh.pop %v3517
      %v4272 = vtanh.pop %v3708
      %v4273 = vtanh.pop %v3710
      %v4274 = vtanh.pop %v3901
      %v4275 = vtanh.pop %v3903
      %v4276 = vtanh.pop %v4094
      %v4277 = vtanh.pop %v4096
      %v4278 = vtanh.pop %v3519
      %v4279 = vtanh.pop %v3521
      %v4280 = vtanh.pop %v3712
      %v4281 = vtanh.pop %v3714
      %v4282 = vtanh.pop %v3905
      %v4283 = vtanh.pop %v3907
      %v4284 = vtanh.pop %v4098
      %v4285 = vtanh.pop %v4100
      %v4286 = vtanh.pop %v3525
      %v4287 = vtanh.pop %v3527
      %v4288 = vtanh.pop %v3718
      %v4289 = vtanh.pop %v3720
      %v4290 = vtanh.pop %v3911
      %v4291 = vtanh.pop %v3913
      %v4292 = vtanh.pop %v4104
      %v4293 = vtanh.pop %v4106
      %v4294 = vtanh.pop %v3529
      %v4295 = vtanh.pop %v3531
      %v4296 = vtanh.pop %v3722
      %v4297 = vtanh.pop %v3724
      %v4298 = vtanh.pop %v3915
      %v4299 = vtanh.pop %v3917
      %v4300 = vtanh.pop %v4108
      %v4301 = vtanh.pop %v4110
      %v4302 = vtanh.pop %v3535
      %v4303 = vtanh.pop %v3537
      %v4304 = vtanh.pop %v3728
      %v4305 = vtanh.pop %v3730
      %v4306 = vtanh.pop %v3921
      %v4307 = vtanh.pop %v3923
      %v4308 = vtanh.pop %v4114
      %v4309 = vtanh.pop %v4116
      %v4310 = vtanh.pop %v3539
      %v4311 = vtanh.pop %v3541
      %v4312 = vtanh.pop %v3732
      %v4313 = vtanh.pop %v3734
      %v4314 = vtanh.pop %v3925
      %v4315 = vtanh.pop %v3927
      %v4316 = vtanh.pop %v4118
      %v4317 = vtanh.pop %v4120
      %v4318 = vtanh.pop %v3545
      %v4319 = vtanh.pop %v3547
      %v4320 = vtanh.pop %v3738
      %v4321 = vtanh.pop %v3740
      %v4322 = vtanh.pop %v3931
      %v4323 = vtanh.pop %v3933
      %v4324 = vtanh.pop %v4124
      %v4325 = vtanh.pop %v4126
      %v4326 = vtanh.pop %v3549
      %v4327 = vtanh.pop %v3551
      %v4328 = vtanh.pop %v3742
      %v4329 = vtanh.pop %v3744
      %v4330 = vtanh.pop %v3935
      %v4331 = vtanh.pop %v3937
      %v4332 = vtanh.pop %v4128
      %v4333 = vtanh.pop %v4130
      %v4334 = vtanh.pop %v3555
      %v4335 = vtanh.pop %v3557
      %v4336 = vtanh.pop %v3748
      %v4337 = vtanh.pop %v3750
      %v4338 = vtanh.pop %v3941
      %v4339 = vtanh.pop %v3943
      %v4340 = vtanh.pop %v4134
      %v4341 = vtanh.pop %v4136
      %v4342 = vtanh.pop %v3559
      %v4343 = vtanh.pop %v3561
      %v4344 = vtanh.pop %v3752
      %v4345 = vtanh.pop %v3754
      %v4346 = vtanh.pop %v3945
      %v4347 = vtanh.pop %v3947
      %v4348 = vtanh.pop %v4138
      %v4349 = vtanh.pop %v4140
      %v4350 = vtanh.pop %v3565
      %v4351 = vtanh.pop %v3567
      %v4352 = vtanh.pop %v3758
      %v4353 = vtanh.pop %v3760
      %v4354 = vtanh.pop %v3951
      %v4355 = vtanh.pop %v3953
      %v4356 = vtanh.pop %v4144
      %v4357 = vtanh.pop %v4146
      %v4358 = vtanh.pop %v3569
      %v4359 = vtanh.pop %v3571
      %v4360 = vtanh.pop %v3762
      %v4361 = vtanh.pop %v3764
      %v4362 = vtanh.pop %v3955
      %v4363 = vtanh.pop %v3957
      %v4364 = vtanh.pop %v4148
      %v4365 = vtanh.pop %v4150
      %v4366 = vtanh.pop %v3575
      %v4367 = vtanh.pop %v3577
      %v4368 = vtanh.pop %v3768
      %v4369 = vtanh.pop %v3770
      %v4370 = vtanh.pop %v3961
      %v4371 = vtanh.pop %v3963
      %v4372 = vtanh.pop %v4154
      %v4373 = vtanh.pop %v4156
      %v4374 = vtanh.pop %v3579
      %v4375 = vtanh.pop %v3581
      %v4376 = vtanh.pop %v3772
      %v4377 = vtanh.pop %v3774
      %v4378 = vtanh.pop %v3965
      %v4379 = vtanh.pop %v3967
      %v4380 = vtanh.pop %v4158
      %v4381 = vtanh.pop %v4160
      %v4382 = vtanh.pop %v3585
      %v4383 = vtanh.pop %v3587
      %v4384 = vtanh.pop %v3778
      %v4385 = vtanh.pop %v3780
      %v4386 = vtanh.pop %v3971
      %v4387 = vtanh.pop %v3973
      %v4388 = vtanh.pop %v4164
      %v4389 = vtanh.pop %v4166
      %v4390 = vtanh.pop %v3589
      %v4391 = vtanh.pop %v3591
      %v4392 = vtanh.pop %v3782
      %v4393 = vtanh.pop %v3784
      %v4394 = vtanh.pop %v3975
      %v4395 = vtanh.pop %v3977
      %v4396 = vtanh.pop %v4168
      %v4397 = vtanh.pop %v4170
      %v4398 = vtanh.pop %v3595
      %v4399 = vtanh.pop %v3597
      %v4400 = vtanh.pop %v3788
      %v4401 = vtanh.pop %v3790
      %v4402 = vtanh.pop %v3981
      %v4403 = vtanh.pop %v3983
      %v4404 = vtanh.pop %v4174
      %v4405 = vtanh.pop %v4176
      %v4406 = vtanh.pop %v3599
      %v4407 = vtanh.pop %v3601
      %v4408 = vtanh.pop %v3792
      %v4409 = vtanh.pop %v3794
      %v4410 = vtanh.pop %v3985
      %v4411 = vtanh.pop %v3987
      %v4412 = vtanh.pop %v4178
      %v4413 = vtanh.pop %v4180
      %v4414 = vtanh.pop %v3605
      %v4415 = vtanh.pop %v3607
      %v4416 = vtanh.pop %v3798
      %v4417 = vtanh.pop %v3800
      %v4418 = vtanh.pop %v3991
      %v4419 = vtanh.pop %v3993
      %v4420 = vtanh.pop %v4184
      %v4421 = vtanh.pop %v4186
      %v4422 = vtanh.pop %v3609
      %v4423 = vtanh.pop %v3611
      %v4424 = vtanh.pop %v3802
      %v4425 = vtanh.pop %v3804
      %v4426 = vtanh.pop %v3995
      %v4427 = vtanh.pop %v3997
      %v4428 = vtanh.pop %v4188
      %v4429 = vtanh.pop %v4190
      %v4430 = vtanh.pop %v3615
      %v4431 = vtanh.pop %v3617
      %v4432 = vtanh.pop %v3808
      %v4433 = vtanh.pop %v3810
      %v4434 = vtanh.pop %v4001
      %v4435 = vtanh.pop %v4003
      %v4436 = vtanh.pop %v4194
      %v4437 = vtanh.pop %v4196
      %v4438 = vtanh.pop %v3619
      %v4439 = vtanh.pop %v3621
      %v4440 = vtanh.pop %v3812
      %v4441 = vtanh.pop %v3814
      %v4442 = vtanh.pop %v4005
      %v4443 = vtanh.pop %v4007
      %v4444 = vtanh.pop %v4198
      %v4445 = vtanh.pop %v4200
      %v4446 = vtanh.pop %v3625
      %v4447 = vtanh.pop %v3627
      %v4448 = vtanh.pop %v3818
      %v4449 = vtanh.pop %v3820
      %v4450 = vtanh.pop %v4011
      %v4451 = vtanh.pop %v4013
      %v4452 = vtanh.pop %v4204
      %v4453 = vtanh.pop %v4206
      %v4454 = vtanh.pop %v3629
      %v4455 = vtanh.pop %v3631
      %v4456 = vtanh.pop %v3822
      %v4457 = vtanh.pop %v3824
      %v4458 = vtanh.pop %v4015
      %v4459 = vtanh.pop %v4017
      %v4460 = vtanh.pop %v4208
      %v4461 = vtanh.pop %v4210
      %v4462 = vtanh.pop %v3635
      %v4463 = vtanh.pop %v3637
      %v4464 = vtanh.pop %v3828
      %v4465 = vtanh.pop %v3830
      %v4466 = vtanh.pop %v4021
      %v4467 = vtanh.pop %v4023
      %v4468 = vtanh.pop %v4214
      %v4469 = vtanh.pop %v4216
      %v4470 = vtanh.pop %v3639
      %v4471 = vtanh.pop %v3641
      %v4472 = vtanh.pop %v3832
      %v4473 = vtanh.pop %v3834
      %v4474 = vtanh.pop %v4025
      %v4475 = vtanh.pop %v4027
      %v4476 = vtanh.pop %v4218
      %v4477 = vtanh.pop %v4220
      %v4478 = vpack.c.bf16 %v4230, %v4222
      %v4479 = vpack.c.bf16 %v4231, %v4223
      %v4480 = vpack.c.bf16 %v4232, %v4224
      %v4481 = vpack.c.bf16 %v4233, %v4225
      %v4482 = vpack.c.bf16 %v4234, %v4226
      %v4483 = vpack.c.bf16 %v4235, %v4227
      %v4484 = vpack.c.bf16 %v4236, %v4228
      %v4485 = vpack.c.bf16 %v4237, %v4229
      %v4486 = vpack.c.bf16 %v4246, %v4238
      %v4487 = vpack.c.bf16 %v4247, %v4239
      %v4488 = vpack.c.bf16 %v4248, %v4240
      %v4489 = vpack.c.bf16 %v4249, %v4241
      %v4490 = vpack.c.bf16 %v4250, %v4242
      %v4491 = vpack.c.bf16 %v4251, %v4243
      %v4492 = vpack.c.bf16 %v4252, %v4244
      %v4493 = vpack.c.bf16 %v4253, %v4245
      %v4494 = vpack.c.bf16 %v4262, %v4254
      %v4495 = vpack.c.bf16 %v4263, %v4255
      %v4496 = vpack.c.bf16 %v4264, %v4256
      %v4497 = vpack.c.bf16 %v4265, %v4257
      %v4498 = vpack.c.bf16 %v4266, %v4258
      %v4499 = vpack.c.bf16 %v4267, %v4259
      %v4500 = vpack.c.bf16 %v4268, %v4260
      %v4501 = vpack.c.bf16 %v4269, %v4261
      %v4502 = vpack.c.bf16 %v4278, %v4270
      %v4503 = vpack.c.bf16 %v4279, %v4271
      %v4504 = vpack.c.bf16 %v4280, %v4272
      %v4505 = vpack.c.bf16 %v4281, %v4273
      %v4506 = vpack.c.bf16 %v4282, %v4274
      %v4507 = vpack.c.bf16 %v4283, %v4275
      %v4508 = vpack.c.bf16 %v4284, %v4276
      %v4509 = vpack.c.bf16 %v4285, %v4277
      %v4510 = vpack.c.bf16 %v4294, %v4286
      %v4511 = vpack.c.bf16 %v4295, %v4287
      %v4512 = vpack.c.bf16 %v4296, %v4288
      %v4513 = vpack.c.bf16 %v4297, %v4289
      %v4514 = vpack.c.bf16 %v4298, %v4290
      %v4515 = vpack.c.bf16 %v4299, %v4291
      %v4516 = vpack.c.bf16 %v4300, %v4292
      %v4517 = vpack.c.bf16 %v4301, %v4293
      %v4518 = vpack.c.bf16 %v4310, %v4302
      %v4519 = vpack.c.bf16 %v4311, %v4303
      %v4520 = vpack.c.bf16 %v4312, %v4304
      %v4521 = vpack.c.bf16 %v4313, %v4305
      %v4522 = vpack.c.bf16 %v4314, %v4306
      %v4523 = vpack.c.bf16 %v4315, %v4307
      %v4524 = vpack.c.bf16 %v4316, %v4308
      %v4525 = vpack.c.bf16 %v4317, %v4309
      %v4526 = vpack.c.bf16 %v4326, %v4318
      %v4527 = vpack.c.bf16 %v4327, %v4319
      %v4528 = vpack.c.bf16 %v4328, %v4320
      %v4529 = vpack.c.bf16 %v4329, %v4321
      %v4530 = vpack.c.bf16 %v4330, %v4322
      %v4531 = vpack.c.bf16 %v4331, %v4323
      %v4532 = vpack.c.bf16 %v4332, %v4324
      %v4533 = vpack.c.bf16 %v4333, %v4325
      %v4534 = vpack.c.bf16 %v4342, %v4334
      %v4535 = vpack.c.bf16 %v4343, %v4335
      %v4536 = vpack.c.bf16 %v4344, %v4336
      %v4537 = vpack.c.bf16 %v4345, %v4337
      %v4538 = vpack.c.bf16 %v4346, %v4338
      %v4539 = vpack.c.bf16 %v4347, %v4339
      %v4540 = vpack.c.bf16 %v4348, %v4340
      %v4541 = vpack.c.bf16 %v4349, %v4341
      %v4542 = vpack.c.bf16 %v4358, %v4350
      %v4543 = vpack.c.bf16 %v4359, %v4351
      %v4544 = vpack.c.bf16 %v4360, %v4352
      %v4545 = vpack.c.bf16 %v4361, %v4353
      %v4546 = vpack.c.bf16 %v4362, %v4354
      %v4547 = vpack.c.bf16 %v4363, %v4355
      %v4548 = vpack.c.bf16 %v4364, %v4356
      %v4549 = vpack.c.bf16 %v4365, %v4357
      %v4550 = vpack.c.bf16 %v4374, %v4366
      %v4551 = vpack.c.bf16 %v4375, %v4367
      %v4552 = vpack.c.bf16 %v4376, %v4368
      %v4553 = vpack.c.bf16 %v4377, %v4369
      %v4554 = vpack.c.bf16 %v4378, %v4370
      %v4555 = vpack.c.bf16 %v4379, %v4371
      %v4556 = vpack.c.bf16 %v4380, %v4372
      %v4557 = vpack.c.bf16 %v4381, %v4373
      %v4558 = vpack.c.bf16 %v4390, %v4382
      %v4559 = vpack.c.bf16 %v4391, %v4383
      %v4560 = vpack.c.bf16 %v4392, %v4384
      %v4561 = vpack.c.bf16 %v4393, %v4385
      %v4562 = vpack.c.bf16 %v4394, %v4386
      %v4563 = vpack.c.bf16 %v4395, %v4387
      %v4564 = vpack.c.bf16 %v4396, %v4388
      %v4565 = vpack.c.bf16 %v4397, %v4389
      %v4566 = vpack.c.bf16 %v4406, %v4398
      %v4567 = vpack.c.bf16 %v4407, %v4399
      %v4568 = vpack.c.bf16 %v4408, %v4400
      %v4569 = vpack.c.bf16 %v4409, %v4401
      %v4570 = vpack.c.bf16 %v4410, %v4402
      %v4571 = vpack.c.bf16 %v4411, %v4403
      %v4572 = vpack.c.bf16 %v4412, %v4404
      %v4573 = vpack.c.bf16 %v4413, %v4405
      %v4574 = vpack.c.bf16 %v4422, %v4414
      %v4575 = vpack.c.bf16 %v4423, %v4415
      %v4576 = vpack.c.bf16 %v4424, %v4416
      %v4577 = vpack.c.bf16 %v4425, %v4417
      %v4578 = vpack.c.bf16 %v4426, %v4418
      %v4579 = vpack.c.bf16 %v4427, %v4419
      %v4580 = vpack.c.bf16 %v4428, %v4420
      %v4581 = vpack.c.bf16 %v4429, %v4421
      %v4582 = vpack.c.bf16 %v4438, %v4430
      %v4583 = vpack.c.bf16 %v4439, %v4431
      %v4584 = vpack.c.bf16 %v4440, %v4432
      %v4585 = vpack.c.bf16 %v4441, %v4433
      %v4586 = vpack.c.bf16 %v4442, %v4434
      %v4587 = vpack.c.bf16 %v4443, %v4435
      %v4588 = vpack.c.bf16 %v4444, %v4436
      %v4589 = vpack.c.bf16 %v4445, %v4437
      %v4590 = vpack.c.bf16 %v4454, %v4446
      %v4591 = vpack.c.bf16 %v4455, %v4447
      %v4592 = vpack.c.bf16 %v4456, %v4448
      %v4593 = vpack.c.bf16 %v4457, %v4449
      %v4594 = vpack.c.bf16 %v4458, %v4450
      %v4595 = vpack.c.bf16 %v4459, %v4451
      %v4596 = vpack.c.bf16 %v4460, %v4452
      %v4597 = vpack.c.bf16 %v4461, %v4453
      %v4598 = vpack.c.bf16 %v4470, %v4462
      %v4599 = vpack.c.bf16 %v4471, %v4463
      %v4600 = vpack.c.bf16 %v4472, %v4464
      %v4601 = vpack.c.bf16 %v4473, %v4465
      %v4602 = vpack.c.bf16 %v4474, %v4466
      %v4603 = vpack.c.bf16 %v4475, %v4467
      %v4604 = vpack.c.bf16 %v4476, %v4468
      %v4605 = vpack.c.bf16 %v4477, %v4469
      %4606 = vmatprep.subr.bf16.mxu0 %v4535
      %4607 = vmatpush1.bf16.msra.mxu0 %v4534
      %4608 = vmatprep.subr.bf16.mxu0 %v4527
      %4609 = vmatpush1.bf16.msra.mxu0 %v4526
      %4610 = vmatprep.subr.bf16.mxu0 %v4519
      %4611 = vmatpush1.bf16.msra.mxu0 %v4518
      %4612 = vmatprep.subr.bf16.mxu0 %v4511
      %4613 = vmatpush1.bf16.msra.mxu0 %v4510
      %4614 = vmatprep.subr.bf16.mxu0 %v4503
      %4615 = vmatpush1.bf16.msra.mxu0 %v4502
      %4616 = vmatprep.subr.bf16.mxu0 %v4495
      %4617 = vmatpush1.bf16.msra.mxu0 %v4494
      %4618 = vmatprep.subr.bf16.mxu0 %v4487
      %4619 = vmatpush1.bf16.msra.mxu0 %v4486
      %4620 = vmatprep.subr.bf16.mxu0 %v4479
      %4621 = vmatpush1.bf16.msra.mxu0 %v4478
      %4622 = vmatprep.subr.bf16.mxu0 %v4599
      %4623 = vmatpush2.bf16.msra.mxu0 %v4598
      %4624 = vmatprep.subr.bf16.mxu0 %v4591
      %4625 = vmatpush2.bf16.msra.mxu0 %v4590
      %4626 = vmatprep.subr.bf16.mxu0 %v4583
      %4627 = vmatpush2.bf16.msra.mxu0 %v4582
      %4628 = vmatprep.subr.bf16.mxu0 %v4575
      %4629 = vmatpush2.bf16.msra.mxu0 %v4574
      %4630 = vmatprep.subr.bf16.mxu0 %v4567
      %4631 = vmatpush2.bf16.msra.mxu0 %v4566
      %4632 = vmatprep.subr.bf16.mxu0 %v4559
      %4633 = vmatpush2.bf16.msra.mxu0 %v4558
      %4634 = vmatprep.subr.bf16.mxu0 %v4551
      %4635 = vmatpush2.bf16.msra.mxu0 %v4550
      %4636 = vmatprep.subr.bf16.mxu0 %v4543
      %4637 = vmatpush2.bf16.msra.mxu0 %v4542
      %4638 = vmatprep.mubr.bf16.mxu0 %v3387
      %4639 = vmatmul.mubr.bf16.gmra.mxu0 %v3386
      %v4640 = vpop.f32.mrf.mxu0
      %v4641 = vadd.f32 %v3133, %v4640
      %v4642 = vpop.f32.mrf.mxu0
      %v4643 = vadd.f32 %v3133, %v4642
      %v4644 = vpop.f32.mrf.mxu0
      %v4645 = vadd.f32 %v3138, %v4644
      %v4646 = vpop.f32.mrf.mxu0
      %v4647 = vadd.f32 %v3138, %v4646
      %4648 = vmatprep.mubr.bf16.mxu0 %v3389
      %4649 = vmatmul.mubr.bf16.gmra.mxu0 %v3388
      %v4650 = vpop.f32.mrf.mxu0
      %v4651 = vadd.f32 %v3143, %v4650
      %v4652 = vpop.f32.mrf.mxu0
      %v4653 = vadd.f32 %v3143, %v4652
      %v4654 = vpop.f32.mrf.mxu0
      %v4655 = vadd.f32 %v3148, %v4654
      %v4656 = vpop.f32.mrf.mxu0
      %v4657 = vadd.f32 %v3148, %v4656
      %4658 = vmatprep.mubr.bf16.mxu0 %v3391
      %4659 = vmatmul.mubr.bf16.gmra.mxu0 %v3390
      %v4660 = vpop.f32.mrf.mxu0
      %v4661 = vadd.f32 %v3153, %v4660
      %v4662 = vpop.f32.mrf.mxu0
      %v4663 = vadd.f32 %v3153, %v4662
      %v4664 = vpop.f32.mrf.mxu0
      %v4665 = vadd.f32 %v3158, %v4664
      %v4666 = vpop.f32.mrf.mxu0
      %v4667 = vadd.f32 %v3158, %v4666
      %4668 = vmatprep.mubr.bf16.mxu0 %v3393
      %4669 = vmatmul.mubr.bf16.gmra.mxu0 %v3392
      %v4670 = vpop.f32.mrf.mxu0
      %v4671 = vadd.f32 %v3163, %v4670
      %v4672 = vpop.f32.mrf.mxu0
      %v4673 = vadd.f32 %v3163, %v4672
      %v4674 = vpop.f32.mrf.mxu0
      %v4675 = vadd.f32 %v3168, %v4674
      %v4676 = vpop.f32.mrf.mxu0
      %v4677 = vadd.f32 %v3168, %v4676
      %4678 = vmatprep.mubr.bf16.mxu0 %v3395
      %4679 = vmatmul.mubr.bf16.gmra.mxu0 %v3394
      %v4680 = vpop.f32.mrf.mxu0
      %v4681 = vadd.f32 %v3173, %v4680
      %v4682 = vpop.f32.mrf.mxu0
      %v4683 = vadd.f32 %v3173, %v4682
      %v4684 = vpop.f32.mrf.mxu0
      %v4685 = vadd.f32 %v3178, %v4684
      %v4686 = vpop.f32.mrf.mxu0
      %v4687 = vadd.f32 %v3178, %v4686
      %4688 = vmatprep.mubr.bf16.mxu0 %v3397
      %4689 = vmatmul.mubr.bf16.gmra.mxu0 %v3396
      %v4690 = vpop.f32.mrf.mxu0
      %v4691 = vadd.f32 %v3183, %v4690
      %v4692 = vpop.f32.mrf.mxu0
      %v4693 = vadd.f32 %v3183, %v4692
      %v4694 = vpop.f32.mrf.mxu0
      %v4695 = vadd.f32 %v3188, %v4694
      %v4696 = vpop.f32.mrf.mxu0
      %v4697 = vadd.f32 %v3188, %v4696
      %4698 = vmatprep.mubr.bf16.mxu0 %v3399
      %4699 = vmatmul.mubr.bf16.gmra.mxu0 %v3398
      %v4700 = vpop.f32.mrf.mxu0
      %v4701 = vadd.f32 %v3193, %v4700
      %v4702 = vpop.f32.mrf.mxu0
      %v4703 = vadd.f32 %v3193, %v4702
      %v4704 = vpop.f32.mrf.mxu0
      %v4705 = vadd.f32 %v3198, %v4704
      %v4706 = vpop.f32.mrf.mxu0
      %v4707 = vadd.f32 %v3198, %v4706
      %4708 = vmatprep.mubr.bf16.mxu0 %v3401
      %4709 = vmatmul.mubr.bf16.gmra.mxu0 %v3400
      %v4710 = vpop.f32.mrf.mxu0
      %v4711 = vadd.f32 %v3203, %v4710
      %v4712 = vpop.f32.mrf.mxu0
      %v4713 = vadd.f32 %v3203, %v4712
      %v4714 = vpop.f32.mrf.mxu0
      %v4715 = vadd.f32 %v3208, %v4714
      %v4716 = vpop.f32.mrf.mxu0
      %v4717 = vadd.f32 %v3208, %v4716
      %4718 = vmatprep.mubr.bf16.mxu0 %v3403
      %4719 = vmatmul.mubr.bf16.gmra.mxu0 %v3402
      %v4720 = vpop.f32.mrf.mxu0
      %v4721 = vadd.f32 %v3213, %v4720
      %v4722 = vpop.f32.mrf.mxu0
      %v4723 = vadd.f32 %v3213, %v4722
      %v4724 = vpop.f32.mrf.mxu0
      %v4725 = vadd.f32 %v3218, %v4724
      %v4726 = vpop.f32.mrf.mxu0
      %v4727 = vadd.f32 %v3218, %v4726
      %4728 = vmatprep.mubr.bf16.mxu0 %v3405
      %4729 = vmatmul.mubr.bf16.gmra.mxu0 %v3404
      %v4730 = vpop.f32.mrf.mxu0
      %v4731 = vadd.f32 %v3223, %v4730
      %v4732 = vpop.f32.mrf.mxu0
      %v4733 = vadd.f32 %v3223, %v4732
      %v4734 = vpop.f32.mrf.mxu0
      %v4735 = vadd.f32 %v3228, %v4734
      %v4736 = vpop.f32.mrf.mxu0
      %v4737 = vadd.f32 %v3228, %v4736
      %4738 = vmatprep.mubr.bf16.mxu0 %v3407
      %4739 = vmatmul.mubr.bf16.gmra.mxu0 %v3406
      %v4740 = vpop.f32.mrf.mxu0
      %v4741 = vadd.f32 %v3233, %v4740
      %v4742 = vpop.f32.mrf.mxu0
      %v4743 = vadd.f32 %v3233, %v4742
      %v4744 = vpop.f32.mrf.mxu0
      %v4745 = vadd.f32 %v3238, %v4744
      %v4746 = vpop.f32.mrf.mxu0
      %v4747 = vadd.f32 %v3238, %v4746
      %4748 = vmatprep.mubr.bf16.mxu0 %v3409
      %4749 = vmatmul.mubr.bf16.gmra.mxu0 %v3408
      %v4750 = vpop.f32.mrf.mxu0
      %v4751 = vadd.f32 %v3243, %v4750
      %v4752 = vpop.f32.mrf.mxu0
      %v4753 = vadd.f32 %v3243, %v4752
      %v4754 = vpop.f32.mrf.mxu0
      %v4755 = vadd.f32 %v3248, %v4754
      %v4756 = vpop.f32.mrf.mxu0
      %v4757 = vadd.f32 %v3248, %v4756
      %4758 = vmatprep.mubr.bf16.mxu0 %v3411
      %4759 = vmatmul.mubr.bf16.gmra.mxu0 %v3410
      %v4760 = vpop.f32.mrf.mxu0
      %v4761 = vadd.f32 %v3253, %v4760
      %v4762 = vpop.f32.mrf.mxu0
      %v4763 = vadd.f32 %v3253, %v4762
      %v4764 = vpop.f32.mrf.mxu0
      %v4765 = vadd.f32 %v3258, %v4764
      %v4766 = vpop.f32.mrf.mxu0
      %v4767 = vadd.f32 %v3258, %v4766
      %4768 = vmatprep.mubr.bf16.mxu0 %v3413
      %4769 = vmatmul.mubr.bf16.gmra.mxu0 %v3412
      %v4770 = vpop.f32.mrf.mxu0
      %v4771 = vadd.f32 %v3263, %v4770
      %v4772 = vpop.f32.mrf.mxu0
      %v4773 = vadd.f32 %v3263, %v4772
      %v4774 = vpop.f32.mrf.mxu0
      %v4775 = vadd.f32 %v3268, %v4774
      %v4776 = vpop.f32.mrf.mxu0
      %v4777 = vadd.f32 %v3268, %v4776
      %4778 = vmatprep.mubr.bf16.mxu0 %v3415
      %4779 = vmatmul.mubr.bf16.gmra.mxu0 %v3414
      %v4780 = vpop.f32.mrf.mxu0
      %v4781 = vadd.f32 %v3273, %v4780
      %v4782 = vpop.f32.mrf.mxu0
      %v4783 = vadd.f32 %v3273, %v4782
      %v4784 = vpop.f32.mrf.mxu0
      %v4785 = vadd.f32 %v3278, %v4784
      %v4786 = vpop.f32.mrf.mxu0
      %v4787 = vadd.f32 %v3278, %v4786
      %4788 = vmatprep.mubr.bf16.mxu0 %v3417
      %4789 = vmatmul.mubr.bf16.gmra.mxu0 %v3416
      %v4790 = vpop.f32.mrf.mxu0
      %v4791 = vadd.f32 %v3283, %v4790
      %v4792 = vpop.f32.mrf.mxu0
      %v4793 = vadd.f32 %v3283, %v4792
      %v4794 = vpop.f32.mrf.mxu0
      %v4795 = vadd.f32 %v3288, %v4794
      %v4796 = vpop.f32.mrf.mxu0
      %v4797 = vadd.f32 %v3288, %v4796
      %4798 = vdwg.mxu0
      %4799 = vmatprep.subr.bf16.mxu0 %v4537
      %4800 = vmatpush1.bf16.msra.mxu0 %v4536
      %4801 = vmatprep.subr.bf16.mxu0 %v4529
      %4802 = vmatpush1.bf16.msra.mxu0 %v4528
      %4803 = vmatprep.subr.bf16.mxu0 %v4521
      %4804 = vmatpush1.bf16.msra.mxu0 %v4520
      %4805 = vmatprep.subr.bf16.mxu0 %v4513
      %4806 = vmatpush1.bf16.msra.mxu0 %v4512
      %4807 = vmatprep.subr.bf16.mxu0 %v4505
      %4808 = vmatpush1.bf16.msra.mxu0 %v4504
      %4809 = vmatprep.subr.bf16.mxu0 %v4497
      %4810 = vmatpush1.bf16.msra.mxu0 %v4496
      %4811 = vmatprep.subr.bf16.mxu0 %v4489
      %4812 = vmatpush1.bf16.msra.mxu0 %v4488
      %4813 = vmatprep.subr.bf16.mxu0 %v4481
      %4814 = vmatpush1.bf16.msra.mxu0 %v4480
      %4815 = vmatprep.subr.bf16.mxu0 %v4601
      %4816 = vmatpush2.bf16.msra.mxu0 %v4600
      %4817 = vmatprep.subr.bf16.mxu0 %v4593
      %4818 = vmatpush2.bf16.msra.mxu0 %v4592
      %4819 = vmatprep.subr.bf16.mxu0 %v4585
      %4820 = vmatpush2.bf16.msra.mxu0 %v4584
      %4821 = vmatprep.subr.bf16.mxu0 %v4577
      %4822 = vmatpush2.bf16.msra.mxu0 %v4576
      %4823 = vmatprep.subr.bf16.mxu0 %v4569
      %4824 = vmatpush2.bf16.msra.mxu0 %v4568
      %4825 = vmatprep.subr.bf16.mxu0 %v4561
      %4826 = vmatpush2.bf16.msra.mxu0 %v4560
      %4827 = vmatprep.subr.bf16.mxu0 %v4553
      %4828 = vmatpush2.bf16.msra.mxu0 %v4552
      %4829 = vmatprep.subr.bf16.mxu0 %v4545
      %4830 = vmatpush2.bf16.msra.mxu0 %v4544
      %4831 = vmatprep.mubr.bf16.mxu0 %v3387
      %4832 = vmatmul.mubr.bf16.gmra.mxu0 %v3386
      %v4833 = vpop.f32.mrf.mxu0
      %v4834 = vadd.f32 %v3133, %v4833
      %v4835 = vpop.f32.mrf.mxu0
      %v4836 = vadd.f32 %v3133, %v4835
      %v4837 = vpop.f32.mrf.mxu0
      %v4838 = vadd.f32 %v3138, %v4837
      %v4839 = vpop.f32.mrf.mxu0
      %v4840 = vadd.f32 %v3138, %v4839
      %4841 = vmatprep.mubr.bf16.mxu0 %v3389
      %4842 = vmatmul.mubr.bf16.gmra.mxu0 %v3388
      %v4843 = vpop.f32.mrf.mxu0
      %v4844 = vadd.f32 %v3143, %v4843
      %v4845 = vpop.f32.mrf.mxu0
      %v4846 = vadd.f32 %v3143, %v4845
      %v4847 = vpop.f32.mrf.mxu0
      %v4848 = vadd.f32 %v3148, %v4847
      %v4849 = vpop.f32.mrf.mxu0
      %v4850 = vadd.f32 %v3148, %v4849
      %4851 = vmatprep.mubr.bf16.mxu0 %v3391
      %4852 = vmatmul.mubr.bf16.gmra.mxu0 %v3390
      %v4853 = vpop.f32.mrf.mxu0
      %v4854 = vadd.f32 %v3153, %v4853
      %v4855 = vpop.f32.mrf.mxu0
      %v4856 = vadd.f32 %v3153, %v4855
      %v4857 = vpop.f32.mrf.mxu0
      %v4858 = vadd.f32 %v3158, %v4857
      %v4859 = vpop.f32.mrf.mxu0
      %v4860 = vadd.f32 %v3158, %v4859
      %4861 = vmatprep.mubr.bf16.mxu0 %v3393
      %4862 = vmatmul.mubr.bf16.gmra.mxu0 %v3392
      %v4863 = vpop.f32.mrf.mxu0
      %v4864 = vadd.f32 %v3163, %v4863
      %v4865 = vpop.f32.mrf.mxu0
      %v4866 = vadd.f32 %v3163, %v4865
      %v4867 = vpop.f32.mrf.mxu0
      %v4868 = vadd.f32 %v3168, %v4867
      %v4869 = vpop.f32.mrf.mxu0
      %v4870 = vadd.f32 %v3168, %v4869
      %4871 = vmatprep.mubr.bf16.mxu0 %v3395
      %4872 = vmatmul.mubr.bf16.gmra.mxu0 %v3394
      %v4873 = vpop.f32.mrf.mxu0
      %v4874 = vadd.f32 %v3173, %v4873
      %v4875 = vpop.f32.mrf.mxu0
      %v4876 = vadd.f32 %v3173, %v4875
      %v4877 = vpop.f32.mrf.mxu0
      %v4878 = vadd.f32 %v3178, %v4877
      %v4879 = vpop.f32.mrf.mxu0
      %v4880 = vadd.f32 %v3178, %v4879
      %4881 = vmatprep.mubr.bf16.mxu0 %v3397
      %4882 = vmatmul.mubr.bf16.gmra.mxu0 %v3396
      %v4883 = vpop.f32.mrf.mxu0
      %v4884 = vadd.f32 %v3183, %v4883
      %v4885 = vpop.f32.mrf.mxu0
      %v4886 = vadd.f32 %v3183, %v4885
      %v4887 = vpop.f32.mrf.mxu0
      %v4888 = vadd.f32 %v3188, %v4887
      %v4889 = vpop.f32.mrf.mxu0
      %v4890 = vadd.f32 %v3188, %v4889
      %4891 = vmatprep.mubr.bf16.mxu0 %v3399
      %4892 = vmatmul.mubr.bf16.gmra.mxu0 %v3398
      %v4893 = vpop.f32.mrf.mxu0
      %v4894 = vadd.f32 %v3193, %v4893
      %v4895 = vpop.f32.mrf.mxu0
      %v4896 = vadd.f32 %v3193, %v4895
      %v4897 = vpop.f32.mrf.mxu0
      %v4898 = vadd.f32 %v3198, %v4897
      %v4899 = vpop.f32.mrf.mxu0
      %v4900 = vadd.f32 %v3198, %v4899
      %4901 = vmatprep.mubr.bf16.mxu0 %v3401
      %4902 = vmatmul.mubr.bf16.gmra.mxu0 %v3400
      %v4903 = vpop.f32.mrf.mxu0
      %v4904 = vadd.f32 %v3203, %v4903
      %v4905 = vpop.f32.mrf.mxu0
      %v4906 = vadd.f32 %v3203, %v4905
      %v4907 = vpop.f32.mrf.mxu0
      %v4908 = vadd.f32 %v3208, %v4907
      %v4909 = vpop.f32.mrf.mxu0
      %v4910 = vadd.f32 %v3208, %v4909
      %4911 = vmatprep.mubr.bf16.mxu0 %v3403
      %4912 = vmatmul.mubr.bf16.gmra.mxu0 %v3402
      %v4913 = vpop.f32.mrf.mxu0
      %v4914 = vadd.f32 %v3213, %v4913
      %v4915 = vpop.f32.mrf.mxu0
      %v4916 = vadd.f32 %v3213, %v4915
      %v4917 = vpop.f32.mrf.mxu0
      %v4918 = vadd.f32 %v3218, %v4917
      %v4919 = vpop.f32.mrf.mxu0
      %v4920 = vadd.f32 %v3218, %v4919
      %4921 = vmatprep.mubr.bf16.mxu0 %v3405
      %4922 = vmatmul.mubr.bf16.gmra.mxu0 %v3404
      %v4923 = vpop.f32.mrf.mxu0
      %v4924 = vadd.f32 %v3223, %v4923
      %v4925 = vpop.f32.mrf.mxu0
      %v4926 = vadd.f32 %v3223, %v4925
      %v4927 = vpop.f32.mrf.mxu0
      %v4928 = vadd.f32 %v3228, %v4927
      %v4929 = vpop.f32.mrf.mxu0
      %v4930 = vadd.f32 %v3228, %v4929
      %4931 = vmatprep.mubr.bf16.mxu0 %v3407
      %4932 = vmatmul.mubr.bf16.gmra.mxu0 %v3406
      %v4933 = vpop.f32.mrf.mxu0
      %v4934 = vadd.f32 %v3233, %v4933
      %v4935 = vpop.f32.mrf.mxu0
      %v4936 = vadd.f32 %v3233, %v4935
      %v4937 = vpop.f32.mrf.mxu0
      %v4938 = vadd.f32 %v3238, %v4937
      %v4939 = vpop.f32.mrf.mxu0
      %v4940 = vadd.f32 %v3238, %v4939
      %4941 = vmatprep.mubr.bf16.mxu0 %v3409
      %4942 = vmatmul.mubr.bf16.gmra.mxu0 %v3408
      %v4943 = vpop.f32.mrf.mxu0
      %v4944 = vadd.f32 %v3243, %v4943
      %v4945 = vpop.f32.mrf.mxu0
      %v4946 = vadd.f32 %v3243, %v4945
      %v4947 = vpop.f32.mrf.mxu0
      %v4948 = vadd.f32 %v3248, %v4947
      %v4949 = vpop.f32.mrf.mxu0
      %v4950 = vadd.f32 %v3248, %v4949
      %4951 = vmatprep.mubr.bf16.mxu0 %v3411
      %4952 = vmatmul.mubr.bf16.gmra.mxu0 %v3410
      %v4953 = vpop.f32.mrf.mxu0
      %v4954 = vadd.f32 %v3253, %v4953
      %v4955 = vpop.f32.mrf.mxu0
      %v4956 = vadd.f32 %v3253, %v4955
      %v4957 = vpop.f32.mrf.mxu0
      %v4958 = vadd.f32 %v3258, %v4957
      %v4959 = vpop.f32.mrf.mxu0
      %v4960 = vadd.f32 %v3258, %v4959
      %4961 = vmatprep.mubr.bf16.mxu0 %v3413
      %4962 = vmatmul.mubr.bf16.gmra.mxu0 %v3412
      %v4963 = vpop.f32.mrf.mxu0
      %v4964 = vadd.f32 %v3263, %v4963
      %v4965 = vpop.f32.mrf.mxu0
      %v4966 = vadd.f32 %v3263, %v4965
      %v4967 = vpop.f32.mrf.mxu0
      %v4968 = vadd.f32 %v3268, %v4967
      %v4969 = vpop.f32.mrf.mxu0
      %v4970 = vadd.f32 %v3268, %v4969
      %4971 = vmatprep.mubr.bf16.mxu0 %v3415
      %4972 = vmatmul.mubr.bf16.gmra.mxu0 %v3414
      %v4973 = vpop.f32.mrf.mxu0
      %v4974 = vadd.f32 %v3273, %v4973
      %v4975 = vpop.f32.mrf.mxu0
      %v4976 = vadd.f32 %v3273, %v4975
      %v4977 = vpop.f32.mrf.mxu0
      %v4978 = vadd.f32 %v3278, %v4977
      %v4979 = vpop.f32.mrf.mxu0
      %v4980 = vadd.f32 %v3278, %v4979
      %4981 = vmatprep.mubr.bf16.mxu0 %v3417
      %4982 = vmatmul.mubr.bf16.gmra.mxu0 %v3416
      %v4983 = vpop.f32.mrf.mxu0
      %v4984 = vadd.f32 %v3283, %v4983
      %v4985 = vpop.f32.mrf.mxu0
      %v4986 = vadd.f32 %v3283, %v4985
      %v4987 = vpop.f32.mrf.mxu0
      %v4988 = vadd.f32 %v3288, %v4987
      %v4989 = vpop.f32.mrf.mxu0
      %v4990 = vadd.f32 %v3288, %v4989
      %4991 = vdwg.mxu0
      %4992 = vmatprep.subr.bf16.mxu0 %v4539
      %4993 = vmatpush1.bf16.msra.mxu0 %v4538
      %4994 = vmatprep.subr.bf16.mxu0 %v4531
      %4995 = vmatpush1.bf16.msra.mxu0 %v4530
      %4996 = vmatprep.subr.bf16.mxu0 %v4523
      %4997 = vmatpush1.bf16.msra.mxu0 %v4522
      %4998 = vmatprep.subr.bf16.mxu0 %v4515
      %4999 = vmatpush1.bf16.msra.mxu0 %v4514
      %5000 = vmatprep.subr.bf16.mxu0 %v4507
      %5001 = vmatpush1.bf16.msra.mxu0 %v4506
      %5002 = vmatprep.subr.bf16.mxu0 %v4499
      %5003 = vmatpush1.bf16.msra.mxu0 %v4498
      %5004 = vmatprep.subr.bf16.mxu0 %v4491
      %5005 = vmatpush1.bf16.msra.mxu0 %v4490
      %5006 = vmatprep.subr.bf16.mxu0 %v4483
      %5007 = vmatpush1.bf16.msra.mxu0 %v4482
      %5008 = vmatprep.subr.bf16.mxu0 %v4603
      %5009 = vmatpush2.bf16.msra.mxu0 %v4602
      %5010 = vmatprep.subr.bf16.mxu0 %v4595
      %5011 = vmatpush2.bf16.msra.mxu0 %v4594
      %5012 = vmatprep.subr.bf16.mxu0 %v4587
      %5013 = vmatpush2.bf16.msra.mxu0 %v4586
      %5014 = vmatprep.subr.bf16.mxu0 %v4579
      %5015 = vmatpush2.bf16.msra.mxu0 %v4578
      %5016 = vmatprep.subr.bf16.mxu0 %v4571
      %5017 = vmatpush2.bf16.msra.mxu0 %v4570
      %5018 = vmatprep.subr.bf16.mxu0 %v4563
      %5019 = vmatpush2.bf16.msra.mxu0 %v4562
      %5020 = vmatprep.subr.bf16.mxu0 %v4555
      %5021 = vmatpush2.bf16.msra.mxu0 %v4554
      %5022 = vmatprep.subr.bf16.mxu0 %v4547
      %5023 = vmatpush2.bf16.msra.mxu0 %v4546
      %5024 = vmatprep.mubr.bf16.mxu0 %v3387
      %5025 = vmatmul.mubr.bf16.gmra.mxu0 %v3386
      %v5026 = vpop.f32.mrf.mxu0
      %v5027 = vadd.f32 %v3133, %v5026
      %v5028 = vpop.f32.mrf.mxu0
      %v5029 = vadd.f32 %v3133, %v5028
      %v5030 = vpop.f32.mrf.mxu0
      %v5031 = vadd.f32 %v3138, %v5030
      %v5032 = vpop.f32.mrf.mxu0
      %v5033 = vadd.f32 %v3138, %v5032
      %5034 = vmatprep.mubr.bf16.mxu0 %v3389
      %5035 = vmatmul.mubr.bf16.gmra.mxu0 %v3388
      %v5036 = vpop.f32.mrf.mxu0
      %v5037 = vadd.f32 %v3143, %v5036
      %v5038 = vpop.f32.mrf.mxu0
      %v5039 = vadd.f32 %v3143, %v5038
      %v5040 = vpop.f32.mrf.mxu0
      %v5041 = vadd.f32 %v3148, %v5040
      %v5042 = vpop.f32.mrf.mxu0
      %v5043 = vadd.f32 %v3148, %v5042
      %5044 = vmatprep.mubr.bf16.mxu0 %v3391
      %5045 = vmatmul.mubr.bf16.gmra.mxu0 %v3390
      %v5046 = vpop.f32.mrf.mxu0
      %v5047 = vadd.f32 %v3153, %v5046
      %v5048 = vpop.f32.mrf.mxu0
      %v5049 = vadd.f32 %v3153, %v5048
      %v5050 = vpop.f32.mrf.mxu0
      %v5051 = vadd.f32 %v3158, %v5050
      %v5052 = vpop.f32.mrf.mxu0
      %v5053 = vadd.f32 %v3158, %v5052
      %5054 = vmatprep.mubr.bf16.mxu0 %v3393
      %5055 = vmatmul.mubr.bf16.gmra.mxu0 %v3392
      %v5056 = vpop.f32.mrf.mxu0
      %v5057 = vadd.f32 %v3163, %v5056
      %v5058 = vpop.f32.mrf.mxu0
      %v5059 = vadd.f32 %v3163, %v5058
      %v5060 = vpop.f32.mrf.mxu0
      %v5061 = vadd.f32 %v3168, %v5060
      %v5062 = vpop.f32.mrf.mxu0
      %v5063 = vadd.f32 %v3168, %v5062
      %5064 = vmatprep.mubr.bf16.mxu0 %v3395
      %5065 = vmatmul.mubr.bf16.gmra.mxu0 %v3394
      %v5066 = vpop.f32.mrf.mxu0
      %v5067 = vadd.f32 %v3173, %v5066
      %v5068 = vpop.f32.mrf.mxu0
      %v5069 = vadd.f32 %v3173, %v5068
      %v5070 = vpop.f32.mrf.mxu0
      %v5071 = vadd.f32 %v3178, %v5070
      %v5072 = vpop.f32.mrf.mxu0
      %v5073 = vadd.f32 %v3178, %v5072
      %5074 = vmatprep.mubr.bf16.mxu0 %v3397
      %5075 = vmatmul.mubr.bf16.gmra.mxu0 %v3396
      %v5076 = vpop.f32.mrf.mxu0
      %v5077 = vadd.f32 %v3183, %v5076
      %v5078 = vpop.f32.mrf.mxu0
      %v5079 = vadd.f32 %v3183, %v5078
      %v5080 = vpop.f32.mrf.mxu0
      %v5081 = vadd.f32 %v3188, %v5080
      %v5082 = vpop.f32.mrf.mxu0
      %v5083 = vadd.f32 %v3188, %v5082
      %5084 = vmatprep.mubr.bf16.mxu0 %v3399
      %5085 = vmatmul.mubr.bf16.gmra.mxu0 %v3398
      %v5086 = vpop.f32.mrf.mxu0
      %v5087 = vadd.f32 %v3193, %v5086
      %v5088 = vpop.f32.mrf.mxu0
      %v5089 = vadd.f32 %v3193, %v5088
      %v5090 = vpop.f32.mrf.mxu0
      %v5091 = vadd.f32 %v3198, %v5090
      %v5092 = vpop.f32.mrf.mxu0
      %v5093 = vadd.f32 %v3198, %v5092
      %5094 = vmatprep.mubr.bf16.mxu0 %v3401
      %5095 = vmatmul.mubr.bf16.gmra.mxu0 %v3400
      %v5096 = vpop.f32.mrf.mxu0
      %v5097 = vadd.f32 %v3203, %v5096
      %v5098 = vpop.f32.mrf.mxu0
      %v5099 = vadd.f32 %v3203, %v5098
      %v5100 = vpop.f32.mrf.mxu0
      %v5101 = vadd.f32 %v3208, %v5100
      %v5102 = vpop.f32.mrf.mxu0
      %v5103 = vadd.f32 %v3208, %v5102
      %5104 = vmatprep.mubr.bf16.mxu0 %v3403
      %5105 = vmatmul.mubr.bf16.gmra.mxu0 %v3402
      %v5106 = vpop.f32.mrf.mxu0
      %v5107 = vadd.f32 %v3213, %v5106
      %v5108 = vpop.f32.mrf.mxu0
      %v5109 = vadd.f32 %v3213, %v5108
      %v5110 = vpop.f32.mrf.mxu0
      %v5111 = vadd.f32 %v3218, %v5110
      %v5112 = vpop.f32.mrf.mxu0
      %v5113 = vadd.f32 %v3218, %v5112
      %5114 = vmatprep.mubr.bf16.mxu0 %v3405
      %5115 = vmatmul.mubr.bf16.gmra.mxu0 %v3404
      %v5116 = vpop.f32.mrf.mxu0
      %v5117 = vadd.f32 %v3223, %v5116
      %v5118 = vpop.f32.mrf.mxu0
      %v5119 = vadd.f32 %v3223, %v5118
      %v5120 = vpop.f32.mrf.mxu0
      %v5121 = vadd.f32 %v3228, %v5120
      %v5122 = vpop.f32.mrf.mxu0
      %v5123 = vadd.f32 %v3228, %v5122
      %5124 = vmatprep.mubr.bf16.mxu0 %v3407
      %5125 = vmatmul.mubr.bf16.gmra.mxu0 %v3406
      %v5126 = vpop.f32.mrf.mxu0
      %v5127 = vadd.f32 %v3233, %v5126
      %v5128 = vpop.f32.mrf.mxu0
      %v5129 = vadd.f32 %v3233, %v5128
      %v5130 = vpop.f32.mrf.mxu0
      %v5131 = vadd.f32 %v3238, %v5130
      %v5132 = vpop.f32.mrf.mxu0
      %v5133 = vadd.f32 %v3238, %v5132
      %5134 = vmatprep.mubr.bf16.mxu0 %v3409
      %5135 = vmatmul.mubr.bf16.gmra.mxu0 %v3408
      %v5136 = vpop.f32.mrf.mxu0
      %v5137 = vadd.f32 %v3243, %v5136
      %v5138 = vpop.f32.mrf.mxu0
      %v5139 = vadd.f32 %v3243, %v5138
      %v5140 = vpop.f32.mrf.mxu0
      %v5141 = vadd.f32 %v3248, %v5140
      %v5142 = vpop.f32.mrf.mxu0
      %v5143 = vadd.f32 %v3248, %v5142
      %5144 = vmatprep.mubr.bf16.mxu0 %v3411
      %5145 = vmatmul.mubr.bf16.gmra.mxu0 %v3410
      %v5146 = vpop.f32.mrf.mxu0
      %v5147 = vadd.f32 %v3253, %v5146
      %v5148 = vpop.f32.mrf.mxu0
      %v5149 = vadd.f32 %v3253, %v5148
      %v5150 = vpop.f32.mrf.mxu0
      %v5151 = vadd.f32 %v3258, %v5150
      %v5152 = vpop.f32.mrf.mxu0
      %v5153 = vadd.f32 %v3258, %v5152
      %5154 = vmatprep.mubr.bf16.mxu0 %v3413
      %5155 = vmatmul.mubr.bf16.gmra.mxu0 %v3412
      %v5156 = vpop.f32.mrf.mxu0
      %v5157 = vadd.f32 %v3263, %v5156
      %v5158 = vpop.f32.mrf.mxu0
      %v5159 = vadd.f32 %v3263, %v5158
      %v5160 = vpop.f32.mrf.mxu0
      %v5161 = vadd.f32 %v3268, %v5160
      %v5162 = vpop.f32.mrf.mxu0
      %v5163 = vadd.f32 %v3268, %v5162
      %5164 = vmatprep.mubr.bf16.mxu0 %v3415
      %5165 = vmatmul.mubr.bf16.gmra.mxu0 %v3414
      %v5166 = vpop.f32.mrf.mxu0
      %v5167 = vadd.f32 %v3273, %v5166
      %v5168 = vpop.f32.mrf.mxu0
      %v5169 = vadd.f32 %v3273, %v5168
      %v5170 = vpop.f32.mrf.mxu0
      %v5171 = vadd.f32 %v3278, %v5170
      %v5172 = vpop.f32.mrf.mxu0
      %v5173 = vadd.f32 %v3278, %v5172
      %5174 = vmatprep.mubr.bf16.mxu0 %v3417
      %5175 = vmatmul.mubr.bf16.gmra.mxu0 %v3416
      %v5176 = vpop.f32.mrf.mxu0
      %v5177 = vadd.f32 %v3283, %v5176
      %v5178 = vpop.f32.mrf.mxu0
      %v5179 = vadd.f32 %v3283, %v5178
      %v5180 = vpop.f32.mrf.mxu0
      %v5181 = vadd.f32 %v3288, %v5180
      %v5182 = vpop.f32.mrf.mxu0
      %v5183 = vadd.f32 %v3288, %v5182
      %5184 = vdwg.mxu0
      %5185 = vmatprep.subr.bf16.mxu0 %v4541
      %5186 = vmatpush1.bf16.msra.mxu0 %v4540
      %5187 = vmatprep.subr.bf16.mxu0 %v4533
      %5188 = vmatpush1.bf16.msra.mxu0 %v4532
      %5189 = vmatprep.subr.bf16.mxu0 %v4525
      %5190 = vmatpush1.bf16.msra.mxu0 %v4524
      %5191 = vmatprep.subr.bf16.mxu0 %v4517
      %5192 = vmatpush1.bf16.msra.mxu0 %v4516
      %5193 = vmatprep.subr.bf16.mxu0 %v4509
      %5194 = vmatpush1.bf16.msra.mxu0 %v4508
      %5195 = vmatprep.subr.bf16.mxu0 %v4501
      %5196 = vmatpush1.bf16.msra.mxu0 %v4500
      %5197 = vmatprep.subr.bf16.mxu0 %v4493
      %5198 = vmatpush1.bf16.msra.mxu0 %v4492
      %5199 = vmatprep.subr.bf16.mxu0 %v4485
      %5200 = vmatpush1.bf16.msra.mxu0 %v4484
      %5201 = vmatprep.subr.bf16.mxu0 %v4605
      %5202 = vmatpush2.bf16.msra.mxu0 %v4604
      %5203 = vmatprep.subr.bf16.mxu0 %v4597
      %5204 = vmatpush2.bf16.msra.mxu0 %v4596
      %5205 = vmatprep.subr.bf16.mxu0 %v4589
      %5206 = vmatpush2.bf16.msra.mxu0 %v4588
      %5207 = vmatprep.subr.bf16.mxu0 %v4581
      %5208 = vmatpush2.bf16.msra.mxu0 %v4580
      %5209 = vmatprep.subr.bf16.mxu0 %v4573
      %5210 = vmatpush2.bf16.msra.mxu0 %v4572
      %5211 = vmatprep.subr.bf16.mxu0 %v4565
      %5212 = vmatpush2.bf16.msra.mxu0 %v4564
      %5213 = vmatprep.subr.bf16.mxu0 %v4557
      %5214 = vmatpush2.bf16.msra.mxu0 %v4556
      %5215 = vmatprep.subr.bf16.mxu0 %v4549
      %5216 = vmatpush2.bf16.msra.mxu0 %v4548
      %5217 = vmatprep.mubr.bf16.mxu0 %v3387
      %5218 = vmatmul.mubr.bf16.gmra.mxu0 %v3386
      %v5219 = vpop.f32.mrf.mxu0
      %v5220 = vadd.f32 %v3133, %v5219
      %v5221 = vpop.f32.mrf.mxu0
      %v5222 = vadd.f32 %v3133, %v5221
      %v5223 = vpop.f32.mrf.mxu0
      %v5224 = vadd.f32 %v3138, %v5223
      %v5225 = vpop.f32.mrf.mxu0
      %v5226 = vadd.f32 %v3138, %v5225
      %5227 = vmatprep.mubr.bf16.mxu0 %v3389
      %5228 = vmatmul.mubr.bf16.gmra.mxu0 %v3388
      %v5229 = vpop.f32.mrf.mxu0
      %v5230 = vadd.f32 %v3143, %v5229
      %v5231 = vpop.f32.mrf.mxu0
      %v5232 = vadd.f32 %v3143, %v5231
      %v5233 = vpop.f32.mrf.mxu0
      %v5234 = vadd.f32 %v3148, %v5233
      %v5235 = vpop.f32.mrf.mxu0
      %v5236 = vadd.f32 %v3148, %v5235
      %5237 = vmatprep.mubr.bf16.mxu0 %v3391
      %5238 = vmatmul.mubr.bf16.gmra.mxu0 %v3390
      %v5239 = vpop.f32.mrf.mxu0
      %v5240 = vadd.f32 %v3153, %v5239
      %v5241 = vpop.f32.mrf.mxu0
      %v5242 = vadd.f32 %v3153, %v5241
      %v5243 = vpop.f32.mrf.mxu0
      %v5244 = vadd.f32 %v3158, %v5243
      %v5245 = vpop.f32.mrf.mxu0
      %v5246 = vadd.f32 %v3158, %v5245
      %5247 = vmatprep.mubr.bf16.mxu0 %v3393
      %5248 = vmatmul.mubr.bf16.gmra.mxu0 %v3392
      %v5249 = vpop.f32.mrf.mxu0
      %v5250 = vadd.f32 %v3163, %v5249
      %v5251 = vpop.f32.mrf.mxu0
      %v5252 = vadd.f32 %v3163, %v5251
      %v5253 = vpop.f32.mrf.mxu0
      %v5254 = vadd.f32 %v3168, %v5253
      %v5255 = vpop.f32.mrf.mxu0
      %v5256 = vadd.f32 %v3168, %v5255
      %5257 = vmatprep.mubr.bf16.mxu0 %v3395
      %5258 = vmatmul.mubr.bf16.gmra.mxu0 %v3394
      %v5259 = vpop.f32.mrf.mxu0
      %v5260 = vadd.f32 %v3173, %v5259
      %v5261 = vpop.f32.mrf.mxu0
      %v5262 = vadd.f32 %v3173, %v5261
      %v5263 = vpop.f32.mrf.mxu0
      %v5264 = vadd.f32 %v3178, %v5263
      %v5265 = vpop.f32.mrf.mxu0
      %v5266 = vadd.f32 %v3178, %v5265
      %5267 = vmatprep.mubr.bf16.mxu0 %v3397
      %5268 = vmatmul.mubr.bf16.gmra.mxu0 %v3396
      %v5269 = vpop.f32.mrf.mxu0
      %v5270 = vadd.f32 %v3183, %v5269
      %v5271 = vpop.f32.mrf.mxu0
      %v5272 = vadd.f32 %v3183, %v5271
      %v5273 = vpop.f32.mrf.mxu0
      %v5274 = vadd.f32 %v3188, %v5273
      %v5275 = vpop.f32.mrf.mxu0
      %v5276 = vadd.f32 %v3188, %v5275
      %5277 = vmatprep.mubr.bf16.mxu0 %v3399
      %5278 = vmatmul.mubr.bf16.gmra.mxu0 %v3398
      %v5279 = vpop.f32.mrf.mxu0
      %v5280 = vadd.f32 %v3193, %v5279
      %v5281 = vpop.f32.mrf.mxu0
      %v5282 = vadd.f32 %v3193, %v5281
      %v5283 = vpop.f32.mrf.mxu0
      %v5284 = vadd.f32 %v3198, %v5283
      %v5285 = vpop.f32.mrf.mxu0
      %v5286 = vadd.f32 %v3198, %v5285
      %5287 = vmatprep.mubr.bf16.mxu0 %v3401
      %5288 = vmatmul.mubr.bf16.gmra.mxu0 %v3400
      %v5289 = vpop.f32.mrf.mxu0
      %v5290 = vadd.f32 %v3203, %v5289
      %v5291 = vpop.f32.mrf.mxu0
      %v5292 = vadd.f32 %v3203, %v5291
      %v5293 = vpop.f32.mrf.mxu0
      %v5294 = vadd.f32 %v3208, %v5293
      %v5295 = vpop.f32.mrf.mxu0
      %v5296 = vadd.f32 %v3208, %v5295
      %5297 = vmatprep.mubr.bf16.mxu0 %v3403
      %5298 = vmatmul.mubr.bf16.gmra.mxu0 %v3402
      %v5299 = vpop.f32.mrf.mxu0
      %v5300 = vadd.f32 %v3213, %v5299
      %v5301 = vpop.f32.mrf.mxu0
      %v5302 = vadd.f32 %v3213, %v5301
      %v5303 = vpop.f32.mrf.mxu0
      %v5304 = vadd.f32 %v3218, %v5303
      %v5305 = vpop.f32.mrf.mxu0
      %v5306 = vadd.f32 %v3218, %v5305
      %5307 = vmatprep.mubr.bf16.mxu0 %v3405
      %5308 = vmatmul.mubr.bf16.gmra.mxu0 %v3404
      %v5309 = vpop.f32.mrf.mxu0
      %v5310 = vadd.f32 %v3223, %v5309
      %v5311 = vpop.f32.mrf.mxu0
      %v5312 = vadd.f32 %v3223, %v5311
      %v5313 = vpop.f32.mrf.mxu0
      %v5314 = vadd.f32 %v3228, %v5313
      %v5315 = vpop.f32.mrf.mxu0
      %v5316 = vadd.f32 %v3228, %v5315
      %5317 = vmatprep.mubr.bf16.mxu0 %v3407
      %5318 = vmatmul.mubr.bf16.gmra.mxu0 %v3406
      %v5319 = vpop.f32.mrf.mxu0
      %v5320 = vadd.f32 %v3233, %v5319
      %v5321 = vpop.f32.mrf.mxu0
      %v5322 = vadd.f32 %v3233, %v5321
      %v5323 = vpop.f32.mrf.mxu0
      %v5324 = vadd.f32 %v3238, %v5323
      %v5325 = vpop.f32.mrf.mxu0
      %v5326 = vadd.f32 %v3238, %v5325
      %5327 = vmatprep.mubr.bf16.mxu0 %v3409
      %5328 = vmatmul.mubr.bf16.gmra.mxu0 %v3408
      %v5329 = vpop.f32.mrf.mxu0
      %v5330 = vadd.f32 %v3243, %v5329
      %v5331 = vpop.f32.mrf.mxu0
      %v5332 = vadd.f32 %v3243, %v5331
      %v5333 = vpop.f32.mrf.mxu0
      %v5334 = vadd.f32 %v3248, %v5333
      %v5335 = vpop.f32.mrf.mxu0
      %v5336 = vadd.f32 %v3248, %v5335
      %5337 = vmatprep.mubr.bf16.mxu0 %v3411
      %5338 = vmatmul.mubr.bf16.gmra.mxu0 %v3410
      %v5339 = vpop.f32.mrf.mxu0
      %v5340 = vadd.f32 %v3253, %v5339
      %v5341 = vpop.f32.mrf.mxu0
      %v5342 = vadd.f32 %v3253, %v5341
      %v5343 = vpop.f32.mrf.mxu0
      %v5344 = vadd.f32 %v3258, %v5343
      %v5345 = vpop.f32.mrf.mxu0
      %v5346 = vadd.f32 %v3258, %v5345
      %5347 = vmatprep.mubr.bf16.mxu0 %v3413
      %5348 = vmatmul.mubr.bf16.gmra.mxu0 %v3412
      %v5349 = vpop.f32.mrf.mxu0
      %v5350 = vadd.f32 %v3263, %v5349
      %v5351 = vpop.f32.mrf.mxu0
      %v5352 = vadd.f32 %v3263, %v5351
      %v5353 = vpop.f32.mrf.mxu0
      %v5354 = vadd.f32 %v3268, %v5353
      %v5355 = vpop.f32.mrf.mxu0
      %v5356 = vadd.f32 %v3268, %v5355
      %5357 = vmatprep.mubr.bf16.mxu0 %v3415
      %5358 = vmatmul.mubr.bf16.gmra.mxu0 %v3414
      %v5359 = vpop.f32.mrf.mxu0
      %v5360 = vadd.f32 %v3273, %v5359
      %v5361 = vpop.f32.mrf.mxu0
      %v5362 = vadd.f32 %v3273, %v5361
      %v5363 = vpop.f32.mrf.mxu0
      %v5364 = vadd.f32 %v3278, %v5363
      %v5365 = vpop.f32.mrf.mxu0
      %v5366 = vadd.f32 %v3278, %v5365
      %5367 = vmatprep.mubr.bf16.mxu0 %v3417
      %5368 = vmatmul.mubr.bf16.gmra.mxu0 %v3416
      %v5369 = vpop.f32.mrf.mxu0
      %v5370 = vadd.f32 %v3283, %v5369
      %v5371 = vpop.f32.mrf.mxu0
      %v5372 = vadd.f32 %v3283, %v5371
      %v5373 = vpop.f32.mrf.mxu0
      %v5374 = vadd.f32 %v3288, %v5373
      %v5375 = vpop.f32.mrf.mxu0
      %v5376 = vadd.f32 %v3288, %v5375
      %5377 = vdwg.mxu0
      %v5378 = vtanh.pop %v4641
      %v5379 = vtanh.pop %v4643
      %v5380 = vtanh.pop %v4834
      %v5381 = vtanh.pop %v4836
      %v5382 = vtanh.pop %v5027
      %v5383 = vtanh.pop %v5029
      %v5384 = vtanh.pop %v5220
      %v5385 = vtanh.pop %v5222
      %v5386 = vtanh.pop %v4645
      %v5387 = vtanh.pop %v4647
      %v5388 = vtanh.pop %v4838
      %v5389 = vtanh.pop %v4840
      %v5390 = vtanh.pop %v5031
      %v5391 = vtanh.pop %v5033
      %v5392 = vtanh.pop %v5224
      %v5393 = vtanh.pop %v5226
      %v5394 = vtanh.pop %v4651
      %v5395 = vtanh.pop %v4653
      %v5396 = vtanh.pop %v4844
      %v5397 = vtanh.pop %v4846
      %v5398 = vtanh.pop %v5037
      %v5399 = vtanh.pop %v5039
      %v5400 = vtanh.pop %v5230
      %v5401 = vtanh.pop %v5232
      %v5402 = vtanh.pop %v4655
      %v5403 = vtanh.pop %v4657
      %v5404 = vtanh.pop %v4848
      %v5405 = vtanh.pop %v4850
      %v5406 = vtanh.pop %v5041
      %v5407 = vtanh.pop %v5043
      %v5408 = vtanh.pop %v5234
      %v5409 = vtanh.pop %v5236
      %v5410 = vtanh.pop %v4661
      %v5411 = vtanh.pop %v4663
      %v5412 = vtanh.pop %v4854
      %v5413 = vtanh.pop %v4856
      %v5414 = vtanh.pop %v5047
      %v5415 = vtanh.pop %v5049
      %v5416 = vtanh.pop %v5240
      %v5417 = vtanh.pop %v5242
      %v5418 = vtanh.pop %v4665
      %v5419 = vtanh.pop %v4667
      %v5420 = vtanh.pop %v4858
      %v5421 = vtanh.pop %v4860
      %v5422 = vtanh.pop %v5051
      %v5423 = vtanh.pop %v5053
      %v5424 = vtanh.pop %v5244
      %v5425 = vtanh.pop %v5246
      %v5426 = vtanh.pop %v4671
      %v5427 = vtanh.pop %v4673
      %v5428 = vtanh.pop %v4864
      %v5429 = vtanh.pop %v4866
      %v5430 = vtanh.pop %v5057
      %v5431 = vtanh.pop %v5059
      %v5432 = vtanh.pop %v5250
      %v5433 = vtanh.pop %v5252
      %v5434 = vtanh.pop %v4675
      %v5435 = vtanh.pop %v4677
      %v5436 = vtanh.pop %v4868
      %v5437 = vtanh.pop %v4870
      %v5438 = vtanh.pop %v5061
      %v5439 = vtanh.pop %v5063
      %v5440 = vtanh.pop %v5254
      %v5441 = vtanh.pop %v5256
      %v5442 = vtanh.pop %v4681
      %v5443 = vtanh.pop %v4683
      %v5444 = vtanh.pop %v4874
      %v5445 = vtanh.pop %v4876
      %v5446 = vtanh.pop %v5067
      %v5447 = vtanh.pop %v5069
      %v5448 = vtanh.pop %v5260
      %v5449 = vtanh.pop %v5262
      %v5450 = vtanh.pop %v4685
      %v5451 = vtanh.pop %v4687
      %v5452 = vtanh.pop %v4878
      %v5453 = vtanh.pop %v4880
      %v5454 = vtanh.pop %v5071
      %v5455 = vtanh.pop %v5073
      %v5456 = vtanh.pop %v5264
      %v5457 = vtanh.pop %v5266
      %v5458 = vtanh.pop %v4691
      %v5459 = vtanh.pop %v4693
      %v5460 = vtanh.pop %v4884
      %v5461 = vtanh.pop %v4886
      %v5462 = vtanh.pop %v5077
      %v5463 = vtanh.pop %v5079
      %v5464 = vtanh.pop %v5270
      %v5465 = vtanh.pop %v5272
      %v5466 = vtanh.pop %v4695
      %v5467 = vtanh.pop %v4697
      %v5468 = vtanh.pop %v4888
      %v5469 = vtanh.pop %v4890
      %v5470 = vtanh.pop %v5081
      %v5471 = vtanh.pop %v5083
      %v5472 = vtanh.pop %v5274
      %v5473 = vtanh.pop %v5276
      %v5474 = vtanh.pop %v4701
      %v5475 = vtanh.pop %v4703
      %v5476 = vtanh.pop %v4894
      %v5477 = vtanh.pop %v4896
      %v5478 = vtanh.pop %v5087
      %v5479 = vtanh.pop %v5089
      %v5480 = vtanh.pop %v5280
      %v5481 = vtanh.pop %v5282
      %v5482 = vtanh.pop %v4705
      %v5483 = vtanh.pop %v4707
      %v5484 = vtanh.pop %v4898
      %v5485 = vtanh.pop %v4900
      %v5486 = vtanh.pop %v5091
      %v5487 = vtanh.pop %v5093
      %v5488 = vtanh.pop %v5284
      %v5489 = vtanh.pop %v5286
      %v5490 = vtanh.pop %v4711
      %v5491 = vtanh.pop %v4713
      %v5492 = vtanh.pop %v4904
      %v5493 = vtanh.pop %v4906
      %v5494 = vtanh.pop %v5097
      %v5495 = vtanh.pop %v5099
      %v5496 = vtanh.pop %v5290
      %v5497 = vtanh.pop %v5292
      %v5498 = vtanh.pop %v4715
      %v5499 = vtanh.pop %v4717
      %v5500 = vtanh.pop %v4908
      %v5501 = vtanh.pop %v4910
      %v5502 = vtanh.pop %v5101
      %v5503 = vtanh.pop %v5103
      %v5504 = vtanh.pop %v5294
      %v5505 = vtanh.pop %v5296
      %v5506 = vtanh.pop %v4721
      %v5507 = vtanh.pop %v4723
      %v5508 = vtanh.pop %v4914
      %v5509 = vtanh.pop %v4916
      %v5510 = vtanh.pop %v5107
      %v5511 = vtanh.pop %v5109
      %v5512 = vtanh.pop %v5300
      %v5513 = vtanh.pop %v5302
      %v5514 = vtanh.pop %v4725
      %v5515 = vtanh.pop %v4727
      %v5516 = vtanh.pop %v4918
      %v5517 = vtanh.pop %v4920
      %v5518 = vtanh.pop %v5111
      %v5519 = vtanh.pop %v5113
      %v5520 = vtanh.pop %v5304
      %v5521 = vtanh.pop %v5306
      %v5522 = vtanh.pop %v4731
      %v5523 = vtanh.pop %v4733
      %v5524 = vtanh.pop %v4924
      %v5525 = vtanh.pop %v4926
      %v5526 = vtanh.pop %v5117
      %v5527 = vtanh.pop %v5119
      %v5528 = vtanh.pop %v5310
      %v5529 = vtanh.pop %v5312
      %v5530 = vtanh.pop %v4735
      %v5531 = vtanh.pop %v4737
      %v5532 = vtanh.pop %v4928
      %v5533 = vtanh.pop %v4930
      %v5534 = vtanh.pop %v5121
      %v5535 = vtanh.pop %v5123
      %v5536 = vtanh.pop %v5314
      %v5537 = vtanh.pop %v5316
      %v5538 = vtanh.pop %v4741
      %v5539 = vtanh.pop %v4743
      %v5540 = vtanh.pop %v4934
      %v5541 = vtanh.pop %v4936
      %v5542 = vtanh.pop %v5127
      %v5543 = vtanh.pop %v5129
      %v5544 = vtanh.pop %v5320
      %v5545 = vtanh.pop %v5322
      %v5546 = vtanh.pop %v4745
      %v5547 = vtanh.pop %v4747
      %v5548 = vtanh.pop %v4938
      %v5549 = vtanh.pop %v4940
      %v5550 = vtanh.pop %v5131
      %v5551 = vtanh.pop %v5133
      %v5552 = vtanh.pop %v5324
      %v5553 = vtanh.pop %v5326
      %v5554 = vtanh.pop %v4751
      %v5555 = vtanh.pop %v4753
      %v5556 = vtanh.pop %v4944
      %v5557 = vtanh.pop %v4946
      %v5558 = vtanh.pop %v5137
      %v5559 = vtanh.pop %v5139
      %v5560 = vtanh.pop %v5330
      %v5561 = vtanh.pop %v5332
      %v5562 = vtanh.pop %v4755
      %v5563 = vtanh.pop %v4757
      %v5564 = vtanh.pop %v4948
      %v5565 = vtanh.pop %v4950
      %v5566 = vtanh.pop %v5141
      %v5567 = vtanh.pop %v5143
      %v5568 = vtanh.pop %v5334
      %v5569 = vtanh.pop %v5336
      %v5570 = vtanh.pop %v4761
      %v5571 = vtanh.pop %v4763
      %v5572 = vtanh.pop %v4954
      %v5573 = vtanh.pop %v4956
      %v5574 = vtanh.pop %v5147
      %v5575 = vtanh.pop %v5149
      %v5576 = vtanh.pop %v5340
      %v5577 = vtanh.pop %v5342
      %v5578 = vtanh.pop %v4765
      %v5579 = vtanh.pop %v4767
      %v5580 = vtanh.pop %v4958
      %v5581 = vtanh.pop %v4960
      %v5582 = vtanh.pop %v5151
      %v5583 = vtanh.pop %v5153
      %v5584 = vtanh.pop %v5344
      %v5585 = vtanh.pop %v5346
      %v5586 = vtanh.pop %v4771
      %v5587 = vtanh.pop %v4773
      %v5588 = vtanh.pop %v4964
      %v5589 = vtanh.pop %v4966
      %v5590 = vtanh.pop %v5157
      %v5591 = vtanh.pop %v5159
      %v5592 = vtanh.pop %v5350
      %v5593 = vtanh.pop %v5352
      %v5594 = vtanh.pop %v4775
      %v5595 = vtanh.pop %v4777
      %v5596 = vtanh.pop %v4968
      %v5597 = vtanh.pop %v4970
      %v5598 = vtanh.pop %v5161
      %v5599 = vtanh.pop %v5163
      %v5600 = vtanh.pop %v5354
      %v5601 = vtanh.pop %v5356
      %v5602 = vtanh.pop %v4781
      %v5603 = vtanh.pop %v4783
      %v5604 = vtanh.pop %v4974
      %v5605 = vtanh.pop %v4976
      %v5606 = vtanh.pop %v5167
      %v5607 = vtanh.pop %v5169
      %v5608 = vtanh.pop %v5360
      %v5609 = vtanh.pop %v5362
      %v5610 = vtanh.pop %v4785
      %v5611 = vtanh.pop %v4787
      %v5612 = vtanh.pop %v4978
      %v5613 = vtanh.pop %v4980
      %v5614 = vtanh.pop %v5171
      %v5615 = vtanh.pop %v5173
      %v5616 = vtanh.pop %v5364
      %v5617 = vtanh.pop %v5366
      %v5618 = vtanh.pop %v4791
      %v5619 = vtanh.pop %v4793
      %v5620 = vtanh.pop %v4984
      %v5621 = vtanh.pop %v4986
      %v5622 = vtanh.pop %v5177
      %v5623 = vtanh.pop %v5179
      %v5624 = vtanh.pop %v5370
      %v5625 = vtanh.pop %v5372
      %v5626 = vtanh.pop %v4795
      %v5627 = vtanh.pop %v4797
      %v5628 = vtanh.pop %v4988
      %v5629 = vtanh.pop %v4990
      %v5630 = vtanh.pop %v5181
      %v5631 = vtanh.pop %v5183
      %v5632 = vtanh.pop %v5374
      %v5633 = vtanh.pop %v5376
      %v5634 = vld [vmem:[%s5] sm:$0x3]
      %v5635 = vld [vmem:[#allocation2] sm:$0x1]
      %5637 = vset.pattern.permute.xlu0 0
      %5638 = vperm.xlu0 %5637, %v5635
      %v5639 = vpop.permute.xlu0 %5638
      %v5641 = vlaneseq
      %v5642 = vshrl.u32 %v5641, 7
      %v5643 = vsub.s32 0, %v5642
      %v5644 = vrot.slane %v5639, %v5643
      %v5646 = vlaneseq
      %v5647 = vshrl.u32 %v5646, 7
      %v5648 = vsub.s32 0, %v5647
      %v5649 = vrot.slane %v5634, %v5648
      %v5650 = vlaneseq
      %v5651 = vshrl.u32 %v5650, 7
      %v5652 = vsub.s32 1, %v5651
      %v5653 = vrot.slane %v5634, %v5652
      %5656 = vmatprep.subr.mxu0 %v5499
      %5657 = vmatpush1.msra.mxu0 %v5498
      %5658 = vmatprep.subr.mxu0 %v5491
      %5659 = vmatpush1.msra.mxu0 %v5490
      %5660 = vmatprep.subr.mxu0 %v5483
      %5661 = vmatpush1.msra.mxu0 %v5482
      %5662 = vmatprep.subr.mxu0 %v5475
      %5663 = vmatpush1.msra.mxu0 %v5474
      %5664 = vmatprep.subr.mxu0 %v5467
      %5665 = vmatpush1.msra.mxu0 %v5466
      %5666 = vmatprep.subr.mxu0 %v5459
      %5667 = vmatpush1.msra.mxu0 %v5458
      %5668 = vmatprep.subr.mxu0 %v5451
      %5669 = vmatpush1.msra.mxu0 %v5450
      %5670 = vmatprep.subr.mxu0 %v5443
      %5671 = vmatpush1.msra.mxu0 %v5442
      %5672 = vmatprep.subr.mxu0 %v5435
      %5673 = vmatpush1.msra.mxu0 %v5434
      %5674 = vmatprep.subr.mxu0 %v5427
      %5675 = vmatpush1.msra.mxu0 %v5426
      %5676 = vmatprep.subr.mxu0 %v5419
      %5677 = vmatpush1.msra.mxu0 %v5418
      %5678 = vmatprep.subr.mxu0 %v5411
      %5679 = vmatpush1.msra.mxu0 %v5410
      %5680 = vmatprep.subr.mxu0 %v5403
      %5681 = vmatpush1.msra.mxu0 %v5402
      %5682 = vmatprep.subr.mxu0 %v5395
      %5683 = vmatpush1.msra.mxu0 %v5394
      %5684 = vmatprep.subr.mxu0 %v5387
      %5685 = vmatpush1.msra.mxu0 %v5386
      %5686 = vmatprep.subr.mxu0 %v5379
      %5687 = vmatpush1.msra.mxu0 %v5378
      %5688 = vmatprep.subr.mxu0 %v5627
      %5689 = vmatpush2.msra.mxu0 %v5626
      %5690 = vmatprep.subr.mxu0 %v5619
      %5691 = vmatpush2.msra.mxu0 %v5618
      %5692 = vmatprep.subr.mxu0 %v5611
      %5693 = vmatpush2.msra.mxu0 %v5610
      %5694 = vmatprep.subr.mxu0 %v5603
      %5695 = vmatpush2.msra.mxu0 %v5602
      %5696 = vmatprep.subr.mxu0 %v5595
      %5697 = vmatpush2.msra.mxu0 %v5594
      %5698 = vmatprep.subr.mxu0 %v5587
      %5699 = vmatpush2.msra.mxu0 %v5586
      %5700 = vmatprep.subr.mxu0 %v5579
      %5701 = vmatpush2.msra.mxu0 %v5578
      %5702 = vmatprep.subr.mxu0 %v5571
      %5703 = vmatpush2.msra.mxu0 %v5570
      %5704 = vmatprep.subr.mxu0 %v5563
      %5705 = vmatpush2.msra.mxu0 %v5562
      %5706 = vmatprep.subr.mxu0 %v5555
      %5707 = vmatpush2.msra.mxu0 %v5554
      %5708 = vmatprep.subr.mxu0 %v5547
      %5709 = vmatpush2.msra.mxu0 %v5546
      %5710 = vmatprep.subr.mxu0 %v5539
      %5711 = vmatpush2.msra.mxu0 %v5538
      %5712 = vmatprep.subr.mxu0 %v5531
      %5713 = vmatpush2.msra.mxu0 %v5530
      %5714 = vmatprep.subr.mxu0 %v5523
      %5715 = vmatpush2.msra.mxu0 %v5522
      %5716 = vmatprep.subr.mxu0 %v5515
      %5717 = vmatpush2.msra.mxu0 %v5514
      %5718 = vmatprep.subr.mxu0 %v5507
      %5719 = vmatpush2.msra.mxu0 %v5506
      %5720 = vmatprep.mubr.f32.mxu0 %v5653
      %5721 = vmatmul.mubr.f32.gmra.mxu0 %v5649
      %v5722 = vpop.f32.mrf.mxu0
      %v5723 = vadd.f32 %v5644, %v5722
      %v5724 = vpop.f32.mrf.mxu0
      %v5725 = vadd.f32 %v5644, %v5724
      %5726 = vdwg.mxu0
      %5727 = vmatprep.subr.mxu0 %v5501
      %5728 = vmatpush1.msra.mxu0 %v5500
      %5729 = vmatprep.subr.mxu0 %v5493
      %5730 = vmatpush1.msra.mxu0 %v5492
      %5731 = vmatprep.subr.mxu0 %v5485
      %5732 = vmatpush1.msra.mxu0 %v5484
      %5733 = vmatprep.subr.mxu0 %v5477
      %5734 = vmatpush1.msra.mxu0 %v5476
      %5735 = vmatprep.subr.mxu0 %v5469
      %5736 = vmatpush1.msra.mxu0 %v5468
      %5737 = vmatprep.subr.mxu0 %v5461
      %5738 = vmatpush1.msra.mxu0 %v5460
      %5739 = vmatprep.subr.mxu0 %v5453
      %5740 = vmatpush1.msra.mxu0 %v5452
      %5741 = vmatprep.subr.mxu0 %v5445
      %5742 = vmatpush1.msra.mxu0 %v5444
      %5743 = vmatprep.subr.mxu0 %v5437
      %5744 = vmatpush1.msra.mxu0 %v5436
      %5745 = vmatprep.subr.mxu0 %v5429
      %5746 = vmatpush1.msra.mxu0 %v5428
      %5747 = vmatprep.subr.mxu0 %v5421
      %5748 = vmatpush1.msra.mxu0 %v5420
      %5749 = vmatprep.subr.mxu0 %v5413
      %5750 = vmatpush1.msra.mxu0 %v5412
      %5751 = vmatprep.subr.mxu0 %v5405
      %5752 = vmatpush1.msra.mxu0 %v5404
      %5753 = vmatprep.subr.mxu0 %v5397
      %5754 = vmatpush1.msra.mxu0 %v5396
      %5755 = vmatprep.subr.mxu0 %v5389
      %5756 = vmatpush1.msra.mxu0 %v5388
      %5757 = vmatprep.subr.mxu0 %v5381
      %5758 = vmatpush1.msra.mxu0 %v5380
      %5759 = vmatprep.subr.mxu0 %v5629
      %5760 = vmatpush2.msra.mxu0 %v5628
      %5761 = vmatprep.subr.mxu0 %v5621
      %5762 = vmatpush2.msra.mxu0 %v5620
      %5763 = vmatprep.subr.mxu0 %v5613
      %5764 = vmatpush2.msra.mxu0 %v5612
      %5765 = vmatprep.subr.mxu0 %v5605
      %5766 = vmatpush2.msra.mxu0 %v5604
      %5767 = vmatprep.subr.mxu0 %v5597
      %5768 = vmatpush2.msra.mxu0 %v5596
      %5769 = vmatprep.subr.mxu0 %v5589
      %5770 = vmatpush2.msra.mxu0 %v5588
      %5771 = vmatprep.subr.mxu0 %v5581
      %5772 = vmatpush2.msra.mxu0 %v5580
      %5773 = vmatprep.subr.mxu0 %v5573
      %5774 = vmatpush2.msra.mxu0 %v5572
      %5775 = vmatprep.subr.mxu0 %v5565
      %5776 = vmatpush2.msra.mxu0 %v5564
      %5777 = vmatprep.subr.mxu0 %v5557
      %5778 = vmatpush2.msra.mxu0 %v5556
      %5779 = vmatprep.subr.mxu0 %v5549
      %5780 = vmatpush2.msra.mxu0 %v5548
      %5781 = vmatprep.subr.mxu0 %v5541
      %5782 = vmatpush2.msra.mxu0 %v5540
      %5783 = vmatprep.subr.mxu0 %v5533
      %5784 = vmatpush2.msra.mxu0 %v5532
      %5785 = vmatprep.subr.mxu0 %v5525
      %5786 = vmatpush2.msra.mxu0 %v5524
      %5787 = vmatprep.subr.mxu0 %v5517
      %5788 = vmatpush2.msra.mxu0 %v5516
      %5789 = vmatprep.subr.mxu0 %v5509
      %5790 = vmatpush2.msra.mxu0 %v5508
      %5791 = vmatprep.mubr.f32.mxu0 %v5653
      %5792 = vmatmul.mubr.f32.gmra.mxu0 %v5649
      %v5793 = vpop.f32.mrf.mxu0
      %v5794 = vadd.f32 %v5644, %v5793
      %v5795 = vpop.f32.mrf.mxu0
      %v5796 = vadd.f32 %v5644, %v5795
      %5797 = vdwg.mxu0
      %5798 = vmatprep.subr.mxu0 %v5503
      %5799 = vmatpush1.msra.mxu0 %v5502
      %5800 = vmatprep.subr.mxu0 %v5495
      %5801 = vmatpush1.msra.mxu0 %v5494
      %5802 = vmatprep.subr.mxu0 %v5487
      %5803 = vmatpush1.msra.mxu0 %v5486
      %5804 = vmatprep.subr.mxu0 %v5479
      %5805 = vmatpush1.msra.mxu0 %v5478
      %5806 = vmatprep.subr.mxu0 %v5471
      %5807 = vmatpush1.msra.mxu0 %v5470
      %5808 = vmatprep.subr.mxu0 %v5463
      %5809 = vmatpush1.msra.mxu0 %v5462
      %5810 = vmatprep.subr.mxu0 %v5455
      %5811 = vmatpush1.msra.mxu0 %v5454
      %5812 = vmatprep.subr.mxu0 %v5447
      %5813 = vmatpush1.msra.mxu0 %v5446
      %5814 = vmatprep.subr.mxu0 %v5439
      %5815 = vmatpush1.msra.mxu0 %v5438
      %5816 = vmatprep.subr.mxu0 %v5431
      %5817 = vmatpush1.msra.mxu0 %v5430
      %5818 = vmatprep.subr.mxu0 %v5423
      %5819 = vmatpush1.msra.mxu0 %v5422
      %5820 = vmatprep.subr.mxu0 %v5415
      %5821 = vmatpush1.msra.mxu0 %v5414
      %5822 = vmatprep.subr.mxu0 %v5407
      %5823 = vmatpush1.msra.mxu0 %v5406
      %5824 = vmatprep.subr.mxu0 %v5399
      %5825 = vmatpush1.msra.mxu0 %v5398
      %5826 = vmatprep.subr.mxu0 %v5391
      %5827 = vmatpush1.msra.mxu0 %v5390
      %5828 = vmatprep.subr.mxu0 %v5383
      %5829 = vmatpush1.msra.mxu0 %v5382
      %5830 = vmatprep.subr.mxu0 %v5631
      %5831 = vmatpush2.msra.mxu0 %v5630
      %5832 = vmatprep.subr.mxu0 %v5623
      %5833 = vmatpush2.msra.mxu0 %v5622
      %5834 = vmatprep.subr.mxu0 %v5615
      %5835 = vmatpush2.msra.mxu0 %v5614
      %5836 = vmatprep.subr.mxu0 %v5607
      %5837 = vmatpush2.msra.mxu0 %v5606
      %5838 = vmatprep.subr.mxu0 %v5599
      %5839 = vmatpush2.msra.mxu0 %v5598
      %5840 = vmatprep.subr.mxu0 %v5591
      %5841 = vmatpush2.msra.mxu0 %v5590
      %5842 = vmatprep.subr.mxu0 %v5583
      %5843 = vmatpush2.msra.mxu0 %v5582
      %5844 = vmatprep.subr.mxu0 %v5575
      %5845 = vmatpush2.msra.mxu0 %v5574
      %5846 = vmatprep.subr.mxu0 %v5567
      %5847 = vmatpush2.msra.mxu0 %v5566
      %5848 = vmatprep.subr.mxu0 %v5559
      %5849 = vmatpush2.msra.mxu0 %v5558
      %5850 = vmatprep.subr.mxu0 %v5551
      %5851 = vmatpush2.msra.mxu0 %v5550
      %5852 = vmatprep.subr.mxu0 %v5543
      %5853 = vmatpush2.msra.mxu0 %v5542
      %5854 = vmatprep.subr.mxu0 %v5535
      %5855 = vmatpush2.msra.mxu0 %v5534
      %5856 = vmatprep.subr.mxu0 %v5527
      %5857 = vmatpush2.msra.mxu0 %v5526
      %5858 = vmatprep.subr.mxu0 %v5519
      %5859 = vmatpush2.msra.mxu0 %v5518
      %5860 = vmatprep.subr.mxu0 %v5511
      %5861 = vmatpush2.msra.mxu0 %v5510
      %5862 = vmatprep.mubr.f32.mxu0 %v5653
      %5863 = vmatmul.mubr.f32.gmra.mxu0 %v5649
      %v5864 = vpop.f32.mrf.mxu0
      %v5865 = vadd.f32 %v5644, %v5864
      %v5866 = vpop.f32.mrf.mxu0
      %v5867 = vadd.f32 %v5644, %v5866
      %5868 = vdwg.mxu0
      %5869 = vmatprep.subr.mxu0 %v5505
      %5870 = vmatpush1.msra.mxu0 %v5504
      %5871 = vmatprep.subr.mxu0 %v5497
      %5872 = vmatpush1.msra.mxu0 %v5496
      %5873 = vmatprep.subr.mxu0 %v5489
      %5874 = vmatpush1.msra.mxu0 %v5488
      %5875 = vmatprep.subr.mxu0 %v5481
      %5876 = vmatpush1.msra.mxu0 %v5480
      %5877 = vmatprep.subr.mxu0 %v5473
      %5878 = vmatpush1.msra.mxu0 %v5472
      %5879 = vmatprep.subr.mxu0 %v5465
      %5880 = vmatpush1.msra.mxu0 %v5464
      %5881 = vmatprep.subr.mxu0 %v5457
      %5882 = vmatpush1.msra.mxu0 %v5456
      %5883 = vmatprep.subr.mxu0 %v5449
      %5884 = vmatpush1.msra.mxu0 %v5448
      %5885 = vmatprep.subr.mxu0 %v5441
      %5886 = vmatpush1.msra.mxu0 %v5440
      %5887 = vmatprep.subr.mxu0 %v5433
      %5888 = vmatpush1.msra.mxu0 %v5432
      %5889 = vmatprep.subr.mxu0 %v5425
      %5890 = vmatpush1.msra.mxu0 %v5424
      %5891 = vmatprep.subr.mxu0 %v5417
      %5892 = vmatpush1.msra.mxu0 %v5416
      %5893 = vmatprep.subr.mxu0 %v5409
      %5894 = vmatpush1.msra.mxu0 %v5408
      %5895 = vmatprep.subr.mxu0 %v5401
      %5896 = vmatpush1.msra.mxu0 %v5400
      %5897 = vmatprep.subr.mxu0 %v5393
      %5898 = vmatpush1.msra.mxu0 %v5392
      %5899 = vmatprep.subr.mxu0 %v5385
      %5900 = vmatpush1.msra.mxu0 %v5384
      %5901 = vmatprep.subr.mxu0 %v5633
      %5902 = vmatpush2.msra.mxu0 %v5632
      %5903 = vmatprep.subr.mxu0 %v5625
      %5904 = vmatpush2.msra.mxu0 %v5624
      %5905 = vmatprep.subr.mxu0 %v5617
      %5906 = vmatpush2.msra.mxu0 %v5616
      %5907 = vmatprep.subr.mxu0 %v5609
      %5908 = vmatpush2.msra.mxu0 %v5608
      %5909 = vmatprep.subr.mxu0 %v5601
      %5910 = vmatpush2.msra.mxu0 %v5600
      %5911 = vmatprep.subr.mxu0 %v5593
      %5912 = vmatpush2.msra.mxu0 %v5592
      %5913 = vmatprep.subr.mxu0 %v5585
      %5914 = vmatpush2.msra.mxu0 %v5584
      %5915 = vmatprep.subr.mxu0 %v5577
      %5916 = vmatpush2.msra.mxu0 %v5576
      %5917 = vmatprep.subr.mxu0 %v5569
      %5918 = vmatpush2.msra.mxu0 %v5568
      %5919 = vmatprep.subr.mxu0 %v5561
      %5920 = vmatpush2.msra.mxu0 %v5560
      %5921 = vmatprep.subr.mxu0 %v5553
      %5922 = vmatpush2.msra.mxu0 %v5552
      %5923 = vmatprep.subr.mxu0 %v5545
      %5924 = vmatpush2.msra.mxu0 %v5544
      %5925 = vmatprep.subr.mxu0 %v5537
      %5926 = vmatpush2.msra.mxu0 %v5536
      %5927 = vmatprep.subr.mxu0 %v5529
      %5928 = vmatpush2.msra.mxu0 %v5528
      %5929 = vmatprep.subr.mxu0 %v5521
      %5930 = vmatpush2.msra.mxu0 %v5520
      %5931 = vmatprep.subr.mxu0 %v5513
      %5932 = vmatpush2.msra.mxu0 %v5512
      %5933 = vmatprep.mubr.f32.mxu0 %v5653
      %5934 = vmatmul.mubr.f32.gmra.mxu0 %v5649
      %v5935 = vpop.f32.mrf.mxu0
      %v5936 = vadd.f32 %v5644, %v5935
      %v5937 = vpop.f32.mrf.mxu0
      %v5938 = vadd.f32 %v5644, %v5937
      %5939 = vdwg.mxu0
      %v5948 = vcombine.low %v5723, %v5725
      %v5949 = vcombine.low %v5794, %v5796
      %v5950 = vcombine.low %v5865, %v5867
      %v5951 = vcombine.low %v5936, %v5938
      %v5953 = vunpack.c.l.s4 1966171168
      %v5954 = vunpack.c.0.s8 %v5953
      %v5955 = vlaneseq
      %v5956 = vshrl.u32 %v5955, 7
      %v5957 = vsub.s32 %v5954, %v5956
      %v5958 = vrot.slane %v5948, %v5957
      %v5960 = vunpack.c.l.s4 1966171168
      %v5961 = vunpack.c.0.s8 %v5960
      %v5962 = vlaneseq
      %v5963 = vshrl.u32 %v5962, 7
      %v5964 = vsub.s32 %v5961, %v5963
      %v5965 = vrot.slane %v5949, %v5964
      %v5967 = vunpack.c.l.s4 1966171168
      %v5968 = vunpack.c.0.s8 %v5967
      %v5969 = vlaneseq
      %v5970 = vshrl.u32 %v5969, 7
      %v5971 = vsub.s32 %v5968, %v5970
      %v5972 = vrot.slane %v5950, %v5971
      %v5974 = vunpack.c.l.s4 1966171168
      %v5975 = vunpack.c.0.s8 %v5974
      %v5976 = vlaneseq
      %v5977 = vshrl.u32 %v5976, 7
      %v5978 = vsub.s32 %v5975, %v5977
      %v5979 = vrot.slane %v5951, %v5978
      %v5980 = vcombine.low %v5958, %v5965
      %v5981 = vcombine.low %v5972, %v5979
      %v5983 = vunpack.c.l.s4 1966171168
      %v5984 = vunpack.c.0.s8 %v5983
      %v5985 = vlaneseq
      %v5986 = vshrl.u32 %v5985, 7
      %v5987 = vsub.s32 %v5984, %v5986
      %v5988 = vrot.slane %v5980, %v5987
      %v5990 = vunpack.c.l.s4 1966171168
      %v5991 = vunpack.c.0.s8 %v5990
      %v5992 = vlaneseq
      %v5993 = vshrl.u32 %v5992, 7
      %v5994 = vsub.s32 %v5991, %v5993
      %v5995 = vrot.slane %v5981, %v5994
      %v5996 = vcombine.low %v5988, %v5995
      %5998 = vst [vmem:[%s280] sm:$0xff] %v5996
      %s5999 = smul.u32 8, %s20
      %p6000 = scmp.lt.s32.totalorder %s5999, 23
      %s6001 = scalar_select %p6000, %s5999, 23
      %s6002 = scalar_lea.vmem %s7, %s6001
      // Predicated region
      $region49: #{nn_forward.1} parent=47 // pred_check
        %p6003 = pneg %p190
      $region50: #{nn_forward.1} parent=47 // pred_check_branch
        %6005 = sbr.rel (%p6003) target = $region52
      $region51: #{nn_forward.1} parent=47 // pred_region
        %s6006 = smul.u32 8, %s20
      $region52: #{nn_forward.1} parent=47 // pred_fallthru
        _
    $region48: #{nn_forward.1} parent=5 // pred_fallthru
      _
    %p6007 = scmp.le.s32.totalorder 2, %s15
    // Predicated region
    $region53: #{nn_forward.1} parent=5 // pred_check
      %p6008 = pneg %p6007
    $region54: #{nn_forward.1} parent=5 // pred_check_branch
      %6010 = sbr.rel (%p6008) target = $region56
    $region55: #{nn_forward.1} parent=5 // pred_region
      %s6011 = ssub.s32 %s15, 2
      // Predicated region
      $region57: #{nn_forward.1} parent=55 // pred_check
        %p6012 = pneg %p196
      $region58: #{nn_forward.1} parent=55 // pred_check_branch
        %6014 = sbr.rel (%p6012) target = $region60
      $region59: #{nn_forward.1} parent=55 // pred_region
        %s6015 = smul.u32 8, %s21
        %p6016 = scmp.lt.s32.totalorder %s6015, 23
        %s6017 = scalar_select %p6016, %s6015, 23
        %s6018 = scalar_lea.vmem %s7, %s6017
      $region60: #{nn_forward.1} parent=55 // pred_fallthru
        _
    $region56: #{nn_forward.1} parent=5 // pred_fallthru
      _
  $region6: #{nn_forward.1} parent=0 // loop_footer
    %s19 = sadd.s32 1, %s15
  $region7: #{nn_forward.1} parent=0 // loop_footer_branch
    %14 = sbr.rel target = $region3
  $region8: #{nn_forward.1} parent=0 // loop_exit
    _

</llo_original>
